<compile_context>
chip_gen: v7x
topology: tpu7x:2x2x1
jax: 0.10.0
libtpu: 0.0.40
codegen_flags: <defaults>
</compile_context>

<pallas_src>
import jax
import jax.numpy as jnp
from jax.experimental import pallas as pl
from jax.experimental.pallas import tpu as pltpu


def _ffn_kernel(x_ref, w1_ref, b1_ref, w2_ref, b2_ref, o_ref, acc_ref):
    # grid = (row tiles, hidden tiles); hidden axis is the reduction for the
    # second matmul, accumulated in float32 scratch.
    k = pl.program_id(1)

    @pl.when(k == 0)
    def _():
        acc_ref[...] = jnp.zeros_like(acc_ref)

    # (tm, C) @ (C, th) -> f32 (tm, th), bias + ReLU in f32.
    h = jnp.dot(x_ref[...], w1_ref[...], preferred_element_type=jnp.float32)
    h = jnp.maximum(h + b1_ref[...], 0.0)

    # (tm, th) @ (th, C) -> accumulate into f32 (tm, C).
    acc_ref[...] += jnp.dot(h.astype(w2_ref.dtype), w2_ref[...],
                            preferred_element_type=jnp.float32)

    @pl.when(k == pl.num_programs(1) - 1)
    def _():
        o_ref[...] = (acc_ref[...] + b2_ref[...]).astype(o_ref.dtype)


def _round_up(x, m):
    return ((x + m - 1) // m) * m


def _pick_hidden_tile(h, cap, align=128):
    """Largest divisor of h that is a multiple of `align` and <= cap; else h."""
    if h <= cap:
        return h
    best = None
    t = align
    while t <= cap:
        if h % t == 0:
            best = t
        t += align
    return best if best is not None else h


def _spec(shape, index_map, buffers=None):
    """BlockSpec with optional explicit buffer count (fallback to default)."""
    if buffers is None:
        return pl.BlockSpec(shape, index_map)
    try:
        return pl.BlockSpec(shape, index_map, pipeline_mode=pl.Buffered(buffers))
    except (TypeError, AttributeError):
        return pl.BlockSpec(shape, index_map)


def feed_forward(x, w1, b1, w2, b2, *, tm=256, th_cap=4096,
                 compute_dtype=jnp.bfloat16):
    """x: [B, T, C]; w1: [C, 4C]; b1: [4C]; w2: [4C, C]; b2: [C].

    Weights are stored [in, out] (transposed vs. torch's [out, in]) so the
    kernel runs plain row @ W matmuls on the MXU.
    """
    B, T, C = x.shape
    Cw, H = w1.shape
    assert Cw == C and w2.shape == (H, C) and b1.shape == (H,) and b2.shape == (C,)
    M = B * T

    # Row tile: as big as allowed, but never bigger than the (8-aligned) row
    # count; pad rows up to a multiple of the tile (masked-free tail handling).
    tm_eff = _round_up(min(tm, _round_up(M, 8)), 8)
    Mp = _round_up(M, tm_eff)

    # Hidden tile: keep weights resident when small, tile H when large.
    th = _pick_hidden_tile(H, th_cap)
    kh = H // th

    x2 = x.reshape(M, C).astype(compute_dtype)
    if Mp != M:
        x2 = jnp.pad(x2, ((0, Mp - M), (0, 0)))
    w1c = w1.astype(compute_dtype)
    w2c = w2.astype(compute_dtype)
    b1_2 = b1.reshape(1, H).astype(jnp.float32)
    b2_2 = b2.reshape(1, C).astype(jnp.float32)

    # Weights/biases whose block index never changes get a single buffer.
    w_buffers = 1 if kh == 1 else None   # None -> default double-buffering

    out = pl.pallas_call(
        _ffn_kernel,
        out_shape=jax.ShapeDtypeStruct((Mp, C), x.dtype),
        grid_spec=pltpu.PrefetchScalarGridSpec(
            num_scalar_prefetch=0,
            grid=(Mp // tm_eff, kh),
            in_specs=[
                _spec((tm_eff, C), lambda i, k: (i, 0)),            # x rows
                _spec((C, th), lambda i, k: (0, k), w_buffers),     # W1 slice
                _spec((1, th), lambda i, k: (0, k), w_buffers),     # b1 slice
                _spec((th, C), lambda i, k: (k, 0), w_buffers),     # W2 slice
                _spec((1, C), lambda i, k: (0, 0), 1),              # b2 (const)
            ],
            out_specs=pl.BlockSpec((tm_eff, C), lambda i, k: (i, 0)),
            scratch_shapes=[pltpu.VMEM((tm_eff, C), jnp.float32)],
        ),
        compiler_params=pltpu.CompilerParams(
            dimension_semantics=("parallel", "arbitrary"),
            vmem_limit_bytes=64 * 1024 * 1024,
        ),
    )(x2, w1c, b1_2, w2c, b2_2)

    if Mp != M:
        out = out[:M]
    return out.reshape(B, T, C)


def init_params(key, n_embd, dtype=jnp.float32):
    """Deterministic init mirroring torch.nn.Linear (uniform +/- 1/sqrt(fan_in))."""
    hidden = 4 * n_embd
    k1, k2, k3, k4 = jax.random.split(key, 4)
    bound1 = 1.0 / (n_embd ** 0.5)
    bound2 = 1.0 / (hidden ** 0.5)
    w1 = jax.random.uniform(k1, (n_embd, hidden), dtype, -bound1, bound1)
    b1 = jax.random.uniform(k2, (hidden,), dtype, -bound1, bound1)
    w2 = jax.random.uniform(k3, (hidden, n_embd), dtype, -bound2, bound2)
    b2 = jax.random.uniform(k4, (n_embd,), dtype, -bound2, bound2)
    return w1, b1, w2, b2


if __name__ == "__main__":
    # Small shapes consistent with the module: batch=2, seq=8, n_embd=384.
    B, T, C = 2, 8, 384
    key = jax.random.PRNGKey(0)
    kx, kp = jax.random.split(key)
    x = jax.random.normal(kx, (B, T, C), dtype=jnp.float32)
    w1, b1, w2, b2 = init_params(kp, C)

    y = feed_forward(x, w1, b1, w2, b2)
    y = jax.block_until_ready(y)

    # Reference in plain f32 JAX (eval-mode dropout = identity). Matmuls run
    # in bf16 inside the kernel, so tolerance is loosened accordingly.
    ref = jnp.maximum(x.reshape(-1, C) @ w1 + b1, 0.0) @ w2 + b2
    ref = ref.reshape(B, T, C)
    assert jnp.allclose(y, ref, atol=3e-2, rtol=3e-2), "mismatch vs reference"

    print("KERNEL_OK")
</pallas_src>

<mosaic_0001>
module attributes {stable_mosaic.version = 11 : i64} {
  func.func @_ffn_kernel(%arg0: i32, %arg1: i32, %arg2: memref<16x384xbf16, #tpu.memory_space<vmem>>, %arg3: memref<384x1536xbf16, #tpu.memory_space<vmem>>, %arg4: memref<1x1536xf32, #tpu.memory_space<vmem>>, %arg5: memref<1536x384xbf16, #tpu.memory_space<vmem>>, %arg6: memref<1x384xf32, #tpu.memory_space<vmem>>, %arg7: memref<16x384xf32, #tpu.memory_space<vmem>>, %arg8: memref<16x384xf32, #tpu.memory_space<vmem>>) attributes {dimension_semantics = [#tpu.dimension_semantics<parallel>, #tpu.dimension_semantics<arbitrary>], iteration_bounds = array<i64: 1, 1>, scalar_prefetch = 0 : i64, scratch_operands = 1 : i64, tpu.core_type = #tpu.core_type<tc>, window_params = [{transform_indices = @transform_0, window_bounds = array<i64: 16, 384>}, {pipeline_mode = #tpu.pipeline_mode<synchronous>, transform_indices = @transform_1, window_bounds = array<i64: 384, 1536>}, {pipeline_mode = #tpu.pipeline_mode<synchronous>, transform_indices = @transform_2, window_bounds = array<i64: 1, 1536>}, {pipeline_mode = #tpu.pipeline_mode<synchronous>, transform_indices = @transform_3, window_bounds = array<i64: 1536, 384>}, {pipeline_mode = #tpu.pipeline_mode<synchronous>, transform_indices = @transform_4, window_bounds = array<i64: 1, 384>}, {transform_indices = @transform_5, window_bounds = array<i64: 16, 384>}]} {
    %c0_i32 = arith.constant 0 : i32
    %0 = arith.cmpi eq, %arg1, %c0_i32 : i32
    %1 = arith.extui %0 : i1 to i32
    %c0_i32_0 = arith.constant 0 : i32
    %2 = arith.cmpi ne, %1, %c0_i32_0 : i32
    scf.if %2 {
      %cst_16 = arith.constant 0.000000e+00 : f32
      %20 = vector.broadcast %cst_16 : f32 to vector<16x384xf32>
      %c0_17 = arith.constant 0 : index
      %c0_18 = arith.constant 0 : index
      %21 = vector.load %arg8[%c0_17, %c0_18] : memref<16x384xf32, #tpu.memory_space<vmem>>, vector<16x384xf32>
      tpu.vector_store %arg8[%c0_17, %c0_18], %20 {strides = array<i32>} : memref<16x384xf32, #tpu.memory_space<vmem>>, vector<16x384xf32>,
    } else {
    }
    %c0 = arith.constant 0 : index
    %c0_1 = arith.constant 0 : index
    %3 = vector.load %arg2[%c0, %c0_1] : memref<16x384xbf16, #tpu.memory_space<vmem>>, vector<16x384xbf16>
    %c0_2 = arith.constant 0 : index
    %c0_3 = arith.constant 0 : index
    %4 = vector.load %arg3[%c0_2, %c0_3] : memref<384x1536xbf16, #tpu.memory_space<vmem>>, vector<384x1536xbf16>
    %cst = arith.constant dense<0.000000e+00> : vector<16x1536xf32>
    %5 = tpu.matmul %3, %4, %cst {dimension_numbers = #tpu.dot_dimension_numbers<[1], [0], [0], [1], [0, 0, 1, 1], [], []>} : vector<16x384xbf16>, vector<384x1536xbf16>, vector<16x1536xf32> -> vector<16x1536xf32>
    %c0_4 = arith.constant 0 : index
    %c0_5 = arith.constant 0 : index
    %6 = vector.load %arg4[%c0_4, %c0_5] : memref<1x1536xf32, #tpu.memory_space<vmem>>, vector<1x1536xf32>
    %7 = vector.broadcast %6 : vector<1x1536xf32> to vector<16x1536xf32>
    %8 = arith.addf %5, %7 : vector<16x1536xf32>
    %cst_6 = arith.constant 0.000000e+00 : f32
    %9 = vector.broadcast %cst_6 : f32 to vector<16x1536xf32>
    %10 = arith.maximumf %8, %9 : vector<16x1536xf32>
    %c0_7 = arith.constant 0 : index
    %c0_8 = arith.constant 0 : index
    %11 = vector.load %arg8[%c0_7, %c0_8] : memref<16x384xf32, #tpu.memory_space<vmem>>, vector<16x384xf32>
    %12 = arith.truncf %10 : vector<16x1536xf32> to vector<16x1536xbf16>
    %c0_9 = arith.constant 0 : index
    %c0_10 = arith.constant 0 : index
    %13 = vector.load %arg5[%c0_9, %c0_10] : memref<1536x384xbf16, #tpu.memory_space<vmem>>, vector<1536x384xbf16>
    %cst_11 = arith.constant dense<0.000000e+00> : vector<16x384xf32>
    %14 = tpu.matmul %12, %13, %cst_11 {dimension_numbers = #tpu.dot_dimension_numbers<[1], [0], [0], [1], [0, 0, 1, 1], [], []>} : vector<16x1536xbf16>, vector<1536x384xbf16>, vector<16x384xf32> -> vector<16x384xf32>
    %15 = arith.addf %11, %14 : vector<16x384xf32>
    %c0_12 = arith.constant 0 : index
    %c0_13 = arith.constant 0 : index
    %16 = vector.load %arg8[%c0_12, %c0_13] : memref<16x384xf32, #tpu.memory_space<vmem>>, vector<16x384xf32>
    tpu.vector_store %arg8[%c0_12, %c0_13], %15 {strides = array<i32>} : memref<16x384xf32, #tpu.memory_space<vmem>>, vector<16x384xf32>,
    %c0_i32_14 = arith.constant 0 : i32
    %17 = arith.cmpi eq, %arg1, %c0_i32_14 : i32
    %18 = arith.extui %17 : i1 to i32
    %c0_i32_15 = arith.constant 0 : i32
    %19 = arith.cmpi ne, %18, %c0_i32_15 : i32
    scf.if %19 {
      %c0_16 = arith.constant 0 : index
      %c0_17 = arith.constant 0 : index
      %20 = vector.load %arg8[%c0_16, %c0_17] : memref<16x384xf32, #tpu.memory_space<vmem>>, vector<16x384xf32>
      %c0_18 = arith.constant 0 : index
      %c0_19 = arith.constant 0 : index
      %21 = vector.load %arg6[%c0_18, %c0_19] : memref<1x384xf32, #tpu.memory_space<vmem>>, vector<1x384xf32>
      %22 = vector.broadcast %21 : vector<1x384xf32> to vector<16x384xf32>
      %23 = arith.addf %20, %22 : vector<16x384xf32>
      %c0_20 = arith.constant 0 : index
      %c0_21 = arith.constant 0 : index
      %24 = vector.load %arg7[%c0_20, %c0_21] : memref<16x384xf32, #tpu.memory_space<vmem>>, vector<16x384xf32>
      tpu.vector_store %arg7[%c0_20, %c0_21], %23 {strides = array<i32>} : memref<16x384xf32, #tpu.memory_space<vmem>>, vector<16x384xf32>,
    } else {
    }
    return
  }
  func.func @transform_0(%arg0: i32, %arg1: i32) -> (i32, i32) {
    %c0_i32 = arith.constant 0 : i32
    %c0_i32_0 = arith.constant 0 : i32
    return %arg0, %c0_i32 : i32, i32
  }
  func.func @transform_1(%arg0: i32, %arg1: i32) -> (i32, i32) {
    %c0_i32 = arith.constant 0 : i32
    %c0_i32_0 = arith.constant 0 : i32
    return %c0_i32, %arg1 : i32, i32
  }
  func.func @transform_2(%arg0: i32, %arg1: i32) -> (i32, i32) {
    %c0_i32 = arith.constant 0 : i32
    %c0_i32_0 = arith.constant 0 : i32
    return %c0_i32, %arg1 : i32, i32
  }
  func.func @transform_3(%arg0: i32, %arg1: i32) -> (i32, i32) {
    %c0_i32 = arith.constant 0 : i32
    %c0_i32_0 = arith.constant 0 : i32
    return %arg1, %c0_i32 : i32, i32
  }
  func.func @transform_4(%arg0: i32, %arg1: i32) -> (i32, i32) {
    %c0_i32 = arith.constant 0 : i32
    %c0_i32_0 = arith.constant 0 : i32
    %c0_i32_1 = arith.constant 0 : i32
    return %c0_i32, %c0_i32_0 : i32, i32
  }
  func.func @transform_5(%arg0: i32, %arg1: i32) -> (i32, i32) {
    %c0_i32 = arith.constant 0 : i32
    %c0_i32_0 = arith.constant 0 : i32
    return %arg0, %c0_i32 : i32, i32
  }
}

</mosaic_0001>

<llo_original>
// kernel: tpu_custom_call.1
$region0: #{tpu_custom_call.1}
  #allocation0 [shape = 'u32[]', space=smem, size = 0x4, offset = 0x4, fixed_abs, tag = 'smem constant byte address 0x4 - core index']
  #allocation1 [shape = 'u32[144,128]{1,0:T(1,128)}', space=vmem, size = 0x12000, scoped, tag = 'internal scratch']
  #allocation2 [shape = 'f32[16,384]{1,0:T(8,128)}', space=vmem, size = 0x6000, scoped, tag = 'scratch operand']
  %s0 = inlined_call_operand.hbm [shape: bf16[16,384], index: 0, kind: input, shape index: {}]
  %s1 = inlined_call_operand.hbm [shape: bf16[384,1536], index: 1, kind: input, shape index: {}]
  %s2 = inlined_call_operand.hbm [shape: f32[1,1536], index: 2, kind: input, shape index: {}]
  %s3 = inlined_call_operand.hbm [shape: bf16[1536,384], index: 3, kind: input, shape index: {}]
  %s4 = inlined_call_operand.hbm [shape: f32[1,384], index: 4, kind: input, shape index: {}]
  %s5 = inlined_call_operand.hbm [shape: f32[16,384], index: 5, kind: output, shape index: {}]
  %s6 = sld [smem:[#allocation0]]
  $region58: #{tpu_custom_call.1} parent=0
    _
  %s8 = ssub.s32 1, %s6
  %s9 = scalar_select 0, %s8, %s6
  $region1: #{tpu_custom_call.1} parent=0
    #allocation3 [shape = 'u8[12288]{0}', space=vmem, size = 0x3000, scoped, tag = 'input window, operand 0, single buffered']
    #allocation4 [shape = 's32[1]{0}', space=sflag, size = 0x4, scoped, tag = 'scoped memory for tpu_custom_call.1']
    #allocation5 [shape = 's32[1]{0}', space=sflag, size = 0x4, scoped, tag = 'scoped memory for tpu_custom_call.1']
    #allocation6 [shape = 'u8[1179648]{0}', space=vmem, size = 0x120000, scoped, tag = 'input window, operand 1, single buffered']
    #allocation7 [shape = 's32[1]{0}', space=sflag, size = 0x4, scoped, tag = 'scoped memory for tpu_custom_call.1']
    #allocation8 [shape = 'u8[6144]{0}', space=vmem, size = 0x1800, scoped, tag = 'input window, operand 2, single buffered']
    #allocation9 [shape = 'u8[1179648]{0}', space=vmem, size = 0x120000, scoped, tag = 'input window, operand 3, single buffered']
    #allocation10 [shape = 's32[1]{0}', space=sflag, size = 0x4, scoped, tag = 'scoped memory for tpu_custom_call.1']
    #allocation11 [shape = 'u8[1536]{0}', space=vmem, size = 0x800, scoped, tag = 'input window, operand 4, single buffered']
    #allocation12 [shape = 'u8[24576]{0}', space=vmem, size = 0x6000, scoped, tag = 'output window, operand 0, single buffered']
    %10 = vsyncpa [#allocation4], 0
    %11 = vsyncpa [#allocation7], 0
    %12 = vsyncpa [#allocation10], 0
    %13 = vsyncpa [#allocation5], 0
    // Predicated region
    $region2: #{tpu_custom_call.1} parent=1 // pred_check
      _
    $region3: #{tpu_custom_call.1} parent=1 // pred_check_branch
      %15 = sbr.rel (0) target = $region5
    $region4: #{tpu_custom_call.1} parent=1 // pred_region
      %s17 = ssub.s32 384, 384
      %18 = vsyncadd [#allocation4], %s17
      %s19 = sshll.u32 [#allocation3], 4
      %s20 = int_to_ptr.vmem [resolvable:$true] %s19
      %25 = dma.hbm_to_vmem [thread:$0]  %s0, 384, %s20, [#allocation4], 192, 192, 12
    $region5: #{tpu_custom_call.1} parent=1 // pred_fallthru
      _
    // Predicated region
    $region6: #{tpu_custom_call.1} parent=1 // pred_check
      _
    $region7: #{tpu_custom_call.1} parent=1 // pred_check_branch
      %27 = sbr.rel (0) target = $region9
    $region8: #{tpu_custom_call.1} parent=1 // pred_region
      %s29 = ssub.s32 36864, 36864
      %30 = vsyncadd [#allocation7], %s29
      %s31 = sshll.u32 [#allocation6], 4
      %s32 = int_to_ptr.vmem [resolvable:$true] %s31
      %37 = dma.hbm_to_vmem [thread:$0]  %s1, 36864, %s32, [#allocation7], 768, 768, 48
    $region9: #{tpu_custom_call.1} parent=1 // pred_fallthru
      _
    // Predicated region
    $region10: #{tpu_custom_call.1} parent=1 // pred_check
      _
    $region11: #{tpu_custom_call.1} parent=1 // pred_check_branch
      %39 = sbr.rel (0) target = $region13
    $region12: #{tpu_custom_call.1} parent=1 // pred_region
      %s41 = ssub.s32 192, 192
      %42 = vsyncadd [#allocation7], %s41
      %s44 = sshll.u32 [#allocation8], 4
      %s45 = int_to_ptr.vmem [resolvable:$true] %s44
      %47 = dma.hbm_to_vmem [thread:$0]  %s2, 192, %s45, [#allocation7]
    $region13: #{tpu_custom_call.1} parent=1 // pred_fallthru
      _
    // Predicated region
    $region14: #{tpu_custom_call.1} parent=1 // pred_check
      _
    $region15: #{tpu_custom_call.1} parent=1 // pred_check_branch
      %49 = sbr.rel (0) target = $region17
    $region16: #{tpu_custom_call.1} parent=1 // pred_region
      %s51 = ssub.s32 36864, 36864
      %52 = vsyncadd [#allocation10], %s51
      %s53 = sshll.u32 [#allocation9], 4
      %s54 = int_to_ptr.vmem [resolvable:$true] %s53
      %59 = dma.hbm_to_vmem [thread:$0]  %s3, 36864, %s54, [#allocation10], 192, 192, 12
    $region17: #{tpu_custom_call.1} parent=1 // pred_fallthru
      _
    // Predicated region
    $region18: #{tpu_custom_call.1} parent=1 // pred_check
      _
    $region19: #{tpu_custom_call.1} parent=1 // pred_check_branch
      %61 = sbr.rel (0) target = $region21
    $region20: #{tpu_custom_call.1} parent=1 // pred_region
      %s63 = ssub.s32 48, 48
      %64 = vsyncadd [#allocation10], %s63
      %s66 = sshll.u32 [#allocation11], 4
      %s67 = int_to_ptr.vmem [resolvable:$true] %s66
      %69 = dma.hbm_to_vmem [thread:$0]  %s4, 48, %s67, [#allocation10]
    $region21: #{tpu_custom_call.1} parent=1 // pred_fallthru
      _
    // Predicated region
    $region22: #{tpu_custom_call.1} parent=1 // pred_check
      _
    $region23: #{tpu_custom_call.1} parent=1 // pred_check_branch
      %71 = sbr.rel (0) target = $region25
    $region24: #{tpu_custom_call.1} parent=1 // pred_region
      %72 = dma.done [#allocation4], 384
    $region25: #{tpu_custom_call.1} parent=1 // pred_fallthru
      _
    // Predicated region
    $region26: #{tpu_custom_call.1} parent=1 // pred_check
      _
    $region27: #{tpu_custom_call.1} parent=1 // pred_check_branch
      %74 = sbr.rel (0) target = $region29
    $region28: #{tpu_custom_call.1} parent=1 // pred_region
      %75 = dma.done [#allocation7], 36864
    $region29: #{tpu_custom_call.1} parent=1 // pred_fallthru
      _
    // Predicated region
    $region30: #{tpu_custom_call.1} parent=1 // pred_check
      _
    $region31: #{tpu_custom_call.1} parent=1 // pred_check_branch
      %77 = sbr.rel (0) target = $region33
    $region32: #{tpu_custom_call.1} parent=1 // pred_region
      %78 = dma.done [#allocation7], 192
    $region33: #{tpu_custom_call.1} parent=1 // pred_fallthru
      _
    // Predicated region
    $region34: #{tpu_custom_call.1} parent=1 // pred_check
      _
    $region35: #{tpu_custom_call.1} parent=1 // pred_check_branch
      %80 = sbr.rel (0) target = $region37
    $region36: #{tpu_custom_call.1} parent=1 // pred_region
      %81 = dma.done [#allocation10], 36864
    $region37: #{tpu_custom_call.1} parent=1 // pred_fallthru
      _
    // Predicated region
    $region38: #{tpu_custom_call.1} parent=1 // pred_check
      _
    $region39: #{tpu_custom_call.1} parent=1 // pred_check_branch
      %83 = sbr.rel (0) target = $region41
    $region40: #{tpu_custom_call.1} parent=1 // pred_region
      %84 = dma.done [#allocation10], 48
    $region41: #{tpu_custom_call.1} parent=1 // pred_fallthru
      _
    %p86 = scmp.eq.s32.totalorder 0, 0
    // Predicated region
    $region42: #{tpu_custom_call.1} parent=1 // pred_check
      %p87 = pneg %p86
    $region43: #{tpu_custom_call.1} parent=1 // pred_check_branch
      %89 = sbr.rel (%p87) target = $region45
    $region44: #{tpu_custom_call.1} parent=1 // pred_region
      %90 = vst [vmem:[#allocation2] sm:$0xff] 0.0
      %91 = vst [vmem:[#allocation2 + $0x8] sm:$0xff] 0.0
      %92 = vst [vmem:[#allocation2 + $0x10] sm:$0xff] 0.0
      %93 = vst [vmem:[#allocation2 + $0x18] sm:$0xff] 0.0
      %94 = vst [vmem:[#allocation2 + $0x20] sm:$0xff] 0.0
      %95 = vst [vmem:[#allocation2 + $0x28] sm:$0xff] 0.0
    $region45: #{tpu_custom_call.1} parent=1 // pred_fallthru
      _
    %v96 = vld [vmem:[#allocation3] sm:$0xff]
    %v97 = vld [vmem:[#allocation3 + $0x8] sm:$0xf]
    %v98 = vld [vmem:[#allocation3 + $0xc] sm:$0xff]
    %v99 = vld [vmem:[#allocation3 + $0x14] sm:$0xf]
    %v100 = vld [vmem:[#allocation6] sm:$0xff]
    %v101 = vld [vmem:[#allocation6 + $0x8] sm:$0xff]
    %v102 = vld [vmem:[#allocation6 + $0x10] sm:$0xff]
    %v103 = vld [vmem:[#allocation6 + $0x18] sm:$0xff]
    %v104 = vld [vmem:[#allocation6 + $0x20] sm:$0xff]
    %v105 = vld [vmem:[#allocation6 + $0x28] sm:$0xff]
    %v106 = vld [vmem:[#allocation6 + $0x30] sm:$0xff]
    %v107 = vld [vmem:[#allocation6 + $0x38] sm:$0xff]
    %v108 = vld [vmem:[#allocation6 + $0x40] sm:$0xff]
    %v109 = vld [vmem:[#allocation6 + $0x48] sm:$0xff]
    %v110 = vld [vmem:[#allocation6 + $0x50] sm:$0xff]
    %v111 = vld [vmem:[#allocation6 + $0x58] sm:$0xff]
    %v112 = vld [vmem:[#allocation6 + $0x60] sm:$0xff]
    %v113 = vld [vmem:[#allocation6 + $0x68] sm:$0xff]
    %v114 = vld [vmem:[#allocation6 + $0x70] sm:$0xff]
    %v115 = vld [vmem:[#allocation6 + $0x78] sm:$0xff]
    %v116 = vld [vmem:[#allocation6 + $0x80] sm:$0xff]
    %v117 = vld [vmem:[#allocation6 + $0x88] sm:$0xff]
    %v118 = vld [vmem:[#allocation6 + $0x90] sm:$0xff]
    %v119 = vld [vmem:[#allocation6 + $0x98] sm:$0xff]
    %v120 = vld [vmem:[#allocation6 + $0xa0] sm:$0xff]
    %v121 = vld [vmem:[#allocation6 + $0xa8] sm:$0xff]
    %v122 = vld [vmem:[#allocation6 + $0xb0] sm:$0xff]
    %v123 = vld [vmem:[#allocation6 + $0xb8] sm:$0xff]
    %v124 = vld [vmem:[#allocation6 + $0xc0] sm:$0xff]
    %v125 = vld [vmem:[#allocation6 + $0xc8] sm:$0xff]
    %v126 = vld [vmem:[#allocation6 + $0xd0] sm:$0xff]
    %v127 = vld [vmem:[#allocation6 + $0xd8] sm:$0xff]
    %v128 = vld [vmem:[#allocation6 + $0xe0] sm:$0xff]
    %v129 = vld [vmem:[#allocation6 + $0xe8] sm:$0xff]
    %v130 = vld [vmem:[#allocation6 + $0xf0] sm:$0xff]
    %v131 = vld [vmem:[#allocation6 + $0xf8] sm:$0xff]
    %v132 = vld [vmem:[#allocation6 + $0x100] sm:$0xff]
    %v133 = vld [vmem:[#allocation6 + $0x108] sm:$0xff]
    %v134 = vld [vmem:[#allocation6 + $0x110] sm:$0xff]
    %v135 = vld [vmem:[#allocation6 + $0x118] sm:$0xff]
    %v136 = vld [vmem:[#allocation6 + $0x120] sm:$0xff]
    %v137 = vld [vmem:[#allocation6 + $0x128] sm:$0xff]
    %v138 = vld [vmem:[#allocation6 + $0x130] sm:$0xff]
    %v139 = vld [vmem:[#allocation6 + $0x138] sm:$0xff]
    %v140 = vld [vmem:[#allocation6 + $0x140] sm:$0xff]
    %v141 = vld [vmem:[#allocation6 + $0x148] sm:$0xff]
    %v142 = vld [vmem:[#allocation6 + $0x150] sm:$0xff]
    %v143 = vld [vmem:[#allocation6 + $0x158] sm:$0xff]
    %v144 = vld [vmem:[#allocation6 + $0x160] sm:$0xff]
    %v145 = vld [vmem:[#allocation6 + $0x168] sm:$0xff]
    %v146 = vld [vmem:[#allocation6 + $0x170] sm:$0xff]
    %v147 = vld [vmem:[#allocation6 + $0x178] sm:$0xff]
    %v148 = vld [vmem:[#allocation6 + $0x180] sm:$0xff]
    %v149 = vld [vmem:[#allocation6 + $0x188] sm:$0xff]
    %v150 = vld [vmem:[#allocation6 + $0x190] sm:$0xff]
    %v151 = vld [vmem:[#allocation6 + $0x198] sm:$0xff]
    %v152 = vld [vmem:[#allocation6 + $0x1a0] sm:$0xff]
    %v153 = vld [vmem:[#allocation6 + $0x1a8] sm:$0xff]
    %v154 = vld [vmem:[#allocation6 + $0x1b0] sm:$0xff]
    %v155 = vld [vmem:[#allocation6 + $0x1b8] sm:$0xff]
    %v156 = vld [vmem:[#allocation6 + $0x1c0] sm:$0xff]
    %v157 = vld [vmem:[#allocation6 + $0x1c8] sm:$0xff]
    %v158 = vld [vmem:[#allocation6 + $0x1d0] sm:$0xff]
    %v159 = vld [vmem:[#allocation6 + $0x1d8] sm:$0xff]
    %v160 = vld [vmem:[#allocation6 + $0x1e0] sm:$0xff]
    %v161 = vld [vmem:[#allocation6 + $0x1e8] sm:$0xff]
    %v162 = vld [vmem:[#allocation6 + $0x1f0] sm:$0xff]
    %v163 = vld [vmem:[#allocation6 + $0x1f8] sm:$0xff]
    %v164 = vld [vmem:[#allocation6 + $0x200] sm:$0xff]
    %v165 = vld [vmem:[#allocation6 + $0x208] sm:$0xff]
    %v166 = vld [vmem:[#allocation6 + $0x210] sm:$0xff]
    %v167 = vld [vmem:[#allocation6 + $0x218] sm:$0xff]
    %v168 = vld [vmem:[#allocation6 + $0x220] sm:$0xff]
    %v169 = vld [vmem:[#allocation6 + $0x228] sm:$0xff]
    %v170 = vld [vmem:[#allocation6 + $0x230] sm:$0xff]
    %v171 = vld [vmem:[#allocation6 + $0x238] sm:$0xff]
    %v172 = vld [vmem:[#allocation6 + $0x240] sm:$0xff]
    %v173 = vld [vmem:[#allocation6 + $0x248] sm:$0xff]
    %v174 = vld [vmem:[#allocation6 + $0x250] sm:$0xff]
    %v175 = vld [vmem:[#allocation6 + $0x258] sm:$0xff]
    %v176 = vld [vmem:[#allocation6 + $0x260] sm:$0xff]
    %v177 = vld [vmem:[#allocation6 + $0x268] sm:$0xff]
    %v178 = vld [vmem:[#allocation6 + $0x270] sm:$0xff]
    %v179 = vld [vmem:[#allocation6 + $0x278] sm:$0xff]
    %v180 = vld [vmem:[#allocation6 + $0x280] sm:$0xff]
    %v181 = vld [vmem:[#allocation6 + $0x288] sm:$0xff]
    %v182 = vld [vmem:[#allocation6 + $0x290] sm:$0xff]
    %v183 = vld [vmem:[#allocation6 + $0x298] sm:$0xff]
    %v184 = vld [vmem:[#allocation6 + $0x2a0] sm:$0xff]
    %v185 = vld [vmem:[#allocation6 + $0x2a8] sm:$0xff]
    %v186 = vld [vmem:[#allocation6 + $0x2b0] sm:$0xff]
    %v187 = vld [vmem:[#allocation6 + $0x2b8] sm:$0xff]
    %v188 = vld [vmem:[#allocation6 + $0x2c0] sm:$0xff]
    %v189 = vld [vmem:[#allocation6 + $0x2c8] sm:$0xff]
    %v190 = vld [vmem:[#allocation6 + $0x2d0] sm:$0xff]
    %v191 = vld [vmem:[#allocation6 + $0x2d8] sm:$0xff]
    %v192 = vld [vmem:[#allocation6 + $0x2e0] sm:$0xff]
    %v193 = vld [vmem:[#allocation6 + $0x2e8] sm:$0xff]
    %v194 = vld [vmem:[#allocation6 + $0x2f0] sm:$0xff]
    %v195 = vld [vmem:[#allocation6 + $0x2f8] sm:$0xff]
    %v196 = vld [vmem:[#allocation6 + $0x300] sm:$0xff]
    %v197 = vld [vmem:[#allocation6 + $0x308] sm:$0xff]
    %v198 = vld [vmem:[#allocation6 + $0x310] sm:$0xff]
    %v199 = vld [vmem:[#allocation6 + $0x318] sm:$0xff]
    %v200 = vld [vmem:[#allocation6 + $0x320] sm:$0xff]
    %v201 = vld [vmem:[#allocation6 + $0x328] sm:$0xff]
    %v202 = vld [vmem:[#allocation6 + $0x330] sm:$0xff]
    %v203 = vld [vmem:[#allocation6 + $0x338] sm:$0xff]
    %v204 = vld [vmem:[#allocation6 + $0x340] sm:$0xff]
    %v205 = vld [vmem:[#allocation6 + $0x348] sm:$0xff]
    %v206 = vld [vmem:[#allocation6 + $0x350] sm:$0xff]
    %v207 = vld [vmem:[#allocation6 + $0x358] sm:$0xff]
    %v208 = vld [vmem:[#allocation6 + $0x360] sm:$0xff]
    %v209 = vld [vmem:[#allocation6 + $0x368] sm:$0xff]
    %v210 = vld [vmem:[#allocation6 + $0x370] sm:$0xff]
    %v211 = vld [vmem:[#allocation6 + $0x378] sm:$0xff]
    %v212 = vld [vmem:[#allocation6 + $0x380] sm:$0xff]
    %v213 = vld [vmem:[#allocation6 + $0x388] sm:$0xff]
    %v214 = vld [vmem:[#allocation6 + $0x390] sm:$0xff]
    %v215 = vld [vmem:[#allocation6 + $0x398] sm:$0xff]
    %v216 = vld [vmem:[#allocation6 + $0x3a0] sm:$0xff]
    %v217 = vld [vmem:[#allocation6 + $0x3a8] sm:$0xff]
    %v218 = vld [vmem:[#allocation6 + $0x3b0] sm:$0xff]
    %v219 = vld [vmem:[#allocation6 + $0x3b8] sm:$0xff]
    %v220 = vld [vmem:[#allocation6 + $0x3c0] sm:$0xff]
    %v221 = vld [vmem:[#allocation6 + $0x3c8] sm:$0xff]
    %v222 = vld [vmem:[#allocation6 + $0x3d0] sm:$0xff]
    %v223 = vld [vmem:[#allocation6 + $0x3d8] sm:$0xff]
    %v224 = vld [vmem:[#allocation6 + $0x3e0] sm:$0xff]
    %v225 = vld [vmem:[#allocation6 + $0x3e8] sm:$0xff]
    %v226 = vld [vmem:[#allocation6 + $0x3f0] sm:$0xff]
    %v227 = vld [vmem:[#allocation6 + $0x3f8] sm:$0xff]
    %v228 = vld [vmem:[#allocation6 + $0x400] sm:$0xff]
    %v229 = vld [vmem:[#allocation6 + $0x408] sm:$0xff]
    %v230 = vld [vmem:[#allocation6 + $0x410] sm:$0xff]
    %v231 = vld [vmem:[#allocation6 + $0x418] sm:$0xff]
    %v232 = vld [vmem:[#allocation6 + $0x420] sm:$0xff]
    %v233 = vld [vmem:[#allocation6 + $0x428] sm:$0xff]
    %v234 = vld [vmem:[#allocation6 + $0x430] sm:$0xff]
    %v235 = vld [vmem:[#allocation6 + $0x438] sm:$0xff]
    %v236 = vld [vmem:[#allocation6 + $0x440] sm:$0xff]
    %v237 = vld [vmem:[#allocation6 + $0x448] sm:$0xff]
    %v238 = vld [vmem:[#allocation6 + $0x450] sm:$0xff]
    %v239 = vld [vmem:[#allocation6 + $0x458] sm:$0xff]
    %v240 = vld [vmem:[#allocation6 + $0x460] sm:$0xff]
    %v241 = vld [vmem:[#allocation6 + $0x468] sm:$0xff]
    %v242 = vld [vmem:[#allocation6 + $0x470] sm:$0xff]
    %v243 = vld [vmem:[#allocation6 + $0x478] sm:$0xff]
    %v244 = vld [vmem:[#allocation6 + $0x480] sm:$0xff]
    %v245 = vld [vmem:[#allocation6 + $0x488] sm:$0xff]
    %v246 = vld [vmem:[#allocation6 + $0x490] sm:$0xff]
    %v247 = vld [vmem:[#allocation6 + $0x498] sm:$0xff]
    %v248 = vld [vmem:[#allocation6 + $0x4a0] sm:$0xff]
    %v249 = vld [vmem:[#allocation6 + $0x4a8] sm:$0xff]
    %v250 = vld [vmem:[#allocation6 + $0x4b0] sm:$0xff]
    %v251 = vld [vmem:[#allocation6 + $0x4b8] sm:$0xff]
    %v252 = vld [vmem:[#allocation6 + $0x4c0] sm:$0xff]
    %v253 = vld [vmem:[#allocation6 + $0x4c8] sm:$0xff]
    %v254 = vld [vmem:[#allocation6 + $0x4d0] sm:$0xff]
    %v255 = vld [vmem:[#allocation6 + $0x4d8] sm:$0xff]
    %v256 = vld [vmem:[#allocation6 + $0x4e0] sm:$0xff]
    %v257 = vld [vmem:[#allocation6 + $0x4e8] sm:$0xff]
    %v258 = vld [vmem:[#allocation6 + $0x4f0] sm:$0xff]
    %v259 = vld [vmem:[#allocation6 + $0x4f8] sm:$0xff]
    %v260 = vld [vmem:[#allocation6 + $0x500] sm:$0xff]
    %v261 = vld [vmem:[#allocation6 + $0x508] sm:$0xff]
    %v262 = vld [vmem:[#allocation6 + $0x510] sm:$0xff]
    %v263 = vld [vmem:[#allocation6 + $0x518] sm:$0xff]
    %v264 = vld [vmem:[#allocation6 + $0x520] sm:$0xff]
    %v265 = vld [vmem:[#allocation6 + $0x528] sm:$0xff]
    %v266 = vld [vmem:[#allocation6 + $0x530] sm:$0xff]
    %v267 = vld [vmem:[#allocation6 + $0x538] sm:$0xff]
    %v268 = vld [vmem:[#allocation6 + $0x540] sm:$0xff]
    %v269 = vld [vmem:[#allocation6 + $0x548] sm:$0xff]
    %v270 = vld [vmem:[#allocation6 + $0x550] sm:$0xff]
    %v271 = vld [vmem:[#allocation6 + $0x558] sm:$0xff]
    %v272 = vld [vmem:[#allocation6 + $0x560] sm:$0xff]
    %v273 = vld [vmem:[#allocation6 + $0x568] sm:$0xff]
    %v274 = vld [vmem:[#allocation6 + $0x570] sm:$0xff]
    %v275 = vld [vmem:[#allocation6 + $0x578] sm:$0xff]
    %v276 = vld [vmem:[#allocation6 + $0x580] sm:$0xff]
    %v277 = vld [vmem:[#allocation6 + $0x588] sm:$0xff]
    %v278 = vld [vmem:[#allocation6 + $0x590] sm:$0xff]
    %v279 = vld [vmem:[#allocation6 + $0x598] sm:$0xff]
    %v280 = vld [vmem:[#allocation6 + $0x5a0] sm:$0xff]
    %v281 = vld [vmem:[#allocation6 + $0x5a8] sm:$0xff]
    %v282 = vld [vmem:[#allocation6 + $0x5b0] sm:$0xff]
    %v283 = vld [vmem:[#allocation6 + $0x5b8] sm:$0xff]
    %v284 = vld [vmem:[#allocation6 + $0x5c0] sm:$0xff]
    %v285 = vld [vmem:[#allocation6 + $0x5c8] sm:$0xff]
    %v286 = vld [vmem:[#allocation6 + $0x5d0] sm:$0xff]
    %v287 = vld [vmem:[#allocation6 + $0x5d8] sm:$0xff]
    %v288 = vld [vmem:[#allocation6 + $0x5e0] sm:$0xff]
    %v289 = vld [vmem:[#allocation6 + $0x5e8] sm:$0xff]
    %v290 = vld [vmem:[#allocation6 + $0x5f0] sm:$0xff]
    %v291 = vld [vmem:[#allocation6 + $0x5f8] sm:$0xff]
    %v292 = vld [vmem:[#allocation6 + $0x600] sm:$0xff]
    %v293 = vld [vmem:[#allocation6 + $0x608] sm:$0xff]
    %v294 = vld [vmem:[#allocation6 + $0x610] sm:$0xff]
    %v295 = vld [vmem:[#allocation6 + $0x618] sm:$0xff]
    %v296 = vld [vmem:[#allocation6 + $0x620] sm:$0xff]
    %v297 = vld [vmem:[#allocation6 + $0x628] sm:$0xff]
    %v298 = vld [vmem:[#allocation6 + $0x630] sm:$0xff]
    %v299 = vld [vmem:[#allocation6 + $0x638] sm:$0xff]
    %v300 = vld [vmem:[#allocation6 + $0x640] sm:$0xff]
    %v301 = vld [vmem:[#allocation6 + $0x648] sm:$0xff]
    %v302 = vld [vmem:[#allocation6 + $0x650] sm:$0xff]
    %v303 = vld [vmem:[#allocation6 + $0x658] sm:$0xff]
    %v304 = vld [vmem:[#allocation6 + $0x660] sm:$0xff]
    %v305 = vld [vmem:[#allocation6 + $0x668] sm:$0xff]
    %v306 = vld [vmem:[#allocation6 + $0x670] sm:$0xff]
    %v307 = vld [vmem:[#allocation6 + $0x678] sm:$0xff]
    %v308 = vld [vmem:[#allocation6 + $0x680] sm:$0xff]
    %v309 = vld [vmem:[#allocation6 + $0x688] sm:$0xff]
    %v310 = vld [vmem:[#allocation6 + $0x690] sm:$0xff]
    %v311 = vld [vmem:[#allocation6 + $0x698] sm:$0xff]
    %v312 = vld [vmem:[#allocation6 + $0x6a0] sm:$0xff]
    %v313 = vld [vmem:[#allocation6 + $0x6a8] sm:$0xff]
    %v314 = vld [vmem:[#allocation6 + $0x6b0] sm:$0xff]
    %v315 = vld [vmem:[#allocation6 + $0x6b8] sm:$0xff]
    %v316 = vld [vmem:[#allocation6 + $0x6c0] sm:$0xff]
    %v317 = vld [vmem:[#allocation6 + $0x6c8] sm:$0xff]
    %v318 = vld [vmem:[#allocation6 + $0x6d0] sm:$0xff]
    %v319 = vld [vmem:[#allocation6 + $0x6d8] sm:$0xff]
    %v320 = vld [vmem:[#allocation6 + $0x6e0] sm:$0xff]
    %v321 = vld [vmem:[#allocation6 + $0x6e8] sm:$0xff]
    %v322 = vld [vmem:[#allocation6 + $0x6f0] sm:$0xff]
    %v323 = vld [vmem:[#allocation6 + $0x6f8] sm:$0xff]
    %v324 = vld [vmem:[#allocation6 + $0x700] sm:$0xff]
    %v325 = vld [vmem:[#allocation6 + $0x708] sm:$0xff]
    %v326 = vld [vmem:[#allocation6 + $0x710] sm:$0xff]
    %v327 = vld [vmem:[#allocation6 + $0x718] sm:$0xff]
    %v328 = vld [vmem:[#allocation6 + $0x720] sm:$0xff]
    %v329 = vld [vmem:[#allocation6 + $0x728] sm:$0xff]
    %v330 = vld [vmem:[#allocation6 + $0x730] sm:$0xff]
    %v331 = vld [vmem:[#allocation6 + $0x738] sm:$0xff]
    %v332 = vld [vmem:[#allocation6 + $0x740] sm:$0xff]
    %v333 = vld [vmem:[#allocation6 + $0x748] sm:$0xff]
    %v334 = vld [vmem:[#allocation6 + $0x750] sm:$0xff]
    %v335 = vld [vmem:[#allocation6 + $0x758] sm:$0xff]
    %v336 = vld [vmem:[#allocation6 + $0x760] sm:$0xff]
    %v337 = vld [vmem:[#allocation6 + $0x768] sm:$0xff]
    %v338 = vld [vmem:[#allocation6 + $0x770] sm:$0xff]
    %v339 = vld [vmem:[#allocation6 + $0x778] sm:$0xff]
    %v340 = vld [vmem:[#allocation6 + $0x780] sm:$0xff]
    %v341 = vld [vmem:[#allocation6 + $0x788] sm:$0xff]
    %v342 = vld [vmem:[#allocation6 + $0x790] sm:$0xff]
    %v343 = vld [vmem:[#allocation6 + $0x798] sm:$0xff]
    %v344 = vld [vmem:[#allocation6 + $0x7a0] sm:$0xff]
    %v345 = vld [vmem:[#allocation6 + $0x7a8] sm:$0xff]
    %v346 = vld [vmem:[#allocation6 + $0x7b0] sm:$0xff]
    %v347 = vld [vmem:[#allocation6 + $0x7b8] sm:$0xff]
    %v348 = vld [vmem:[#allocation6 + $0x7c0] sm:$0xff]
    %v349 = vld [vmem:[#allocation6 + $0x7c8] sm:$0xff]
    %v350 = vld [vmem:[#allocation6 + $0x7d0] sm:$0xff]
    %v351 = vld [vmem:[#allocation6 + $0x7d8] sm:$0xff]
    %v352 = vld [vmem:[#allocation6 + $0x7e0] sm:$0xff]
    %v353 = vld [vmem:[#allocation6 + $0x7e8] sm:$0xff]
    %v354 = vld [vmem:[#allocation6 + $0x7f0] sm:$0xff]
    %v355 = vld [vmem:[#allocation6 + $0x7f8] sm:$0xff]
    %v356 = vld [vmem:[#allocation6 + $0x800] sm:$0xff]
    %v357 = vld [vmem:[#allocation6 + $0x808] sm:$0xff]
    %v358 = vld [vmem:[#allocation6 + $0x810] sm:$0xff]
    %v359 = vld [vmem:[#allocation6 + $0x818] sm:$0xff]
    %v360 = vld [vmem:[#allocation6 + $0x820] sm:$0xff]
    %v361 = vld [vmem:[#allocation6 + $0x828] sm:$0xff]
    %v362 = vld [vmem:[#allocation6 + $0x830] sm:$0xff]
    %v363 = vld [vmem:[#allocation6 + $0x838] sm:$0xff]
    %v364 = vld [vmem:[#allocation6 + $0x840] sm:$0xff]
    %v365 = vld [vmem:[#allocation6 + $0x848] sm:$0xff]
    %v366 = vld [vmem:[#allocation6 + $0x850] sm:$0xff]
    %v367 = vld [vmem:[#allocation6 + $0x858] sm:$0xff]
    %v368 = vld [vmem:[#allocation6 + $0x860] sm:$0xff]
    %v369 = vld [vmem:[#allocation6 + $0x868] sm:$0xff]
    %v370 = vld [vmem:[#allocation6 + $0x870] sm:$0xff]
    %v371 = vld [vmem:[#allocation6 + $0x878] sm:$0xff]
    %v372 = vld [vmem:[#allocation6 + $0x880] sm:$0xff]
    %v373 = vld [vmem:[#allocation6 + $0x888] sm:$0xff]
    %v374 = vld [vmem:[#allocation6 + $0x890] sm:$0xff]
    %v375 = vld [vmem:[#allocation6 + $0x898] sm:$0xff]
    %v376 = vld [vmem:[#allocation6 + $0x8a0] sm:$0xff]
    %v377 = vld [vmem:[#allocation6 + $0x8a8] sm:$0xff]
    %v378 = vld [vmem:[#allocation6 + $0x8b0] sm:$0xff]
    %v379 = vld [vmem:[#allocation6 + $0x8b8] sm:$0xff]
    %v380 = vld [vmem:[#allocation6 + $0x8c0] sm:$0xff]
    %v381 = vld [vmem:[#allocation6 + $0x8c8] sm:$0xff]
    %v382 = vld [vmem:[#allocation6 + $0x8d0] sm:$0xff]
    %v383 = vld [vmem:[#allocation6 + $0x8d8] sm:$0xff]
    %v384 = vld [vmem:[#allocation6 + $0x8e0] sm:$0xff]
    %v385 = vld [vmem:[#allocation6 + $0x8e8] sm:$0xff]
    %v386 = vld [vmem:[#allocation6 + $0x8f0] sm:$0xff]
    %v387 = vld [vmem:[#allocation6 + $0x8f8] sm:$0xff]
    %v388 = vld [vmem:[#allocation8] sm:$0xff]
    %v389 = vld [vmem:[#allocation8 + $0x8] sm:$0xf]
    %v392 = vlaneseq
    %v393 = vshrl.u32 %v392, 7
    %v394 = vsub.s32 0, %v393
    %v395 = vrot.slane %v388, %v394
    %v396 = vlaneseq
    %v397 = vshrl.u32 %v396, 7
    %v398 = vsub.s32 1, %v397
    %v399 = vrot.slane %v388, %v398
    %v400 = vlaneseq
    %v401 = vshrl.u32 %v400, 7
    %v402 = vsub.s32 2, %v401
    %v403 = vrot.slane %v388, %v402
    %v404 = vlaneseq
    %v405 = vshrl.u32 %v404, 7
    %v406 = vsub.s32 3, %v405
    %v407 = vrot.slane %v388, %v406
    %v408 = vlaneseq
    %v409 = vshrl.u32 %v408, 7
    %v410 = vsub.s32 4, %v409
    %v411 = vrot.slane %v388, %v410
    %v412 = vlaneseq
    %v413 = vshrl.u32 %v412, 7
    %v414 = vsub.s32 5, %v413
    %v415 = vrot.slane %v388, %v414
    %v416 = vlaneseq
    %v417 = vshrl.u32 %v416, 7
    %v418 = vsub.s32 6, %v417
    %v419 = vrot.slane %v388, %v418
    %v420 = vlaneseq
    %v421 = vshrl.u32 %v420, 7
    %v422 = vsub.s32 7, %v421
    %v423 = vrot.slane %v388, %v422
    %v424 = vlaneseq
    %v425 = vshrl.u32 %v424, 7
    %v426 = vsub.s32 0, %v425
    %v427 = vrot.slane %v389, %v426
    %v428 = vlaneseq
    %v429 = vshrl.u32 %v428, 7
    %v430 = vsub.s32 1, %v429
    %v431 = vrot.slane %v389, %v430
    %v432 = vlaneseq
    %v433 = vshrl.u32 %v432, 7
    %v434 = vsub.s32 2, %v433
    %v435 = vrot.slane %v389, %v434
    %v436 = vlaneseq
    %v437 = vshrl.u32 %v436, 7
    %v438 = vsub.s32 3, %v437
    %v439 = vrot.slane %v389, %v438
    %v456 = vunpack.c.l.b16 %v96
    %v457 = vunpack.c.h.b16 %v96
    %v458 = vunpack.c.l.b16 %v97
    %v459 = vunpack.c.l.b16 %v98
    %v460 = vunpack.c.h.b16 %v98
    %v461 = vunpack.c.l.b16 %v99
    %v462 = vpack.c.b16 %v459, %v456
    %v463 = vpack.c.b16 %v460, %v457
    %v464 = vpack.c.b16 %v461, %v458
    %v756 = vunpack.c.l.b16 %v100
    %v757 = vunpack.c.h.b16 %v100
    %v758 = vunpack.c.l.b16 %v101
    %v759 = vunpack.c.h.b16 %v101
    %v760 = vunpack.c.l.b16 %v102
    %v761 = vunpack.c.h.b16 %v102
    %v762 = vunpack.c.l.b16 %v103
    %v763 = vunpack.c.h.b16 %v103
    %v764 = vunpack.c.l.b16 %v104
    %v765 = vunpack.c.h.b16 %v104
    %v766 = vunpack.c.l.b16 %v105
    %v767 = vunpack.c.h.b16 %v105
    %v768 = vunpack.c.l.b16 %v106
    %v769 = vunpack.c.h.b16 %v106
    %v770 = vunpack.c.l.b16 %v107
    %v771 = vunpack.c.h.b16 %v107
    %v772 = vunpack.c.l.b16 %v108
    %v773 = vunpack.c.h.b16 %v108
    %v774 = vunpack.c.l.b16 %v109
    %v775 = vunpack.c.h.b16 %v109
    %v776 = vunpack.c.l.b16 %v110
    %v777 = vunpack.c.h.b16 %v110
    %v778 = vunpack.c.l.b16 %v111
    %v779 = vunpack.c.h.b16 %v111
    %v780 = vunpack.c.l.b16 %v112
    %v781 = vunpack.c.h.b16 %v112
    %v782 = vunpack.c.l.b16 %v113
    %v783 = vunpack.c.h.b16 %v113
    %v784 = vunpack.c.l.b16 %v114
    %v785 = vunpack.c.h.b16 %v114
    %v786 = vunpack.c.l.b16 %v115
    %v787 = vunpack.c.h.b16 %v115
    %v788 = vunpack.c.l.b16 %v116
    %v789 = vunpack.c.h.b16 %v116
    %v790 = vunpack.c.l.b16 %v117
    %v791 = vunpack.c.h.b16 %v117
    %v792 = vunpack.c.l.b16 %v118
    %v793 = vunpack.c.h.b16 %v118
    %v794 = vunpack.c.l.b16 %v119
    %v795 = vunpack.c.h.b16 %v119
    %v796 = vunpack.c.l.b16 %v120
    %v797 = vunpack.c.h.b16 %v120
    %v798 = vunpack.c.l.b16 %v121
    %v799 = vunpack.c.h.b16 %v121
    %v800 = vunpack.c.l.b16 %v122
    %v801 = vunpack.c.h.b16 %v122
    %v802 = vunpack.c.l.b16 %v123
    %v803 = vunpack.c.h.b16 %v123
    %v804 = vunpack.c.l.b16 %v124
    %v805 = vunpack.c.h.b16 %v124
    %v806 = vunpack.c.l.b16 %v125
    %v807 = vunpack.c.h.b16 %v125
    %v808 = vunpack.c.l.b16 %v126
    %v809 = vunpack.c.h.b16 %v126
    %v810 = vunpack.c.l.b16 %v127
    %v811 = vunpack.c.h.b16 %v127
    %v812 = vunpack.c.l.b16 %v128
    %v813 = vunpack.c.h.b16 %v128
    %v814 = vunpack.c.l.b16 %v129
    %v815 = vunpack.c.h.b16 %v129
    %v816 = vunpack.c.l.b16 %v130
    %v817 = vunpack.c.h.b16 %v130
    %v818 = vunpack.c.l.b16 %v131
    %v819 = vunpack.c.h.b16 %v131
    %v820 = vunpack.c.l.b16 %v132
    %v821 = vunpack.c.h.b16 %v132
    %v822 = vunpack.c.l.b16 %v133
    %v823 = vunpack.c.h.b16 %v133
    %v824 = vunpack.c.l.b16 %v134
    %v825 = vunpack.c.h.b16 %v134
    %v826 = vunpack.c.l.b16 %v135
    %v827 = vunpack.c.h.b16 %v135
    %v828 = vunpack.c.l.b16 %v136
    %v829 = vunpack.c.h.b16 %v136
    %v830 = vunpack.c.l.b16 %v137
    %v831 = vunpack.c.h.b16 %v137
    %v832 = vunpack.c.l.b16 %v138
    %v833 = vunpack.c.h.b16 %v138
    %v834 = vunpack.c.l.b16 %v139
    %v835 = vunpack.c.h.b16 %v139
    %v836 = vunpack.c.l.b16 %v140
    %v837 = vunpack.c.h.b16 %v140
    %v838 = vunpack.c.l.b16 %v141
    %v839 = vunpack.c.h.b16 %v141
    %v840 = vunpack.c.l.b16 %v142
    %v841 = vunpack.c.h.b16 %v142
    %v842 = vunpack.c.l.b16 %v143
    %v843 = vunpack.c.h.b16 %v143
    %v844 = vunpack.c.l.b16 %v144
    %v845 = vunpack.c.h.b16 %v144
    %v846 = vunpack.c.l.b16 %v145
    %v847 = vunpack.c.h.b16 %v145
    %v848 = vunpack.c.l.b16 %v146
    %v849 = vunpack.c.h.b16 %v146
    %v850 = vunpack.c.l.b16 %v147
    %v851 = vunpack.c.h.b16 %v147
    %v852 = vunpack.c.l.b16 %v148
    %v853 = vunpack.c.h.b16 %v148
    %v854 = vunpack.c.l.b16 %v149
    %v855 = vunpack.c.h.b16 %v149
    %v856 = vunpack.c.l.b16 %v150
    %v857 = vunpack.c.h.b16 %v150
    %v858 = vunpack.c.l.b16 %v151
    %v859 = vunpack.c.h.b16 %v151
    %v860 = vunpack.c.l.b16 %v152
    %v861 = vunpack.c.h.b16 %v152
    %v862 = vunpack.c.l.b16 %v153
    %v863 = vunpack.c.h.b16 %v153
    %v864 = vunpack.c.l.b16 %v154
    %v865 = vunpack.c.h.b16 %v154
    %v866 = vunpack.c.l.b16 %v155
    %v867 = vunpack.c.h.b16 %v155
    %v868 = vunpack.c.l.b16 %v156
    %v869 = vunpack.c.h.b16 %v156
    %v870 = vunpack.c.l.b16 %v157
    %v871 = vunpack.c.h.b16 %v157
    %v872 = vunpack.c.l.b16 %v158
    %v873 = vunpack.c.h.b16 %v158
    %v874 = vunpack.c.l.b16 %v159
    %v875 = vunpack.c.h.b16 %v159
    %v876 = vunpack.c.l.b16 %v160
    %v877 = vunpack.c.h.b16 %v160
    %v878 = vunpack.c.l.b16 %v161
    %v879 = vunpack.c.h.b16 %v161
    %v880 = vunpack.c.l.b16 %v162
    %v881 = vunpack.c.h.b16 %v162
    %v882 = vunpack.c.l.b16 %v163
    %v883 = vunpack.c.h.b16 %v163
    %v884 = vunpack.c.l.b16 %v164
    %v885 = vunpack.c.h.b16 %v164
    %v886 = vunpack.c.l.b16 %v165
    %v887 = vunpack.c.h.b16 %v165
    %v888 = vunpack.c.l.b16 %v166
    %v889 = vunpack.c.h.b16 %v166
    %v890 = vunpack.c.l.b16 %v167
    %v891 = vunpack.c.h.b16 %v167
    %v892 = vunpack.c.l.b16 %v168
    %v893 = vunpack.c.h.b16 %v168
    %v894 = vunpack.c.l.b16 %v169
    %v895 = vunpack.c.h.b16 %v169
    %v896 = vunpack.c.l.b16 %v170
    %v897 = vunpack.c.h.b16 %v170
    %v898 = vunpack.c.l.b16 %v171
    %v899 = vunpack.c.h.b16 %v171
    %v900 = vunpack.c.l.b16 %v172
    %v901 = vunpack.c.h.b16 %v172
    %v902 = vunpack.c.l.b16 %v173
    %v903 = vunpack.c.h.b16 %v173
    %v904 = vunpack.c.l.b16 %v174
    %v905 = vunpack.c.h.b16 %v174
    %v906 = vunpack.c.l.b16 %v175
    %v907 = vunpack.c.h.b16 %v175
    %v908 = vunpack.c.l.b16 %v176
    %v909 = vunpack.c.h.b16 %v176
    %v910 = vunpack.c.l.b16 %v177
    %v911 = vunpack.c.h.b16 %v177
    %v912 = vunpack.c.l.b16 %v178
    %v913 = vunpack.c.h.b16 %v178
    %v914 = vunpack.c.l.b16 %v179
    %v915 = vunpack.c.h.b16 %v179
    %v916 = vunpack.c.l.b16 %v180
    %v917 = vunpack.c.h.b16 %v180
    %v918 = vunpack.c.l.b16 %v181
    %v919 = vunpack.c.h.b16 %v181
    %v920 = vunpack.c.l.b16 %v182
    %v921 = vunpack.c.h.b16 %v182
    %v922 = vunpack.c.l.b16 %v183
    %v923 = vunpack.c.h.b16 %v183
    %v924 = vunpack.c.l.b16 %v184
    %v925 = vunpack.c.h.b16 %v184
    %v926 = vunpack.c.l.b16 %v185
    %v927 = vunpack.c.h.b16 %v185
    %v928 = vunpack.c.l.b16 %v186
    %v929 = vunpack.c.h.b16 %v186
    %v930 = vunpack.c.l.b16 %v187
    %v931 = vunpack.c.h.b16 %v187
    %v932 = vunpack.c.l.b16 %v188
    %v933 = vunpack.c.h.b16 %v188
    %v934 = vunpack.c.l.b16 %v189
    %v935 = vunpack.c.h.b16 %v189
    %v936 = vunpack.c.l.b16 %v190
    %v937 = vunpack.c.h.b16 %v190
    %v938 = vunpack.c.l.b16 %v191
    %v939 = vunpack.c.h.b16 %v191
    %v940 = vunpack.c.l.b16 %v192
    %v941 = vunpack.c.h.b16 %v192
    %v942 = vunpack.c.l.b16 %v193
    %v943 = vunpack.c.h.b16 %v193
    %v944 = vunpack.c.l.b16 %v194
    %v945 = vunpack.c.h.b16 %v194
    %v946 = vunpack.c.l.b16 %v195
    %v947 = vunpack.c.h.b16 %v195
    %v948 = vunpack.c.l.b16 %v196
    %v949 = vunpack.c.h.b16 %v196
    %v950 = vunpack.c.l.b16 %v197
    %v951 = vunpack.c.h.b16 %v197
    %v952 = vunpack.c.l.b16 %v198
    %v953 = vunpack.c.h.b16 %v198
    %v954 = vunpack.c.l.b16 %v199
    %v955 = vunpack.c.h.b16 %v199
    %v956 = vunpack.c.l.b16 %v200
    %v957 = vunpack.c.h.b16 %v200
    %v958 = vunpack.c.l.b16 %v201
    %v959 = vunpack.c.h.b16 %v201
    %v960 = vunpack.c.l.b16 %v202
    %v961 = vunpack.c.h.b16 %v202
    %v962 = vunpack.c.l.b16 %v203
    %v963 = vunpack.c.h.b16 %v203
    %v964 = vunpack.c.l.b16 %v204
    %v965 = vunpack.c.h.b16 %v204
    %v966 = vunpack.c.l.b16 %v205
    %v967 = vunpack.c.h.b16 %v205
    %v968 = vunpack.c.l.b16 %v206
    %v969 = vunpack.c.h.b16 %v206
    %v970 = vunpack.c.l.b16 %v207
    %v971 = vunpack.c.h.b16 %v207
    %v972 = vunpack.c.l.b16 %v208
    %v973 = vunpack.c.h.b16 %v208
    %v974 = vunpack.c.l.b16 %v209
    %v975 = vunpack.c.h.b16 %v209
    %v976 = vunpack.c.l.b16 %v210
    %v977 = vunpack.c.h.b16 %v210
    %v978 = vunpack.c.l.b16 %v211
    %v979 = vunpack.c.h.b16 %v211
    %v980 = vunpack.c.l.b16 %v212
    %v981 = vunpack.c.h.b16 %v212
    %v982 = vunpack.c.l.b16 %v213
    %v983 = vunpack.c.h.b16 %v213
    %v984 = vunpack.c.l.b16 %v214
    %v985 = vunpack.c.h.b16 %v214
    %v986 = vunpack.c.l.b16 %v215
    %v987 = vunpack.c.h.b16 %v215
    %v988 = vunpack.c.l.b16 %v216
    %v989 = vunpack.c.h.b16 %v216
    %v990 = vunpack.c.l.b16 %v217
    %v991 = vunpack.c.h.b16 %v217
    %v992 = vunpack.c.l.b16 %v218
    %v993 = vunpack.c.h.b16 %v218
    %v994 = vunpack.c.l.b16 %v219
    %v995 = vunpack.c.h.b16 %v219
    %v996 = vunpack.c.l.b16 %v220
    %v997 = vunpack.c.h.b16 %v220
    %v998 = vunpack.c.l.b16 %v221
    %v999 = vunpack.c.h.b16 %v221
    %v1000 = vunpack.c.l.b16 %v222
    %v1001 = vunpack.c.h.b16 %v222
    %v1002 = vunpack.c.l.b16 %v223
    %v1003 = vunpack.c.h.b16 %v223
    %v1004 = vunpack.c.l.b16 %v224
    %v1005 = vunpack.c.h.b16 %v224
    %v1006 = vunpack.c.l.b16 %v225
    %v1007 = vunpack.c.h.b16 %v225
    %v1008 = vunpack.c.l.b16 %v226
    %v1009 = vunpack.c.h.b16 %v226
    %v1010 = vunpack.c.l.b16 %v227
    %v1011 = vunpack.c.h.b16 %v227
    %v1012 = vunpack.c.l.b16 %v228
    %v1013 = vunpack.c.h.b16 %v228
    %v1014 = vunpack.c.l.b16 %v229
    %v1015 = vunpack.c.h.b16 %v229
    %v1016 = vunpack.c.l.b16 %v230
    %v1017 = vunpack.c.h.b16 %v230
    %v1018 = vunpack.c.l.b16 %v231
    %v1019 = vunpack.c.h.b16 %v231
    %v1020 = vunpack.c.l.b16 %v232
    %v1021 = vunpack.c.h.b16 %v232
    %v1022 = vunpack.c.l.b16 %v233
    %v1023 = vunpack.c.h.b16 %v233
    %v1024 = vunpack.c.l.b16 %v234
    %v1025 = vunpack.c.h.b16 %v234
    %v1026 = vunpack.c.l.b16 %v235
    %v1027 = vunpack.c.h.b16 %v235
    %v1028 = vunpack.c.l.b16 %v236
    %v1029 = vunpack.c.h.b16 %v236
    %v1030 = vunpack.c.l.b16 %v237
    %v1031 = vunpack.c.h.b16 %v237
    %v1032 = vunpack.c.l.b16 %v238
    %v1033 = vunpack.c.h.b16 %v238
    %v1034 = vunpack.c.l.b16 %v239
    %v1035 = vunpack.c.h.b16 %v239
    %v1036 = vunpack.c.l.b16 %v240
    %v1037 = vunpack.c.h.b16 %v240
    %v1038 = vunpack.c.l.b16 %v241
    %v1039 = vunpack.c.h.b16 %v241
    %v1040 = vunpack.c.l.b16 %v242
    %v1041 = vunpack.c.h.b16 %v242
    %v1042 = vunpack.c.l.b16 %v243
    %v1043 = vunpack.c.h.b16 %v243
    %v1044 = vunpack.c.l.b16 %v244
    %v1045 = vunpack.c.h.b16 %v244
    %v1046 = vunpack.c.l.b16 %v245
    %v1047 = vunpack.c.h.b16 %v245
    %v1048 = vunpack.c.l.b16 %v246
    %v1049 = vunpack.c.h.b16 %v246
    %v1050 = vunpack.c.l.b16 %v247
    %v1051 = vunpack.c.h.b16 %v247
    %v1052 = vunpack.c.l.b16 %v248
    %v1053 = vunpack.c.h.b16 %v248
    %v1054 = vunpack.c.l.b16 %v249
    %v1055 = vunpack.c.h.b16 %v249
    %v1056 = vunpack.c.l.b16 %v250
    %v1057 = vunpack.c.h.b16 %v250
    %v1058 = vunpack.c.l.b16 %v251
    %v1059 = vunpack.c.h.b16 %v251
    %v1060 = vunpack.c.l.b16 %v252
    %v1061 = vunpack.c.h.b16 %v252
    %v1062 = vunpack.c.l.b16 %v253
    %v1063 = vunpack.c.h.b16 %v253
    %v1064 = vunpack.c.l.b16 %v254
    %v1065 = vunpack.c.h.b16 %v254
    %v1066 = vunpack.c.l.b16 %v255
    %v1067 = vunpack.c.h.b16 %v255
    %v1068 = vunpack.c.l.b16 %v256
    %v1069 = vunpack.c.h.b16 %v256
    %v1070 = vunpack.c.l.b16 %v257
    %v1071 = vunpack.c.h.b16 %v257
    %v1072 = vunpack.c.l.b16 %v258
    %v1073 = vunpack.c.h.b16 %v258
    %v1074 = vunpack.c.l.b16 %v259
    %v1075 = vunpack.c.h.b16 %v259
    %v1076 = vunpack.c.l.b16 %v260
    %v1077 = vunpack.c.h.b16 %v260
    %v1078 = vunpack.c.l.b16 %v261
    %v1079 = vunpack.c.h.b16 %v261
    %v1080 = vunpack.c.l.b16 %v262
    %v1081 = vunpack.c.h.b16 %v262
    %v1082 = vunpack.c.l.b16 %v263
    %v1083 = vunpack.c.h.b16 %v263
    %v1084 = vunpack.c.l.b16 %v264
    %v1085 = vunpack.c.h.b16 %v264
    %v1086 = vunpack.c.l.b16 %v265
    %v1087 = vunpack.c.h.b16 %v265
    %v1088 = vunpack.c.l.b16 %v266
    %v1089 = vunpack.c.h.b16 %v266
    %v1090 = vunpack.c.l.b16 %v267
    %v1091 = vunpack.c.h.b16 %v267
    %v1092 = vunpack.c.l.b16 %v268
    %v1093 = vunpack.c.h.b16 %v268
    %v1094 = vunpack.c.l.b16 %v269
    %v1095 = vunpack.c.h.b16 %v269
    %v1096 = vunpack.c.l.b16 %v270
    %v1097 = vunpack.c.h.b16 %v270
    %v1098 = vunpack.c.l.b16 %v271
    %v1099 = vunpack.c.h.b16 %v271
    %v1100 = vunpack.c.l.b16 %v272
    %v1101 = vunpack.c.h.b16 %v272
    %v1102 = vunpack.c.l.b16 %v273
    %v1103 = vunpack.c.h.b16 %v273
    %v1104 = vunpack.c.l.b16 %v274
    %v1105 = vunpack.c.h.b16 %v274
    %v1106 = vunpack.c.l.b16 %v275
    %v1107 = vunpack.c.h.b16 %v275
    %v1108 = vunpack.c.l.b16 %v276
    %v1109 = vunpack.c.h.b16 %v276
    %v1110 = vunpack.c.l.b16 %v277
    %v1111 = vunpack.c.h.b16 %v277
    %v1112 = vunpack.c.l.b16 %v278
    %v1113 = vunpack.c.h.b16 %v278
    %v1114 = vunpack.c.l.b16 %v279
    %v1115 = vunpack.c.h.b16 %v279
    %v1116 = vunpack.c.l.b16 %v280
    %v1117 = vunpack.c.h.b16 %v280
    %v1118 = vunpack.c.l.b16 %v281
    %v1119 = vunpack.c.h.b16 %v281
    %v1120 = vunpack.c.l.b16 %v282
    %v1121 = vunpack.c.h.b16 %v282
    %v1122 = vunpack.c.l.b16 %v283
    %v1123 = vunpack.c.h.b16 %v283
    %v1124 = vunpack.c.l.b16 %v284
    %v1125 = vunpack.c.h.b16 %v284
    %v1126 = vunpack.c.l.b16 %v285
    %v1127 = vunpack.c.h.b16 %v285
    %v1128 = vunpack.c.l.b16 %v286
    %v1129 = vunpack.c.h.b16 %v286
    %v1130 = vunpack.c.l.b16 %v287
    %v1131 = vunpack.c.h.b16 %v287
    %v1132 = vunpack.c.l.b16 %v288
    %v1133 = vunpack.c.h.b16 %v288
    %v1134 = vunpack.c.l.b16 %v289
    %v1135 = vunpack.c.h.b16 %v289
    %v1136 = vunpack.c.l.b16 %v290
    %v1137 = vunpack.c.h.b16 %v290
    %v1138 = vunpack.c.l.b16 %v291
    %v1139 = vunpack.c.h.b16 %v291
    %v1140 = vunpack.c.l.b16 %v292
    %v1141 = vunpack.c.h.b16 %v292
    %v1142 = vunpack.c.l.b16 %v293
    %v1143 = vunpack.c.h.b16 %v293
    %v1144 = vunpack.c.l.b16 %v294
    %v1145 = vunpack.c.h.b16 %v294
    %v1146 = vunpack.c.l.b16 %v295
    %v1147 = vunpack.c.h.b16 %v295
    %v1148 = vunpack.c.l.b16 %v296
    %v1149 = vunpack.c.h.b16 %v296
    %v1150 = vunpack.c.l.b16 %v297
    %v1151 = vunpack.c.h.b16 %v297
    %v1152 = vunpack.c.l.b16 %v298
    %v1153 = vunpack.c.h.b16 %v298
    %v1154 = vunpack.c.l.b16 %v299
    %v1155 = vunpack.c.h.b16 %v299
    %v1156 = vunpack.c.l.b16 %v300
    %v1157 = vunpack.c.h.b16 %v300
    %v1158 = vunpack.c.l.b16 %v301
    %v1159 = vunpack.c.h.b16 %v301
    %v1160 = vunpack.c.l.b16 %v302
    %v1161 = vunpack.c.h.b16 %v302
    %v1162 = vunpack.c.l.b16 %v303
    %v1163 = vunpack.c.h.b16 %v303
    %v1164 = vunpack.c.l.b16 %v304
    %v1165 = vunpack.c.h.b16 %v304
    %v1166 = vunpack.c.l.b16 %v305
    %v1167 = vunpack.c.h.b16 %v305
    %v1168 = vunpack.c.l.b16 %v306
    %v1169 = vunpack.c.h.b16 %v306
    %v1170 = vunpack.c.l.b16 %v307
    %v1171 = vunpack.c.h.b16 %v307
    %v1172 = vunpack.c.l.b16 %v308
    %v1173 = vunpack.c.h.b16 %v308
    %v1174 = vunpack.c.l.b16 %v309
    %v1175 = vunpack.c.h.b16 %v309
    %v1176 = vunpack.c.l.b16 %v310
    %v1177 = vunpack.c.h.b16 %v310
    %v1178 = vunpack.c.l.b16 %v311
    %v1179 = vunpack.c.h.b16 %v311
    %v1180 = vunpack.c.l.b16 %v312
    %v1181 = vunpack.c.h.b16 %v312
    %v1182 = vunpack.c.l.b16 %v313
    %v1183 = vunpack.c.h.b16 %v313
    %v1184 = vunpack.c.l.b16 %v314
    %v1185 = vunpack.c.h.b16 %v314
    %v1186 = vunpack.c.l.b16 %v315
    %v1187 = vunpack.c.h.b16 %v315
    %v1188 = vunpack.c.l.b16 %v316
    %v1189 = vunpack.c.h.b16 %v316
    %v1190 = vunpack.c.l.b16 %v317
    %v1191 = vunpack.c.h.b16 %v317
    %v1192 = vunpack.c.l.b16 %v318
    %v1193 = vunpack.c.h.b16 %v318
    %v1194 = vunpack.c.l.b16 %v319
    %v1195 = vunpack.c.h.b16 %v319
    %v1196 = vunpack.c.l.b16 %v320
    %v1197 = vunpack.c.h.b16 %v320
    %v1198 = vunpack.c.l.b16 %v321
    %v1199 = vunpack.c.h.b16 %v321
    %v1200 = vunpack.c.l.b16 %v322
    %v1201 = vunpack.c.h.b16 %v322
    %v1202 = vunpack.c.l.b16 %v323
    %v1203 = vunpack.c.h.b16 %v323
    %v1204 = vunpack.c.l.b16 %v324
    %v1205 = vunpack.c.h.b16 %v324
    %v1206 = vunpack.c.l.b16 %v325
    %v1207 = vunpack.c.h.b16 %v325
    %v1208 = vunpack.c.l.b16 %v326
    %v1209 = vunpack.c.h.b16 %v326
    %v1210 = vunpack.c.l.b16 %v327
    %v1211 = vunpack.c.h.b16 %v327
    %v1212 = vunpack.c.l.b16 %v328
    %v1213 = vunpack.c.h.b16 %v328
    %v1214 = vunpack.c.l.b16 %v329
    %v1215 = vunpack.c.h.b16 %v329
    %v1216 = vunpack.c.l.b16 %v330
    %v1217 = vunpack.c.h.b16 %v330
    %v1218 = vunpack.c.l.b16 %v331
    %v1219 = vunpack.c.h.b16 %v331
    %v1220 = vunpack.c.l.b16 %v332
    %v1221 = vunpack.c.h.b16 %v332
    %v1222 = vunpack.c.l.b16 %v333
    %v1223 = vunpack.c.h.b16 %v333
    %v1224 = vunpack.c.l.b16 %v334
    %v1225 = vunpack.c.h.b16 %v334
    %v1226 = vunpack.c.l.b16 %v335
    %v1227 = vunpack.c.h.b16 %v335
    %v1228 = vunpack.c.l.b16 %v336
    %v1229 = vunpack.c.h.b16 %v336
    %v1230 = vunpack.c.l.b16 %v337
    %v1231 = vunpack.c.h.b16 %v337
    %v1232 = vunpack.c.l.b16 %v338
    %v1233 = vunpack.c.h.b16 %v338
    %v1234 = vunpack.c.l.b16 %v339
    %v1235 = vunpack.c.h.b16 %v339
    %v1236 = vunpack.c.l.b16 %v340
    %v1237 = vunpack.c.h.b16 %v340
    %v1238 = vunpack.c.l.b16 %v341
    %v1239 = vunpack.c.h.b16 %v341
    %v1240 = vunpack.c.l.b16 %v342
    %v1241 = vunpack.c.h.b16 %v342
    %v1242 = vunpack.c.l.b16 %v343
    %v1243 = vunpack.c.h.b16 %v343
    %v1244 = vunpack.c.l.b16 %v344
    %v1245 = vunpack.c.h.b16 %v344
    %v1246 = vunpack.c.l.b16 %v345
    %v1247 = vunpack.c.h.b16 %v345
    %v1248 = vunpack.c.l.b16 %v346
    %v1249 = vunpack.c.h.b16 %v346
    %v1250 = vunpack.c.l.b16 %v347
    %v1251 = vunpack.c.h.b16 %v347
    %v1252 = vunpack.c.l.b16 %v348
    %v1253 = vunpack.c.h.b16 %v348
    %v1254 = vunpack.c.l.b16 %v349
    %v1255 = vunpack.c.h.b16 %v349
    %v1256 = vunpack.c.l.b16 %v350
    %v1257 = vunpack.c.h.b16 %v350
    %v1258 = vunpack.c.l.b16 %v351
    %v1259 = vunpack.c.h.b16 %v351
    %v1260 = vunpack.c.l.b16 %v352
    %v1261 = vunpack.c.h.b16 %v352
    %v1262 = vunpack.c.l.b16 %v353
    %v1263 = vunpack.c.h.b16 %v353
    %v1264 = vunpack.c.l.b16 %v354
    %v1265 = vunpack.c.h.b16 %v354
    %v1266 = vunpack.c.l.b16 %v355
    %v1267 = vunpack.c.h.b16 %v355
    %v1268 = vunpack.c.l.b16 %v356
    %v1269 = vunpack.c.h.b16 %v356
    %v1270 = vunpack.c.l.b16 %v357
    %v1271 = vunpack.c.h.b16 %v357
    %v1272 = vunpack.c.l.b16 %v358
    %v1273 = vunpack.c.h.b16 %v358
    %v1274 = vunpack.c.l.b16 %v359
    %v1275 = vunpack.c.h.b16 %v359
    %v1276 = vunpack.c.l.b16 %v360
    %v1277 = vunpack.c.h.b16 %v360
    %v1278 = vunpack.c.l.b16 %v361
    %v1279 = vunpack.c.h.b16 %v361
    %v1280 = vunpack.c.l.b16 %v362
    %v1281 = vunpack.c.h.b16 %v362
    %v1282 = vunpack.c.l.b16 %v363
    %v1283 = vunpack.c.h.b16 %v363
    %v1284 = vunpack.c.l.b16 %v364
    %v1285 = vunpack.c.h.b16 %v364
    %v1286 = vunpack.c.l.b16 %v365
    %v1287 = vunpack.c.h.b16 %v365
    %v1288 = vunpack.c.l.b16 %v366
    %v1289 = vunpack.c.h.b16 %v366
    %v1290 = vunpack.c.l.b16 %v367
    %v1291 = vunpack.c.h.b16 %v367
    %v1292 = vunpack.c.l.b16 %v368
    %v1293 = vunpack.c.h.b16 %v368
    %v1294 = vunpack.c.l.b16 %v369
    %v1295 = vunpack.c.h.b16 %v369
    %v1296 = vunpack.c.l.b16 %v370
    %v1297 = vunpack.c.h.b16 %v370
    %v1298 = vunpack.c.l.b16 %v371
    %v1299 = vunpack.c.h.b16 %v371
    %v1300 = vunpack.c.l.b16 %v372
    %v1301 = vunpack.c.h.b16 %v372
    %v1302 = vunpack.c.l.b16 %v373
    %v1303 = vunpack.c.h.b16 %v373
    %v1304 = vunpack.c.l.b16 %v374
    %v1305 = vunpack.c.h.b16 %v374
    %v1306 = vunpack.c.l.b16 %v375
    %v1307 = vunpack.c.h.b16 %v375
    %v1308 = vunpack.c.l.b16 %v376
    %v1309 = vunpack.c.h.b16 %v376
    %v1310 = vunpack.c.l.b16 %v377
    %v1311 = vunpack.c.h.b16 %v377
    %v1312 = vunpack.c.l.b16 %v378
    %v1313 = vunpack.c.h.b16 %v378
    %v1314 = vunpack.c.l.b16 %v379
    %v1315 = vunpack.c.h.b16 %v379
    %v1316 = vunpack.c.l.b16 %v380
    %v1317 = vunpack.c.h.b16 %v380
    %v1318 = vunpack.c.l.b16 %v381
    %v1319 = vunpack.c.h.b16 %v381
    %v1320 = vunpack.c.l.b16 %v382
    %v1321 = vunpack.c.h.b16 %v382
    %v1322 = vunpack.c.l.b16 %v383
    %v1323 = vunpack.c.h.b16 %v383
    %v1324 = vunpack.c.l.b16 %v384
    %v1325 = vunpack.c.h.b16 %v384
    %v1326 = vunpack.c.l.b16 %v385
    %v1327 = vunpack.c.h.b16 %v385
    %v1328 = vunpack.c.l.b16 %v386
    %v1329 = vunpack.c.h.b16 %v386
    %v1330 = vunpack.c.l.b16 %v387
    %v1331 = vunpack.c.h.b16 %v387
    %v1332 = vpack.c.b16 %v768, %v756
    %v1333 = vpack.c.b16 %v769, %v757
    %v1334 = vpack.c.b16 %v770, %v758
    %v1335 = vpack.c.b16 %v771, %v759
    %v1336 = vpack.c.b16 %v772, %v760
    %v1337 = vpack.c.b16 %v773, %v761
    %v1338 = vpack.c.b16 %v774, %v762
    %v1339 = vpack.c.b16 %v775, %v763
    %v1340 = vpack.c.b16 %v776, %v764
    %v1341 = vpack.c.b16 %v777, %v765
    %v1342 = vpack.c.b16 %v778, %v766
    %v1343 = vpack.c.b16 %v779, %v767
    %v1344 = vpack.c.b16 %v792, %v780
    %v1345 = vpack.c.b16 %v793, %v781
    %v1346 = vpack.c.b16 %v794, %v782
    %v1347 = vpack.c.b16 %v795, %v783
    %v1348 = vpack.c.b16 %v796, %v784
    %v1349 = vpack.c.b16 %v797, %v785
    %v1350 = vpack.c.b16 %v798, %v786
    %v1351 = vpack.c.b16 %v799, %v787
    %v1352 = vpack.c.b16 %v800, %v788
    %v1353 = vpack.c.b16 %v801, %v789
    %v1354 = vpack.c.b16 %v802, %v790
    %v1355 = vpack.c.b16 %v803, %v791
    %v1356 = vpack.c.b16 %v816, %v804
    %v1357 = vpack.c.b16 %v817, %v805
    %v1358 = vpack.c.b16 %v818, %v806
    %v1359 = vpack.c.b16 %v819, %v807
    %v1360 = vpack.c.b16 %v820, %v808
    %v1361 = vpack.c.b16 %v821, %v809
    %v1362 = vpack.c.b16 %v822, %v810
    %v1363 = vpack.c.b16 %v823, %v811
    %v1364 = vpack.c.b16 %v824, %v812
    %v1365 = vpack.c.b16 %v825, %v813
    %v1366 = vpack.c.b16 %v826, %v814
    %v1367 = vpack.c.b16 %v827, %v815
    %v1368 = vpack.c.b16 %v840, %v828
    %v1369 = vpack.c.b16 %v841, %v829
    %v1370 = vpack.c.b16 %v842, %v830
    %v1371 = vpack.c.b16 %v843, %v831
    %v1372 = vpack.c.b16 %v844, %v832
    %v1373 = vpack.c.b16 %v845, %v833
    %v1374 = vpack.c.b16 %v846, %v834
    %v1375 = vpack.c.b16 %v847, %v835
    %v1376 = vpack.c.b16 %v848, %v836
    %v1377 = vpack.c.b16 %v849, %v837
    %v1378 = vpack.c.b16 %v850, %v838
    %v1379 = vpack.c.b16 %v851, %v839
    %v1380 = vpack.c.b16 %v864, %v852
    %v1381 = vpack.c.b16 %v865, %v853
    %v1382 = vpack.c.b16 %v866, %v854
    %v1383 = vpack.c.b16 %v867, %v855
    %v1384 = vpack.c.b16 %v868, %v856
    %v1385 = vpack.c.b16 %v869, %v857
    %v1386 = vpack.c.b16 %v870, %v858
    %v1387 = vpack.c.b16 %v871, %v859
    %v1388 = vpack.c.b16 %v872, %v860
    %v1389 = vpack.c.b16 %v873, %v861
    %v1390 = vpack.c.b16 %v874, %v862
    %v1391 = vpack.c.b16 %v875, %v863
    %v1392 = vpack.c.b16 %v888, %v876
    %v1393 = vpack.c.b16 %v889, %v877
    %v1394 = vpack.c.b16 %v890, %v878
    %v1395 = vpack.c.b16 %v891, %v879
    %v1396 = vpack.c.b16 %v892, %v880
    %v1397 = vpack.c.b16 %v893, %v881
    %v1398 = vpack.c.b16 %v894, %v882
    %v1399 = vpack.c.b16 %v895, %v883
    %v1400 = vpack.c.b16 %v896, %v884
    %v1401 = vpack.c.b16 %v897, %v885
    %v1402 = vpack.c.b16 %v898, %v886
    %v1403 = vpack.c.b16 %v899, %v887
    %v1404 = vpack.c.b16 %v912, %v900
    %v1405 = vpack.c.b16 %v913, %v901
    %v1406 = vpack.c.b16 %v914, %v902
    %v1407 = vpack.c.b16 %v915, %v903
    %v1408 = vpack.c.b16 %v916, %v904
    %v1409 = vpack.c.b16 %v917, %v905
    %v1410 = vpack.c.b16 %v918, %v906
    %v1411 = vpack.c.b16 %v919, %v907
    %v1412 = vpack.c.b16 %v920, %v908
    %v1413 = vpack.c.b16 %v921, %v909
    %v1414 = vpack.c.b16 %v922, %v910
    %v1415 = vpack.c.b16 %v923, %v911
    %v1416 = vpack.c.b16 %v936, %v924
    %v1417 = vpack.c.b16 %v937, %v925
    %v1418 = vpack.c.b16 %v938, %v926
    %v1419 = vpack.c.b16 %v939, %v927
    %v1420 = vpack.c.b16 %v940, %v928
    %v1421 = vpack.c.b16 %v941, %v929
    %v1422 = vpack.c.b16 %v942, %v930
    %v1423 = vpack.c.b16 %v943, %v931
    %v1424 = vpack.c.b16 %v944, %v932
    %v1425 = vpack.c.b16 %v945, %v933
    %v1426 = vpack.c.b16 %v946, %v934
    %v1427 = vpack.c.b16 %v947, %v935
    %v1428 = vpack.c.b16 %v960, %v948
    %v1429 = vpack.c.b16 %v961, %v949
    %v1430 = vpack.c.b16 %v962, %v950
    %v1431 = vpack.c.b16 %v963, %v951
    %v1432 = vpack.c.b16 %v964, %v952
    %v1433 = vpack.c.b16 %v965, %v953
    %v1434 = vpack.c.b16 %v966, %v954
    %v1435 = vpack.c.b16 %v967, %v955
    %v1436 = vpack.c.b16 %v968, %v956
    %v1437 = vpack.c.b16 %v969, %v957
    %v1438 = vpack.c.b16 %v970, %v958
    %v1439 = vpack.c.b16 %v971, %v959
    %v1440 = vpack.c.b16 %v984, %v972
    %v1441 = vpack.c.b16 %v985, %v973
    %v1442 = vpack.c.b16 %v986, %v974
    %v1443 = vpack.c.b16 %v987, %v975
    %v1444 = vpack.c.b16 %v988, %v976
    %v1445 = vpack.c.b16 %v989, %v977
    %v1446 = vpack.c.b16 %v990, %v978
    %v1447 = vpack.c.b16 %v991, %v979
    %v1448 = vpack.c.b16 %v992, %v980
    %v1449 = vpack.c.b16 %v993, %v981
    %v1450 = vpack.c.b16 %v994, %v982
    %v1451 = vpack.c.b16 %v995, %v983
    %v1452 = vpack.c.b16 %v1008, %v996
    %v1453 = vpack.c.b16 %v1009, %v997
    %v1454 = vpack.c.b16 %v1010, %v998
    %v1455 = vpack.c.b16 %v1011, %v999
    %v1456 = vpack.c.b16 %v1012, %v1000
    %v1457 = vpack.c.b16 %v1013, %v1001
    %v1458 = vpack.c.b16 %v1014, %v1002
    %v1459 = vpack.c.b16 %v1015, %v1003
    %v1460 = vpack.c.b16 %v1016, %v1004
    %v1461 = vpack.c.b16 %v1017, %v1005
    %v1462 = vpack.c.b16 %v1018, %v1006
    %v1463 = vpack.c.b16 %v1019, %v1007
    %v1464 = vpack.c.b16 %v1032, %v1020
    %v1465 = vpack.c.b16 %v1033, %v1021
    %v1466 = vpack.c.b16 %v1034, %v1022
    %v1467 = vpack.c.b16 %v1035, %v1023
    %v1468 = vpack.c.b16 %v1036, %v1024
    %v1469 = vpack.c.b16 %v1037, %v1025
    %v1470 = vpack.c.b16 %v1038, %v1026
    %v1471 = vpack.c.b16 %v1039, %v1027
    %v1472 = vpack.c.b16 %v1040, %v1028
    %v1473 = vpack.c.b16 %v1041, %v1029
    %v1474 = vpack.c.b16 %v1042, %v1030
    %v1475 = vpack.c.b16 %v1043, %v1031
    %v1476 = vpack.c.b16 %v1056, %v1044
    %v1477 = vpack.c.b16 %v1057, %v1045
    %v1478 = vpack.c.b16 %v1058, %v1046
    %v1479 = vpack.c.b16 %v1059, %v1047
    %v1480 = vpack.c.b16 %v1060, %v1048
    %v1481 = vpack.c.b16 %v1061, %v1049
    %v1482 = vpack.c.b16 %v1062, %v1050
    %v1483 = vpack.c.b16 %v1063, %v1051
    %v1484 = vpack.c.b16 %v1064, %v1052
    %v1485 = vpack.c.b16 %v1065, %v1053
    %v1486 = vpack.c.b16 %v1066, %v1054
    %v1487 = vpack.c.b16 %v1067, %v1055
    %v1488 = vpack.c.b16 %v1080, %v1068
    %v1489 = vpack.c.b16 %v1081, %v1069
    %v1490 = vpack.c.b16 %v1082, %v1070
    %v1491 = vpack.c.b16 %v1083, %v1071
    %v1492 = vpack.c.b16 %v1084, %v1072
    %v1493 = vpack.c.b16 %v1085, %v1073
    %v1494 = vpack.c.b16 %v1086, %v1074
    %v1495 = vpack.c.b16 %v1087, %v1075
    %v1496 = vpack.c.b16 %v1088, %v1076
    %v1497 = vpack.c.b16 %v1089, %v1077
    %v1498 = vpack.c.b16 %v1090, %v1078
    %v1499 = vpack.c.b16 %v1091, %v1079
    %v1500 = vpack.c.b16 %v1104, %v1092
    %v1501 = vpack.c.b16 %v1105, %v1093
    %v1502 = vpack.c.b16 %v1106, %v1094
    %v1503 = vpack.c.b16 %v1107, %v1095
    %v1504 = vpack.c.b16 %v1108, %v1096
    %v1505 = vpack.c.b16 %v1109, %v1097
    %v1506 = vpack.c.b16 %v1110, %v1098
    %v1507 = vpack.c.b16 %v1111, %v1099
    %v1508 = vpack.c.b16 %v1112, %v1100
    %v1509 = vpack.c.b16 %v1113, %v1101
    %v1510 = vpack.c.b16 %v1114, %v1102
    %v1511 = vpack.c.b16 %v1115, %v1103
    %v1512 = vpack.c.b16 %v1128, %v1116
    %v1513 = vpack.c.b16 %v1129, %v1117
    %v1514 = vpack.c.b16 %v1130, %v1118
    %v1515 = vpack.c.b16 %v1131, %v1119
    %v1516 = vpack.c.b16 %v1132, %v1120
    %v1517 = vpack.c.b16 %v1133, %v1121
    %v1518 = vpack.c.b16 %v1134, %v1122
    %v1519 = vpack.c.b16 %v1135, %v1123
    %v1520 = vpack.c.b16 %v1136, %v1124
    %v1521 = vpack.c.b16 %v1137, %v1125
    %v1522 = vpack.c.b16 %v1138, %v1126
    %v1523 = vpack.c.b16 %v1139, %v1127
    %v1524 = vpack.c.b16 %v1152, %v1140
    %v1525 = vpack.c.b16 %v1153, %v1141
    %v1526 = vpack.c.b16 %v1154, %v1142
    %v1527 = vpack.c.b16 %v1155, %v1143
    %v1528 = vpack.c.b16 %v1156, %v1144
    %v1529 = vpack.c.b16 %v1157, %v1145
    %v1530 = vpack.c.b16 %v1158, %v1146
    %v1531 = vpack.c.b16 %v1159, %v1147
    %v1532 = vpack.c.b16 %v1160, %v1148
    %v1533 = vpack.c.b16 %v1161, %v1149
    %v1534 = vpack.c.b16 %v1162, %v1150
    %v1535 = vpack.c.b16 %v1163, %v1151
    %v1536 = vpack.c.b16 %v1176, %v1164
    %v1537 = vpack.c.b16 %v1177, %v1165
    %v1538 = vpack.c.b16 %v1178, %v1166
    %v1539 = vpack.c.b16 %v1179, %v1167
    %v1540 = vpack.c.b16 %v1180, %v1168
    %v1541 = vpack.c.b16 %v1181, %v1169
    %v1542 = vpack.c.b16 %v1182, %v1170
    %v1543 = vpack.c.b16 %v1183, %v1171
    %v1544 = vpack.c.b16 %v1184, %v1172
    %v1545 = vpack.c.b16 %v1185, %v1173
    %v1546 = vpack.c.b16 %v1186, %v1174
    %v1547 = vpack.c.b16 %v1187, %v1175
    %v1548 = vpack.c.b16 %v1200, %v1188
    %v1549 = vpack.c.b16 %v1201, %v1189
    %v1550 = vpack.c.b16 %v1202, %v1190
    %v1551 = vpack.c.b16 %v1203, %v1191
    %v1552 = vpack.c.b16 %v1204, %v1192
    %v1553 = vpack.c.b16 %v1205, %v1193
    %v1554 = vpack.c.b16 %v1206, %v1194
    %v1555 = vpack.c.b16 %v1207, %v1195
    %v1556 = vpack.c.b16 %v1208, %v1196
    %v1557 = vpack.c.b16 %v1209, %v1197
    %v1558 = vpack.c.b16 %v1210, %v1198
    %v1559 = vpack.c.b16 %v1211, %v1199
    %v1560 = vpack.c.b16 %v1224, %v1212
    %v1561 = vpack.c.b16 %v1225, %v1213
    %v1562 = vpack.c.b16 %v1226, %v1214
    %v1563 = vpack.c.b16 %v1227, %v1215
    %v1564 = vpack.c.b16 %v1228, %v1216
    %v1565 = vpack.c.b16 %v1229, %v1217
    %v1566 = vpack.c.b16 %v1230, %v1218
    %v1567 = vpack.c.b16 %v1231, %v1219
    %v1568 = vpack.c.b16 %v1232, %v1220
    %v1569 = vpack.c.b16 %v1233, %v1221
    %v1570 = vpack.c.b16 %v1234, %v1222
    %v1571 = vpack.c.b16 %v1235, %v1223
    %v1572 = vpack.c.b16 %v1248, %v1236
    %v1573 = vpack.c.b16 %v1249, %v1237
    %v1574 = vpack.c.b16 %v1250, %v1238
    %v1575 = vpack.c.b16 %v1251, %v1239
    %v1576 = vpack.c.b16 %v1252, %v1240
    %v1577 = vpack.c.b16 %v1253, %v1241
    %v1578 = vpack.c.b16 %v1254, %v1242
    %v1579 = vpack.c.b16 %v1255, %v1243
    %v1580 = vpack.c.b16 %v1256, %v1244
    %v1581 = vpack.c.b16 %v1257, %v1245
    %v1582 = vpack.c.b16 %v1258, %v1246
    %v1583 = vpack.c.b16 %v1259, %v1247
    %v1584 = vpack.c.b16 %v1272, %v1260
    %v1585 = vpack.c.b16 %v1273, %v1261
    %v1586 = vpack.c.b16 %v1274, %v1262
    %v1587 = vpack.c.b16 %v1275, %v1263
    %v1588 = vpack.c.b16 %v1276, %v1264
    %v1589 = vpack.c.b16 %v1277, %v1265
    %v1590 = vpack.c.b16 %v1278, %v1266
    %v1591 = vpack.c.b16 %v1279, %v1267
    %v1592 = vpack.c.b16 %v1280, %v1268
    %v1593 = vpack.c.b16 %v1281, %v1269
    %v1594 = vpack.c.b16 %v1282, %v1270
    %v1595 = vpack.c.b16 %v1283, %v1271
    %v1596 = vpack.c.b16 %v1296, %v1284
    %v1597 = vpack.c.b16 %v1297, %v1285
    %v1598 = vpack.c.b16 %v1298, %v1286
    %v1599 = vpack.c.b16 %v1299, %v1287
    %v1600 = vpack.c.b16 %v1300, %v1288
    %v1601 = vpack.c.b16 %v1301, %v1289
    %v1602 = vpack.c.b16 %v1302, %v1290
    %v1603 = vpack.c.b16 %v1303, %v1291
    %v1604 = vpack.c.b16 %v1304, %v1292
    %v1605 = vpack.c.b16 %v1305, %v1293
    %v1606 = vpack.c.b16 %v1306, %v1294
    %v1607 = vpack.c.b16 %v1307, %v1295
    %v1608 = vpack.c.b16 %v1320, %v1308
    %v1609 = vpack.c.b16 %v1321, %v1309
    %v1610 = vpack.c.b16 %v1322, %v1310
    %v1611 = vpack.c.b16 %v1323, %v1311
    %v1612 = vpack.c.b16 %v1324, %v1312
    %v1613 = vpack.c.b16 %v1325, %v1313
    %v1614 = vpack.c.b16 %v1326, %v1314
    %v1615 = vpack.c.b16 %v1327, %v1315
    %v1616 = vpack.c.b16 %v1328, %v1316
    %v1617 = vpack.c.b16 %v1329, %v1317
    %v1618 = vpack.c.b16 %v1330, %v1318
    %v1619 = vpack.c.b16 %v1331, %v1319
    %1908 = vmatprep.subr.bf16.mxu0 %v1333
    %1909 = vmatpush1.bf16.msra.mxu0 %v1332
    %1910 = vmatprep.subr.bf16.mxu0 %v1345
    %1911 = vmatpush1.bf16.msra.mxu0 %v1344
    %1912 = vmatprep.subr.bf16.mxu0 %v1357
    %1913 = vmatpush1.bf16.msra.mxu0 %v1356
    %1914 = vmatprep.subr.bf16.mxu0 %v1369
    %1915 = vmatpush1.bf16.msra.mxu0 %v1368
    %1916 = vmatprep.subr.bf16.mxu0 %v1381
    %1917 = vmatpush1.bf16.msra.mxu0 %v1380
    %1918 = vmatprep.subr.bf16.mxu0 %v1393
    %1919 = vmatpush1.bf16.msra.mxu0 %v1392
    %1920 = vmatprep.subr.bf16.mxu0 %v1405
    %1921 = vmatpush1.bf16.msra.mxu0 %v1404
    %1922 = vmatprep.subr.bf16.mxu0 %v1417
    %1923 = vmatpush1.bf16.msra.mxu0 %v1416
    %1924 = vmatprep.subr.bf16.mxu0 %v1429
    %1925 = vmatpush1.bf16.msra.mxu0 %v1428
    %1926 = vmatprep.subr.bf16.mxu0 %v1441
    %1927 = vmatpush1.bf16.msra.mxu0 %v1440
    %1928 = vmatprep.subr.bf16.mxu0 %v1453
    %1929 = vmatpush1.bf16.msra.mxu0 %v1452
    %1930 = vmatprep.subr.bf16.mxu0 %v1465
    %1931 = vmatpush1.bf16.msra.mxu0 %v1464
    %1932 = vmatprep.subr.bf16.mxu0 %v1477
    %1933 = vmatpush1.bf16.msra.mxu0 %v1476
    %1934 = vmatprep.subr.bf16.mxu0 %v1489
    %1935 = vmatpush1.bf16.msra.mxu0 %v1488
    %1936 = vmatprep.subr.bf16.mxu0 %v1501
    %1937 = vmatpush1.bf16.msra.mxu0 %v1500
    %1938 = vmatprep.subr.bf16.mxu0 %v1513
    %1939 = vmatpush1.bf16.msra.mxu0 %v1512
    %1940 = vmatprep.mubr.bf16.mxu0 %v463
    %1941 = vmatmul.mubr.bf16.gmra.mrb[0].mxu0 %v462
    %v1942 = vpop.f32.mrb[0].mxu0
    %v1943 = vadd.f32 %v395, %v1942
    %v1944 = vpop.f32.mrb[0].mxu0
    %v1945 = vadd.f32 %v399, %v1944
    %v1946 = vpop.f32.mrb[0].mxu0
    %v1947 = vadd.f32 %v395, %v1946
    %v1948 = vpop.f32.mrb[0].mxu0
    %v1949 = vadd.f32 %v399, %v1948
    %1950 = vdwg.mxu0
    %1951 = vmatprep.subr.bf16.mxu0 %v1525
    %1952 = vmatpush1.bf16.msra.mxu0 %v1524
    %1953 = vmatprep.subr.bf16.mxu0 %v1537
    %1954 = vmatpush1.bf16.msra.mxu0 %v1536
    %1955 = vmatprep.subr.bf16.mxu0 %v1549
    %1956 = vmatpush1.bf16.msra.mxu0 %v1548
    %1957 = vmatprep.subr.bf16.mxu0 %v1561
    %1958 = vmatpush1.bf16.msra.mxu0 %v1560
    %1959 = vmatprep.subr.bf16.mxu0 %v1573
    %1960 = vmatpush1.bf16.msra.mxu0 %v1572
    %1961 = vmatprep.subr.bf16.mxu0 %v1585
    %1962 = vmatpush1.bf16.msra.mxu0 %v1584
    %1963 = vmatprep.subr.bf16.mxu0 %v1597
    %1964 = vmatpush1.bf16.msra.mxu0 %v1596
    %1965 = vmatprep.subr.bf16.mxu0 %v1609
    %1966 = vmatpush1.bf16.msra.mxu0 %v1608
    %1967 = vmatprep.subr.bf16.mxu0 0
    %1968 = vmatpush1.bf16.msra.mxu0 0
    %1969 = vmatprep.subr.bf16.mxu0 0
    %1970 = vmatpush1.bf16.msra.mxu0 0
    %1971 = vmatprep.subr.bf16.mxu0 0
    %1972 = vmatpush1.bf16.msra.mxu0 0
    %1973 = vmatprep.subr.bf16.mxu0 0
    %1974 = vmatpush1.bf16.msra.mxu0 0
    %1975 = vmatprep.subr.bf16.mxu0 0
    %1976 = vmatpush1.bf16.msra.mxu0 0
    %1977 = vmatprep.subr.bf16.mxu0 0
    %1978 = vmatpush1.bf16.msra.mxu0 0
    %1979 = vmatprep.subr.bf16.mxu0 0
    %1980 = vmatpush1.bf16.msra.mxu0 0
    %1981 = vmatprep.subr.bf16.mxu0 0
    %1982 = vmatpush1.bf16.msra.mxu0 0
    %1983 = vmatprep.mubr.bf16.mxu0 0
    %1984 = vmatmul.mubr.bf16.gmra.mrb[0].mxu0 %v464
    %v1985 = vpop.f32.mrb[0].mxu0
    %v1986 = vadd.f32 %v1943, %v1985
    %v1987 = vpop.f32.mrb[0].mxu0
    %v1988 = vadd.f32 %v1945, %v1987
    %v1989 = vpop.f32.mrb[0].mxu0
    %v1990 = vadd.f32 %v1947, %v1989
    %v1991 = vpop.f32.mrb[0].mxu0
    %v1992 = vadd.f32 %v1949, %v1991
    %1993 = vdwg.mxu0
    %1994 = vmatprep.subr.bf16.mxu0 %v1335
    %1995 = vmatpush1.bf16.msra.mxu0 %v1334
    %1996 = vmatprep.subr.bf16.mxu0 %v1347
    %1997 = vmatpush1.bf16.msra.mxu0 %v1346
    %1998 = vmatprep.subr.bf16.mxu0 %v1359
    %1999 = vmatpush1.bf16.msra.mxu0 %v1358
    %2000 = vmatprep.subr.bf16.mxu0 %v1371
    %2001 = vmatpush1.bf16.msra.mxu0 %v1370
    %2002 = vmatprep.subr.bf16.mxu0 %v1383
    %2003 = vmatpush1.bf16.msra.mxu0 %v1382
    %2004 = vmatprep.subr.bf16.mxu0 %v1395
    %2005 = vmatpush1.bf16.msra.mxu0 %v1394
    %2006 = vmatprep.subr.bf16.mxu0 %v1407
    %2007 = vmatpush1.bf16.msra.mxu0 %v1406
    %2008 = vmatprep.subr.bf16.mxu0 %v1419
    %2009 = vmatpush1.bf16.msra.mxu0 %v1418
    %2010 = vmatprep.subr.bf16.mxu0 %v1431
    %2011 = vmatpush1.bf16.msra.mxu0 %v1430
    %2012 = vmatprep.subr.bf16.mxu0 %v1443
    %2013 = vmatpush1.bf16.msra.mxu0 %v1442
    %2014 = vmatprep.subr.bf16.mxu0 %v1455
    %2015 = vmatpush1.bf16.msra.mxu0 %v1454
    %2016 = vmatprep.subr.bf16.mxu0 %v1467
    %2017 = vmatpush1.bf16.msra.mxu0 %v1466
    %2018 = vmatprep.subr.bf16.mxu0 %v1479
    %2019 = vmatpush1.bf16.msra.mxu0 %v1478
    %2020 = vmatprep.subr.bf16.mxu0 %v1491
    %2021 = vmatpush1.bf16.msra.mxu0 %v1490
    %2022 = vmatprep.subr.bf16.mxu0 %v1503
    %2023 = vmatpush1.bf16.msra.mxu0 %v1502
    %2024 = vmatprep.subr.bf16.mxu0 %v1515
    %2025 = vmatpush1.bf16.msra.mxu0 %v1514
    %2026 = vmatprep.mubr.bf16.mxu0 %v463
    %2027 = vmatmul.mubr.bf16.gmra.mrb[0].mxu0 %v462
    %v2028 = vpop.f32.mrb[0].mxu0
    %v2029 = vadd.f32 %v403, %v2028
    %v2030 = vpop.f32.mrb[0].mxu0
    %v2031 = vadd.f32 %v407, %v2030
    %v2032 = vpop.f32.mrb[0].mxu0
    %v2033 = vadd.f32 %v403, %v2032
    %v2034 = vpop.f32.mrb[0].mxu0
    %v2035 = vadd.f32 %v407, %v2034
    %2036 = vdwg.mxu0
    %2037 = vmatprep.subr.bf16.mxu0 %v1527
    %2038 = vmatpush1.bf16.msra.mxu0 %v1526
    %2039 = vmatprep.subr.bf16.mxu0 %v1539
    %2040 = vmatpush1.bf16.msra.mxu0 %v1538
    %2041 = vmatprep.subr.bf16.mxu0 %v1551
    %2042 = vmatpush1.bf16.msra.mxu0 %v1550
    %2043 = vmatprep.subr.bf16.mxu0 %v1563
    %2044 = vmatpush1.bf16.msra.mxu0 %v1562
    %2045 = vmatprep.subr.bf16.mxu0 %v1575
    %2046 = vmatpush1.bf16.msra.mxu0 %v1574
    %2047 = vmatprep.subr.bf16.mxu0 %v1587
    %2048 = vmatpush1.bf16.msra.mxu0 %v1586
    %2049 = vmatprep.subr.bf16.mxu0 %v1599
    %2050 = vmatpush1.bf16.msra.mxu0 %v1598
    %2051 = vmatprep.subr.bf16.mxu0 %v1611
    %2052 = vmatpush1.bf16.msra.mxu0 %v1610
    %2053 = vmatprep.subr.bf16.mxu0 0
    %2054 = vmatpush1.bf16.msra.mxu0 0
    %2055 = vmatprep.subr.bf16.mxu0 0
    %2056 = vmatpush1.bf16.msra.mxu0 0
    %2057 = vmatprep.subr.bf16.mxu0 0
    %2058 = vmatpush1.bf16.msra.mxu0 0
    %2059 = vmatprep.subr.bf16.mxu0 0
    %2060 = vmatpush1.bf16.msra.mxu0 0
    %2061 = vmatprep.subr.bf16.mxu0 0
    %2062 = vmatpush1.bf16.msra.mxu0 0
    %2063 = vmatprep.subr.bf16.mxu0 0
    %2064 = vmatpush1.bf16.msra.mxu0 0
    %2065 = vmatprep.subr.bf16.mxu0 0
    %2066 = vmatpush1.bf16.msra.mxu0 0
    %2067 = vmatprep.subr.bf16.mxu0 0
    %2068 = vmatpush1.bf16.msra.mxu0 0
    %2069 = vmatprep.mubr.bf16.mxu0 0
    %2070 = vmatmul.mubr.bf16.gmra.mrb[0].mxu0 %v464
    %v2071 = vpop.f32.mrb[0].mxu0
    %v2072 = vadd.f32 %v2029, %v2071
    %v2073 = vpop.f32.mrb[0].mxu0
    %v2074 = vadd.f32 %v2031, %v2073
    %v2075 = vpop.f32.mrb[0].mxu0
    %v2076 = vadd.f32 %v2033, %v2075
    %v2077 = vpop.f32.mrb[0].mxu0
    %v2078 = vadd.f32 %v2035, %v2077
    %2079 = vdwg.mxu0
    %2080 = vmatprep.subr.bf16.mxu0 %v1337
    %2081 = vmatpush1.bf16.msra.mxu0 %v1336
    %2082 = vmatprep.subr.bf16.mxu0 %v1349
    %2083 = vmatpush1.bf16.msra.mxu0 %v1348
    %2084 = vmatprep.subr.bf16.mxu0 %v1361
    %2085 = vmatpush1.bf16.msra.mxu0 %v1360
    %2086 = vmatprep.subr.bf16.mxu0 %v1373
    %2087 = vmatpush1.bf16.msra.mxu0 %v1372
    %2088 = vmatprep.subr.bf16.mxu0 %v1385
    %2089 = vmatpush1.bf16.msra.mxu0 %v1384
    %2090 = vmatprep.subr.bf16.mxu0 %v1397
    %2091 = vmatpush1.bf16.msra.mxu0 %v1396
    %2092 = vmatprep.subr.bf16.mxu0 %v1409
    %2093 = vmatpush1.bf16.msra.mxu0 %v1408
    %2094 = vmatprep.subr.bf16.mxu0 %v1421
    %2095 = vmatpush1.bf16.msra.mxu0 %v1420
    %2096 = vmatprep.subr.bf16.mxu0 %v1433
    %2097 = vmatpush1.bf16.msra.mxu0 %v1432
    %2098 = vmatprep.subr.bf16.mxu0 %v1445
    %2099 = vmatpush1.bf16.msra.mxu0 %v1444
    %2100 = vmatprep.subr.bf16.mxu0 %v1457
    %2101 = vmatpush1.bf16.msra.mxu0 %v1456
    %2102 = vmatprep.subr.bf16.mxu0 %v1469
    %2103 = vmatpush1.bf16.msra.mxu0 %v1468
    %2104 = vmatprep.subr.bf16.mxu0 %v1481
    %2105 = vmatpush1.bf16.msra.mxu0 %v1480
    %2106 = vmatprep.subr.bf16.mxu0 %v1493
    %2107 = vmatpush1.bf16.msra.mxu0 %v1492
    %2108 = vmatprep.subr.bf16.mxu0 %v1505
    %2109 = vmatpush1.bf16.msra.mxu0 %v1504
    %2110 = vmatprep.subr.bf16.mxu0 %v1517
    %2111 = vmatpush1.bf16.msra.mxu0 %v1516
    %2112 = vmatprep.mubr.bf16.mxu0 %v463
    %2113 = vmatmul.mubr.bf16.gmra.mrb[0].mxu0 %v462
    %v2114 = vpop.f32.mrb[0].mxu0
    %v2115 = vadd.f32 %v411, %v2114
    %v2116 = vpop.f32.mrb[0].mxu0
    %v2117 = vadd.f32 %v415, %v2116
    %v2118 = vpop.f32.mrb[0].mxu0
    %v2119 = vadd.f32 %v411, %v2118
    %v2120 = vpop.f32.mrb[0].mxu0
    %v2121 = vadd.f32 %v415, %v2120
    %2122 = vdwg.mxu0
    %2123 = vmatprep.subr.bf16.mxu0 %v1529
    %2124 = vmatpush1.bf16.msra.mxu0 %v1528
    %2125 = vmatprep.subr.bf16.mxu0 %v1541
    %2126 = vmatpush1.bf16.msra.mxu0 %v1540
    %2127 = vmatprep.subr.bf16.mxu0 %v1553
    %2128 = vmatpush1.bf16.msra.mxu0 %v1552
    %2129 = vmatprep.subr.bf16.mxu0 %v1565
    %2130 = vmatpush1.bf16.msra.mxu0 %v1564
    %2131 = vmatprep.subr.bf16.mxu0 %v1577
    %2132 = vmatpush1.bf16.msra.mxu0 %v1576
    %2133 = vmatprep.subr.bf16.mxu0 %v1589
    %2134 = vmatpush1.bf16.msra.mxu0 %v1588
    %2135 = vmatprep.subr.bf16.mxu0 %v1601
    %2136 = vmatpush1.bf16.msra.mxu0 %v1600
    %2137 = vmatprep.subr.bf16.mxu0 %v1613
    %2138 = vmatpush1.bf16.msra.mxu0 %v1612
    %2139 = vmatprep.subr.bf16.mxu0 0
    %2140 = vmatpush1.bf16.msra.mxu0 0
    %2141 = vmatprep.subr.bf16.mxu0 0
    %2142 = vmatpush1.bf16.msra.mxu0 0
    %2143 = vmatprep.subr.bf16.mxu0 0
    %2144 = vmatpush1.bf16.msra.mxu0 0
    %2145 = vmatprep.subr.bf16.mxu0 0
    %2146 = vmatpush1.bf16.msra.mxu0 0
    %2147 = vmatprep.subr.bf16.mxu0 0
    %2148 = vmatpush1.bf16.msra.mxu0 0
    %2149 = vmatprep.subr.bf16.mxu0 0
    %2150 = vmatpush1.bf16.msra.mxu0 0
    %2151 = vmatprep.subr.bf16.mxu0 0
    %2152 = vmatpush1.bf16.msra.mxu0 0
    %2153 = vmatprep.subr.bf16.mxu0 0
    %2154 = vmatpush1.bf16.msra.mxu0 0
    %2155 = vmatprep.mubr.bf16.mxu0 0
    %2156 = vmatmul.mubr.bf16.gmra.mrb[0].mxu0 %v464
    %v2157 = vpop.f32.mrb[0].mxu0
    %v2158 = vadd.f32 %v2115, %v2157
    %v2159 = vpop.f32.mrb[0].mxu0
    %v2160 = vadd.f32 %v2117, %v2159
    %v2161 = vpop.f32.mrb[0].mxu0
    %v2162 = vadd.f32 %v2119, %v2161
    %v2163 = vpop.f32.mrb[0].mxu0
    %v2164 = vadd.f32 %v2121, %v2163
    %2165 = vdwg.mxu0
    %2166 = vmatprep.subr.bf16.mxu0 %v1339
    %2167 = vmatpush1.bf16.msra.mxu0 %v1338
    %2168 = vmatprep.subr.bf16.mxu0 %v1351
    %2169 = vmatpush1.bf16.msra.mxu0 %v1350
    %2170 = vmatprep.subr.bf16.mxu0 %v1363
    %2171 = vmatpush1.bf16.msra.mxu0 %v1362
    %2172 = vmatprep.subr.bf16.mxu0 %v1375
    %2173 = vmatpush1.bf16.msra.mxu0 %v1374
    %2174 = vmatprep.subr.bf16.mxu0 %v1387
    %2175 = vmatpush1.bf16.msra.mxu0 %v1386
    %2176 = vmatprep.subr.bf16.mxu0 %v1399
    %2177 = vmatpush1.bf16.msra.mxu0 %v1398
    %2178 = vmatprep.subr.bf16.mxu0 %v1411
    %2179 = vmatpush1.bf16.msra.mxu0 %v1410
    %2180 = vmatprep.subr.bf16.mxu0 %v1423
    %2181 = vmatpush1.bf16.msra.mxu0 %v1422
    %2182 = vmatprep.subr.bf16.mxu0 %v1435
    %2183 = vmatpush1.bf16.msra.mxu0 %v1434
    %2184 = vmatprep.subr.bf16.mxu0 %v1447
    %2185 = vmatpush1.bf16.msra.mxu0 %v1446
    %2186 = vmatprep.subr.bf16.mxu0 %v1459
    %2187 = vmatpush1.bf16.msra.mxu0 %v1458
    %2188 = vmatprep.subr.bf16.mxu0 %v1471
    %2189 = vmatpush1.bf16.msra.mxu0 %v1470
    %2190 = vmatprep.subr.bf16.mxu0 %v1483
    %2191 = vmatpush1.bf16.msra.mxu0 %v1482
    %2192 = vmatprep.subr.bf16.mxu0 %v1495
    %2193 = vmatpush1.bf16.msra.mxu0 %v1494
    %2194 = vmatprep.subr.bf16.mxu0 %v1507
    %2195 = vmatpush1.bf16.msra.mxu0 %v1506
    %2196 = vmatprep.subr.bf16.mxu0 %v1519
    %2197 = vmatpush1.bf16.msra.mxu0 %v1518
    %2198 = vmatprep.mubr.bf16.mxu0 %v463
    %2199 = vmatmul.mubr.bf16.gmra.mrb[0].mxu0 %v462
    %v2200 = vpop.f32.mrb[0].mxu0
    %v2201 = vadd.f32 %v419, %v2200
    %v2202 = vpop.f32.mrb[0].mxu0
    %v2203 = vadd.f32 %v423, %v2202
    %v2204 = vpop.f32.mrb[0].mxu0
    %v2205 = vadd.f32 %v419, %v2204
    %v2206 = vpop.f32.mrb[0].mxu0
    %v2207 = vadd.f32 %v423, %v2206
    %2208 = vdwg.mxu0
    %2209 = vmatprep.subr.bf16.mxu0 %v1531
    %2210 = vmatpush1.bf16.msra.mxu0 %v1530
    %2211 = vmatprep.subr.bf16.mxu0 %v1543
    %2212 = vmatpush1.bf16.msra.mxu0 %v1542
    %2213 = vmatprep.subr.bf16.mxu0 %v1555
    %2214 = vmatpush1.bf16.msra.mxu0 %v1554
    %2215 = vmatprep.subr.bf16.mxu0 %v1567
    %2216 = vmatpush1.bf16.msra.mxu0 %v1566
    %2217 = vmatprep.subr.bf16.mxu0 %v1579
    %2218 = vmatpush1.bf16.msra.mxu0 %v1578
    %2219 = vmatprep.subr.bf16.mxu0 %v1591
    %2220 = vmatpush1.bf16.msra.mxu0 %v1590
    %2221 = vmatprep.subr.bf16.mxu0 %v1603
    %2222 = vmatpush1.bf16.msra.mxu0 %v1602
    %2223 = vmatprep.subr.bf16.mxu0 %v1615
    %2224 = vmatpush1.bf16.msra.mxu0 %v1614
    %2225 = vmatprep.subr.bf16.mxu0 0
    %2226 = vmatpush1.bf16.msra.mxu0 0
    %2227 = vmatprep.subr.bf16.mxu0 0
    %2228 = vmatpush1.bf16.msra.mxu0 0
    %2229 = vmatprep.subr.bf16.mxu0 0
    %2230 = vmatpush1.bf16.msra.mxu0 0
    %2231 = vmatprep.subr.bf16.mxu0 0
    %2232 = vmatpush1.bf16.msra.mxu0 0
    %2233 = vmatprep.subr.bf16.mxu0 0
    %2234 = vmatpush1.bf16.msra.mxu0 0
    %2235 = vmatprep.subr.bf16.mxu0 0
    %2236 = vmatpush1.bf16.msra.mxu0 0
    %2237 = vmatprep.subr.bf16.mxu0 0
    %2238 = vmatpush1.bf16.msra.mxu0 0
    %2239 = vmatprep.subr.bf16.mxu0 0
    %2240 = vmatpush1.bf16.msra.mxu0 0
    %2241 = vmatprep.mubr.bf16.mxu0 0
    %2242 = vmatmul.mubr.bf16.gmra.mrb[0].mxu0 %v464
    %v2243 = vpop.f32.mrb[0].mxu0
    %v2244 = vadd.f32 %v2201, %v2243
    %v2245 = vpop.f32.mrb[0].mxu0
    %v2246 = vadd.f32 %v2203, %v2245
    %v2247 = vpop.f32.mrb[0].mxu0
    %v2248 = vadd.f32 %v2205, %v2247
    %v2249 = vpop.f32.mrb[0].mxu0
    %v2250 = vadd.f32 %v2207, %v2249
    %2251 = vdwg.mxu0
    %2252 = vmatprep.subr.bf16.mxu0 %v1341
    %2253 = vmatpush1.bf16.msra.mxu0 %v1340
    %2254 = vmatprep.subr.bf16.mxu0 %v1353
    %2255 = vmatpush1.bf16.msra.mxu0 %v1352
    %2256 = vmatprep.subr.bf16.mxu0 %v1365
    %2257 = vmatpush1.bf16.msra.mxu0 %v1364
    %2258 = vmatprep.subr.bf16.mxu0 %v1377
    %2259 = vmatpush1.bf16.msra.mxu0 %v1376
    %2260 = vmatprep.subr.bf16.mxu0 %v1389
    %2261 = vmatpush1.bf16.msra.mxu0 %v1388
    %2262 = vmatprep.subr.bf16.mxu0 %v1401
    %2263 = vmatpush1.bf16.msra.mxu0 %v1400
    %2264 = vmatprep.subr.bf16.mxu0 %v1413
    %2265 = vmatpush1.bf16.msra.mxu0 %v1412
    %2266 = vmatprep.subr.bf16.mxu0 %v1425
    %2267 = vmatpush1.bf16.msra.mxu0 %v1424
    %2268 = vmatprep.subr.bf16.mxu0 %v1437
    %2269 = vmatpush1.bf16.msra.mxu0 %v1436
    %2270 = vmatprep.subr.bf16.mxu0 %v1449
    %2271 = vmatpush1.bf16.msra.mxu0 %v1448
    %2272 = vmatprep.subr.bf16.mxu0 %v1461
    %2273 = vmatpush1.bf16.msra.mxu0 %v1460
    %2274 = vmatprep.subr.bf16.mxu0 %v1473
    %2275 = vmatpush1.bf16.msra.mxu0 %v1472
    %2276 = vmatprep.subr.bf16.mxu0 %v1485
    %2277 = vmatpush1.bf16.msra.mxu0 %v1484
    %2278 = vmatprep.subr.bf16.mxu0 %v1497
    %2279 = vmatpush1.bf16.msra.mxu0 %v1496
    %2280 = vmatprep.subr.bf16.mxu0 %v1509
    %2281 = vmatpush1.bf16.msra.mxu0 %v1508
    %2282 = vmatprep.subr.bf16.mxu0 %v1521
    %2283 = vmatpush1.bf16.msra.mxu0 %v1520
    %2284 = vmatprep.mubr.bf16.mxu0 %v463
    %2285 = vmatmul.mubr.bf16.gmra.mrb[0].mxu0 %v462
    %v2286 = vpop.f32.mrb[0].mxu0
    %v2287 = vadd.f32 %v427, %v2286
    %v2288 = vpop.f32.mrb[0].mxu0
    %v2289 = vadd.f32 %v431, %v2288
    %v2290 = vpop.f32.mrb[0].mxu0
    %v2291 = vadd.f32 %v427, %v2290
    %v2292 = vpop.f32.mrb[0].mxu0
    %v2293 = vadd.f32 %v431, %v2292
    %2294 = vdwg.mxu0
    %2295 = vmatprep.subr.bf16.mxu0 %v1533
    %2296 = vmatpush1.bf16.msra.mxu0 %v1532
    %2297 = vmatprep.subr.bf16.mxu0 %v1545
    %2298 = vmatpush1.bf16.msra.mxu0 %v1544
    %2299 = vmatprep.subr.bf16.mxu0 %v1557
    %2300 = vmatpush1.bf16.msra.mxu0 %v1556
    %2301 = vmatprep.subr.bf16.mxu0 %v1569
    %2302 = vmatpush1.bf16.msra.mxu0 %v1568
    %2303 = vmatprep.subr.bf16.mxu0 %v1581
    %2304 = vmatpush1.bf16.msra.mxu0 %v1580
    %2305 = vmatprep.subr.bf16.mxu0 %v1593
    %2306 = vmatpush1.bf16.msra.mxu0 %v1592
    %2307 = vmatprep.subr.bf16.mxu0 %v1605
    %2308 = vmatpush1.bf16.msra.mxu0 %v1604
    %2309 = vmatprep.subr.bf16.mxu0 %v1617
    %2310 = vmatpush1.bf16.msra.mxu0 %v1616
    %2311 = vmatprep.subr.bf16.mxu0 0
    %2312 = vmatpush1.bf16.msra.mxu0 0
    %2313 = vmatprep.subr.bf16.mxu0 0
    %2314 = vmatpush1.bf16.msra.mxu0 0
    %2315 = vmatprep.subr.bf16.mxu0 0
    %2316 = vmatpush1.bf16.msra.mxu0 0
    %2317 = vmatprep.subr.bf16.mxu0 0
    %2318 = vmatpush1.bf16.msra.mxu0 0
    %2319 = vmatprep.subr.bf16.mxu0 0
    %2320 = vmatpush1.bf16.msra.mxu0 0
    %2321 = vmatprep.subr.bf16.mxu0 0
    %2322 = vmatpush1.bf16.msra.mxu0 0
    %2323 = vmatprep.subr.bf16.mxu0 0
    %2324 = vmatpush1.bf16.msra.mxu0 0
    %2325 = vmatprep.subr.bf16.mxu0 0
    %2326 = vmatpush1.bf16.msra.mxu0 0
    %2327 = vmatprep.mubr.bf16.mxu0 0
    %2328 = vmatmul.mubr.bf16.gmra.mrb[0].mxu0 %v464
    %v2329 = vpop.f32.mrb[0].mxu0
    %v2330 = vadd.f32 %v2287, %v2329
    %v2331 = vpop.f32.mrb[0].mxu0
    %v2332 = vadd.f32 %v2289, %v2331
    %v2333 = vpop.f32.mrb[0].mxu0
    %v2334 = vadd.f32 %v2291, %v2333
    %v2335 = vpop.f32.mrb[0].mxu0
    %v2336 = vadd.f32 %v2293, %v2335
    %2337 = vdwg.mxu0
    %2338 = vmatprep.subr.bf16.mxu0 %v1343
    %2339 = vmatpush1.bf16.msra.mxu0 %v1342
    %2340 = vmatprep.subr.bf16.mxu0 %v1355
    %2341 = vmatpush1.bf16.msra.mxu0 %v1354
    %2342 = vmatprep.subr.bf16.mxu0 %v1367
    %2343 = vmatpush1.bf16.msra.mxu0 %v1366
    %2344 = vmatprep.subr.bf16.mxu0 %v1379
    %2345 = vmatpush1.bf16.msra.mxu0 %v1378
    %2346 = vmatprep.subr.bf16.mxu0 %v1391
    %2347 = vmatpush1.bf16.msra.mxu0 %v1390
    %2348 = vmatprep.subr.bf16.mxu0 %v1403
    %2349 = vmatpush1.bf16.msra.mxu0 %v1402
    %2350 = vmatprep.subr.bf16.mxu0 %v1415
    %2351 = vmatpush1.bf16.msra.mxu0 %v1414
    %2352 = vmatprep.subr.bf16.mxu0 %v1427
    %2353 = vmatpush1.bf16.msra.mxu0 %v1426
    %2354 = vmatprep.subr.bf16.mxu0 %v1439
    %2355 = vmatpush1.bf16.msra.mxu0 %v1438
    %2356 = vmatprep.subr.bf16.mxu0 %v1451
    %2357 = vmatpush1.bf16.msra.mxu0 %v1450
    %2358 = vmatprep.subr.bf16.mxu0 %v1463
    %2359 = vmatpush1.bf16.msra.mxu0 %v1462
    %2360 = vmatprep.subr.bf16.mxu0 %v1475
    %2361 = vmatpush1.bf16.msra.mxu0 %v1474
    %2362 = vmatprep.subr.bf16.mxu0 %v1487
    %2363 = vmatpush1.bf16.msra.mxu0 %v1486
    %2364 = vmatprep.subr.bf16.mxu0 %v1499
    %2365 = vmatpush1.bf16.msra.mxu0 %v1498
    %2366 = vmatprep.subr.bf16.mxu0 %v1511
    %2367 = vmatpush1.bf16.msra.mxu0 %v1510
    %2368 = vmatprep.subr.bf16.mxu0 %v1523
    %2369 = vmatpush1.bf16.msra.mxu0 %v1522
    %2370 = vmatprep.mubr.bf16.mxu0 %v463
    %2371 = vmatmul.mubr.bf16.gmra.mrb[0].mxu0 %v462
    %v2372 = vpop.f32.mrb[0].mxu0
    %v2373 = vadd.f32 %v435, %v2372
    %v2374 = vpop.f32.mrb[0].mxu0
    %v2375 = vadd.f32 %v439, %v2374
    %v2376 = vpop.f32.mrb[0].mxu0
    %v2377 = vadd.f32 %v435, %v2376
    %v2378 = vpop.f32.mrb[0].mxu0
    %v2379 = vadd.f32 %v439, %v2378
    %2380 = vdwg.mxu0
    %2381 = vmatprep.subr.bf16.mxu0 %v1535
    %2382 = vmatpush1.bf16.msra.mxu0 %v1534
    %2383 = vmatprep.subr.bf16.mxu0 %v1547
    %2384 = vmatpush1.bf16.msra.mxu0 %v1546
    %2385 = vmatprep.subr.bf16.mxu0 %v1559
    %2386 = vmatpush1.bf16.msra.mxu0 %v1558
    %2387 = vmatprep.subr.bf16.mxu0 %v1571
    %2388 = vmatpush1.bf16.msra.mxu0 %v1570
    %2389 = vmatprep.subr.bf16.mxu0 %v1583
    %2390 = vmatpush1.bf16.msra.mxu0 %v1582
    %2391 = vmatprep.subr.bf16.mxu0 %v1595
    %2392 = vmatpush1.bf16.msra.mxu0 %v1594
    %2393 = vmatprep.subr.bf16.mxu0 %v1607
    %2394 = vmatpush1.bf16.msra.mxu0 %v1606
    %2395 = vmatprep.subr.bf16.mxu0 %v1619
    %2396 = vmatpush1.bf16.msra.mxu0 %v1618
    %2397 = vmatprep.subr.bf16.mxu0 0
    %2398 = vmatpush1.bf16.msra.mxu0 0
    %2399 = vmatprep.subr.bf16.mxu0 0
    %2400 = vmatpush1.bf16.msra.mxu0 0
    %2401 = vmatprep.subr.bf16.mxu0 0
    %2402 = vmatpush1.bf16.msra.mxu0 0
    %2403 = vmatprep.subr.bf16.mxu0 0
    %2404 = vmatpush1.bf16.msra.mxu0 0
    %2405 = vmatprep.subr.bf16.mxu0 0
    %2406 = vmatpush1.bf16.msra.mxu0 0
    %2407 = vmatprep.subr.bf16.mxu0 0
    %2408 = vmatpush1.bf16.msra.mxu0 0
    %2409 = vmatprep.subr.bf16.mxu0 0
    %2410 = vmatpush1.bf16.msra.mxu0 0
    %2411 = vmatprep.subr.bf16.mxu0 0
    %2412 = vmatpush1.bf16.msra.mxu0 0
    %2413 = vmatprep.mubr.bf16.mxu0 0
    %2414 = vmatmul.mubr.bf16.gmra.mrb[0].mxu0 %v464
    %v2415 = vpop.f32.mrb[0].mxu0
    %v2416 = vadd.f32 %v2373, %v2415
    %v2417 = vpop.f32.mrb[0].mxu0
    %v2418 = vadd.f32 %v2375, %v2417
    %v2419 = vpop.f32.mrb[0].mxu0
    %v2420 = vadd.f32 %v2377, %v2419
    %v2421 = vpop.f32.mrb[0].mxu0
    %v2422 = vadd.f32 %v2379, %v2421
    %2423 = vdwg.mxu0
    %v2424 = vmax.f32 %v1986, 0.0
    %v2425 = vmax.f32 %v1988, 0.0
    %v2426 = vmax.f32 %v2072, 0.0
    %v2427 = vmax.f32 %v2074, 0.0
    %v2428 = vmax.f32 %v2158, 0.0
    %v2429 = vmax.f32 %v2160, 0.0
    %v2430 = vmax.f32 %v2244, 0.0
    %v2431 = vmax.f32 %v2246, 0.0
    %v2432 = vmax.f32 %v2330, 0.0
    %v2433 = vmax.f32 %v2332, 0.0
    %v2434 = vmax.f32 %v2416, 0.0
    %v2435 = vmax.f32 %v2418, 0.0
    %v2436 = vmax.f32 %v1990, 0.0
    %v2437 = vmax.f32 %v1992, 0.0
    %v2438 = vmax.f32 %v2076, 0.0
    %v2439 = vmax.f32 %v2078, 0.0
    %v2440 = vmax.f32 %v2162, 0.0
    %v2441 = vmax.f32 %v2164, 0.0
    %v2442 = vmax.f32 %v2248, 0.0
    %v2443 = vmax.f32 %v2250, 0.0
    %v2444 = vmax.f32 %v2334, 0.0
    %v2445 = vmax.f32 %v2336, 0.0
    %v2446 = vmax.f32 %v2420, 0.0
    %v2447 = vmax.f32 %v2422, 0.0
    %v2448 = vld [vmem:[#allocation2] sm:$0xff]
    %v2449 = vld [vmem:[#allocation2 + $0x8] sm:$0xff]
    %v2450 = vld [vmem:[#allocation2 + $0x10] sm:$0xff]
    %v2451 = vld [vmem:[#allocation2 + $0x18] sm:$0xff]
    %v2452 = vld [vmem:[#allocation2 + $0x20] sm:$0xff]
    %v2453 = vld [vmem:[#allocation2 + $0x28] sm:$0xff]
    %v2454 = vpack.c.bf16 %v2436, %v2424
    %v2455 = vpack.c.bf16 %v2437, %v2425
    %v2456 = vpack.c.bf16 %v2438, %v2426
    %v2457 = vpack.c.bf16 %v2439, %v2427
    %v2458 = vpack.c.bf16 %v2440, %v2428
    %v2459 = vpack.c.bf16 %v2441, %v2429
    %v2460 = vpack.c.bf16 %v2442, %v2430
    %v2461 = vpack.c.bf16 %v2443, %v2431
    %v2462 = vpack.c.bf16 %v2444, %v2432
    %v2463 = vpack.c.bf16 %v2445, %v2433
    %v2464 = vpack.c.bf16 %v2446, %v2434
    %v2465 = vpack.c.bf16 %v2447, %v2435
    %v2466 = vld [vmem:[#allocation9] sm:$0xff]
    %v2467 = vld [vmem:[#allocation9 + $0x8] sm:$0xf]
    %v2468 = vld [vmem:[#allocation9 + $0xc] sm:$0xff]
    %v2469 = vld [vmem:[#allocation9 + $0x14] sm:$0xf]
    %v2470 = vld [vmem:[#allocation9 + $0x18] sm:$0xff]
    %v2471 = vld [vmem:[#allocation9 + $0x20] sm:$0xf]
    %v2472 = vld [vmem:[#allocation9 + $0x24] sm:$0xff]
    %v2473 = vld [vmem:[#allocation9 + $0x2c] sm:$0xf]
    %v2474 = vld [vmem:[#allocation9 + $0x30] sm:$0xff]
    %v2475 = vld [vmem:[#allocation9 + $0x38] sm:$0xf]
    %v2476 = vld [vmem:[#allocation9 + $0x3c] sm:$0xff]
    %v2477 = vld [vmem:[#allocation9 + $0x44] sm:$0xf]
    %v2478 = vld [vmem:[#allocation9 + $0x48] sm:$0xff]
    %v2479 = vld [vmem:[#allocation9 + $0x50] sm:$0xf]
    %v2480 = vld [vmem:[#allocation9 + $0x54] sm:$0xff]
    %v2481 = vld [vmem:[#allocation9 + $0x5c] sm:$0xf]
    %v2482 = vld [vmem:[#allocation9 + $0x60] sm:$0xff]
    %v2483 = vld [vmem:[#allocation9 + $0x68] sm:$0xf]
    %v2484 = vld [vmem:[#allocation9 + $0x6c] sm:$0xff]
    %v2485 = vld [vmem:[#allocation9 + $0x74] sm:$0xf]
    %v2486 = vld [vmem:[#allocation9 + $0x78] sm:$0xff]
    %v2487 = vld [vmem:[#allocation9 + $0x80] sm:$0xf]
    %v2488 = vld [vmem:[#allocation9 + $0x84] sm:$0xff]
    %v2489 = vld [vmem:[#allocation9 + $0x8c] sm:$0xf]
    %v2490 = vld [vmem:[#allocation9 + $0x90] sm:$0xff]
    %v2491 = vld [vmem:[#allocation9 + $0x98] sm:$0xf]
    %v2492 = vld [vmem:[#allocation9 + $0x9c] sm:$0xff]
    %v2493 = vld [vmem:[#allocation9 + $0xa4] sm:$0xf]
    %v2494 = vld [vmem:[#allocation9 + $0xa8] sm:$0xff]
    %v2495 = vld [vmem:[#allocation9 + $0xb0] sm:$0xf]
    %v2496 = vld [vmem:[#allocation9 + $0xb4] sm:$0xff]
    %v2497 = vld [vmem:[#allocation9 + $0xbc] sm:$0xf]
    %v2498 = vld [vmem:[#allocation9 + $0xc0] sm:$0xff]
    %v2499 = vld [vmem:[#allocation9 + $0xc8] sm:$0xf]
    %v2500 = vld [vmem:[#allocation9 + $0xcc] sm:$0xff]
    %v2501 = vld [vmem:[#allocation9 + $0xd4] sm:$0xf]
    %v2502 = vld [vmem:[#allocation9 + $0xd8] sm:$0xff]
    %v2503 = vld [vmem:[#allocation9 + $0xe0] sm:$0xf]
    %v2504 = vld [vmem:[#allocation9 + $0xe4] sm:$0xff]
    %v2505 = vld [vmem:[#allocation9 + $0xec] sm:$0xf]
    %v2506 = vld [vmem:[#allocation9 + $0xf0] sm:$0xff]
    %v2507 = vld [vmem:[#allocation9 + $0xf8] sm:$0xf]
    %v2508 = vld [vmem:[#allocation9 + $0xfc] sm:$0xff]
    %v2509 = vld [vmem:[#allocation9 + $0x104] sm:$0xf]
    %v2510 = vld [vmem:[#allocation9 + $0x108] sm:$0xff]
    %v2511 = vld [vmem:[#allocation9 + $0x110] sm:$0xf]
    %v2512 = vld [vmem:[#allocation9 + $0x114] sm:$0xff]
    %v2513 = vld [vmem:[#allocation9 + $0x11c] sm:$0xf]
    %v2514 = vld [vmem:[#allocation9 + $0x120] sm:$0xff]
    %v2515 = vld [vmem:[#allocation9 + $0x128] sm:$0xf]
    %v2516 = vld [vmem:[#allocation9 + $0x12c] sm:$0xff]
    %v2517 = vld [vmem:[#allocation9 + $0x134] sm:$0xf]
    %v2518 = vld [vmem:[#allocation9 + $0x138] sm:$0xff]
    %v2519 = vld [vmem:[#allocation9 + $0x140] sm:$0xf]
    %v2520 = vld [vmem:[#allocation9 + $0x144] sm:$0xff]
    %v2521 = vld [vmem:[#allocation9 + $0x14c] sm:$0xf]
    %v2522 = vld [vmem:[#allocation9 + $0x150] sm:$0xff]
    %v2523 = vld [vmem:[#allocation9 + $0x158] sm:$0xf]
    %v2524 = vld [vmem:[#allocation9 + $0x15c] sm:$0xff]
    %v2525 = vld [vmem:[#allocation9 + $0x164] sm:$0xf]
    %v2526 = vld [vmem:[#allocation9 + $0x168] sm:$0xff]
    %v2527 = vld [vmem:[#allocation9 + $0x170] sm:$0xf]
    %v2528 = vld [vmem:[#allocation9 + $0x174] sm:$0xff]
    %v2529 = vld [vmem:[#allocation9 + $0x17c] sm:$0xf]
    %v2530 = vld [vmem:[#allocation9 + $0x180] sm:$0xff]
    %v2531 = vld [vmem:[#allocation9 + $0x188] sm:$0xf]
    %v2532 = vld [vmem:[#allocation9 + $0x18c] sm:$0xff]
    %v2533 = vld [vmem:[#allocation9 + $0x194] sm:$0xf]
    %v2534 = vld [vmem:[#allocation9 + $0x198] sm:$0xff]
    %v2535 = vld [vmem:[#allocation9 + $0x1a0] sm:$0xf]
    %v2536 = vld [vmem:[#allocation9 + $0x1a4] sm:$0xff]
    %v2537 = vld [vmem:[#allocation9 + $0x1ac] sm:$0xf]
    %v2538 = vld [vmem:[#allocation9 + $0x1b0] sm:$0xff]
    %v2539 = vld [vmem:[#allocation9 + $0x1b8] sm:$0xf]
    %v2540 = vld [vmem:[#allocation9 + $0x1bc] sm:$0xff]
    %v2541 = vld [vmem:[#allocation9 + $0x1c4] sm:$0xf]
    %v2542 = vld [vmem:[#allocation9 + $0x1c8] sm:$0xff]
    %v2543 = vld [vmem:[#allocation9 + $0x1d0] sm:$0xf]
    %v2544 = vld [vmem:[#allocation9 + $0x1d4] sm:$0xff]
    %v2545 = vld [vmem:[#allocation9 + $0x1dc] sm:$0xf]
    %v2546 = vld [vmem:[#allocation9 + $0x1e0] sm:$0xff]
    %v2547 = vld [vmem:[#allocation9 + $0x1e8] sm:$0xf]
    %v2548 = vld [vmem:[#allocation9 + $0x1ec] sm:$0xff]
    %v2549 = vld [vmem:[#allocation9 + $0x1f4] sm:$0xf]
    %v2550 = vld [vmem:[#allocation9 + $0x1f8] sm:$0xff]
    %v2551 = vld [vmem:[#allocation9 + $0x200] sm:$0xf]
    %v2552 = vld [vmem:[#allocation9 + $0x204] sm:$0xff]
    %v2553 = vld [vmem:[#allocation9 + $0x20c] sm:$0xf]
    %v2554 = vld [vmem:[#allocation9 + $0x210] sm:$0xff]
    %v2555 = vld [vmem:[#allocation9 + $0x218] sm:$0xf]
    %v2556 = vld [vmem:[#allocation9 + $0x21c] sm:$0xff]
    %v2557 = vld [vmem:[#allocation9 + $0x224] sm:$0xf]
    %v2558 = vld [vmem:[#allocation9 + $0x228] sm:$0xff]
    %v2559 = vld [vmem:[#allocation9 + $0x230] sm:$0xf]
    %v2560 = vld [vmem:[#allocation9 + $0x234] sm:$0xff]
    %v2561 = vld [vmem:[#allocation9 + $0x23c] sm:$0xf]
    %v2562 = vld [vmem:[#allocation9 + $0x240] sm:$0xff]
    %v2563 = vld [vmem:[#allocation9 + $0x248] sm:$0xf]
    %v2564 = vld [vmem:[#allocation9 + $0x24c] sm:$0xff]
    %v2565 = vld [vmem:[#allocation9 + $0x254] sm:$0xf]
    %v2566 = vld [vmem:[#allocation9 + $0x258] sm:$0xff]
    %v2567 = vld [vmem:[#allocation9 + $0x260] sm:$0xf]
    %v2568 = vld [vmem:[#allocation9 + $0x264] sm:$0xff]
    %v2569 = vld [vmem:[#allocation9 + $0x26c] sm:$0xf]
    %v2570 = vld [vmem:[#allocation9 + $0x270] sm:$0xff]
    %v2571 = vld [vmem:[#allocation9 + $0x278] sm:$0xf]
    %v2572 = vld [vmem:[#allocation9 + $0x27c] sm:$0xff]
    %v2573 = vld [vmem:[#allocation9 + $0x284] sm:$0xf]
    %v2574 = vld [vmem:[#allocation9 + $0x288] sm:$0xff]
    %v2575 = vld [vmem:[#allocation9 + $0x290] sm:$0xf]
    %v2576 = vld [vmem:[#allocation9 + $0x294] sm:$0xff]
    %v2577 = vld [vmem:[#allocation9 + $0x29c] sm:$0xf]
    %v2578 = vld [vmem:[#allocation9 + $0x2a0] sm:$0xff]
    %v2579 = vld [vmem:[#allocation9 + $0x2a8] sm:$0xf]
    %v2580 = vld [vmem:[#allocation9 + $0x2ac] sm:$0xff]
    %v2581 = vld [vmem:[#allocation9 + $0x2b4] sm:$0xf]
    %v2582 = vld [vmem:[#allocation9 + $0x2b8] sm:$0xff]
    %v2583 = vld [vmem:[#allocation9 + $0x2c0] sm:$0xf]
    %v2584 = vld [vmem:[#allocation9 + $0x2c4] sm:$0xff]
    %v2585 = vld [vmem:[#allocation9 + $0x2cc] sm:$0xf]
    %v2586 = vld [vmem:[#allocation9 + $0x2d0] sm:$0xff]
    %v2587 = vld [vmem:[#allocation9 + $0x2d8] sm:$0xf]
    %v2588 = vld [vmem:[#allocation9 + $0x2dc] sm:$0xff]
    %v2589 = vld [vmem:[#allocation9 + $0x2e4] sm:$0xf]
    %v2590 = vld [vmem:[#allocation9 + $0x2e8] sm:$0xff]
    %v2591 = vld [vmem:[#allocation9 + $0x2f0] sm:$0xf]
    %v2592 = vld [vmem:[#allocation9 + $0x2f4] sm:$0xff]
    %v2593 = vld [vmem:[#allocation9 + $0x2fc] sm:$0xf]
    %v2594 = vld [vmem:[#allocation9 + $0x300] sm:$0xff]
    %v2595 = vld [vmem:[#allocation9 + $0x308] sm:$0xf]
    %v2596 = vld [vmem:[#allocation9 + $0x30c] sm:$0xff]
    %v2597 = vld [vmem:[#allocation9 + $0x314] sm:$0xf]
    %v2598 = vld [vmem:[#allocation9 + $0x318] sm:$0xff]
    %v2599 = vld [vmem:[#allocation9 + $0x320] sm:$0xf]
    %v2600 = vld [vmem:[#allocation9 + $0x324] sm:$0xff]
    %v2601 = vld [vmem:[#allocation9 + $0x32c] sm:$0xf]
    %v2602 = vld [vmem:[#allocation9 + $0x330] sm:$0xff]
    %v2603 = vld [vmem:[#allocation9 + $0x338] sm:$0xf]
    %v2604 = vld [vmem:[#allocation9 + $0x33c] sm:$0xff]
    %v2605 = vld [vmem:[#allocation9 + $0x344] sm:$0xf]
    %v2606 = vld [vmem:[#allocation9 + $0x348] sm:$0xff]
    %v2607 = vld [vmem:[#allocation9 + $0x350] sm:$0xf]
    %v2608 = vld [vmem:[#allocation9 + $0x354] sm:$0xff]
    %v2609 = vld [vmem:[#allocation9 + $0x35c] sm:$0xf]
    %v2610 = vld [vmem:[#allocation9 + $0x360] sm:$0xff]
    %v2611 = vld [vmem:[#allocation9 + $0x368] sm:$0xf]
    %v2612 = vld [vmem:[#allocation9 + $0x36c] sm:$0xff]
    %v2613 = vld [vmem:[#allocation9 + $0x374] sm:$0xf]
    %v2614 = vld [vmem:[#allocation9 + $0x378] sm:$0xff]
    %v2615 = vld [vmem:[#allocation9 + $0x380] sm:$0xf]
    %v2616 = vld [vmem:[#allocation9 + $0x384] sm:$0xff]
    %v2617 = vld [vmem:[#allocation9 + $0x38c] sm:$0xf]
    %v2618 = vld [vmem:[#allocation9 + $0x390] sm:$0xff]
    %v2619 = vld [vmem:[#allocation9 + $0x398] sm:$0xf]
    %v2620 = vld [vmem:[#allocation9 + $0x39c] sm:$0xff]
    %v2621 = vld [vmem:[#allocation9 + $0x3a4] sm:$0xf]
    %v2622 = vld [vmem:[#allocation9 + $0x3a8] sm:$0xff]
    %v2623 = vld [vmem:[#allocation9 + $0x3b0] sm:$0xf]
    %v2624 = vld [vmem:[#allocation9 + $0x3b4] sm:$0xff]
    %v2625 = vld [vmem:[#allocation9 + $0x3bc] sm:$0xf]
    %v2626 = vld [vmem:[#allocation9 + $0x3c0] sm:$0xff]
    %v2627 = vld [vmem:[#allocation9 + $0x3c8] sm:$0xf]
    %v2628 = vld [vmem:[#allocation9 + $0x3cc] sm:$0xff]
    %v2629 = vld [vmem:[#allocation9 + $0x3d4] sm:$0xf]
    %v2630 = vld [vmem:[#allocation9 + $0x3d8] sm:$0xff]
    %v2631 = vld [vmem:[#allocation9 + $0x3e0] sm:$0xf]
    %v2632 = vld [vmem:[#allocation9 + $0x3e4] sm:$0xff]
    %v2633 = vld [vmem:[#allocation9 + $0x3ec] sm:$0xf]
    %v2634 = vld [vmem:[#allocation9 + $0x3f0] sm:$0xff]
    %v2635 = vld [vmem:[#allocation9 + $0x3f8] sm:$0xf]
    %v2636 = vld [vmem:[#allocation9 + $0x3fc] sm:$0xff]
    %v2637 = vld [vmem:[#allocation9 + $0x404] sm:$0xf]
    %v2638 = vld [vmem:[#allocation9 + $0x408] sm:$0xff]
    %v2639 = vld [vmem:[#allocation9 + $0x410] sm:$0xf]
    %v2640 = vld [vmem:[#allocation9 + $0x414] sm:$0xff]
    %v2641 = vld [vmem:[#allocation9 + $0x41c] sm:$0xf]
    %v2642 = vld [vmem:[#allocation9 + $0x420] sm:$0xff]
    %v2643 = vld [vmem:[#allocation9 + $0x428] sm:$0xf]
    %v2644 = vld [vmem:[#allocation9 + $0x42c] sm:$0xff]
    %v2645 = vld [vmem:[#allocation9 + $0x434] sm:$0xf]
    %v2646 = vld [vmem:[#allocation9 + $0x438] sm:$0xff]
    %v2647 = vld [vmem:[#allocation9 + $0x440] sm:$0xf]
    %v2648 = vld [vmem:[#allocation9 + $0x444] sm:$0xff]
    %v2649 = vld [vmem:[#allocation9 + $0x44c] sm:$0xf]
    %v2650 = vld [vmem:[#allocation9 + $0x450] sm:$0xff]
    %v2651 = vld [vmem:[#allocation9 + $0x458] sm:$0xf]
    %v2652 = vld [vmem:[#allocation9 + $0x45c] sm:$0xff]
    %v2653 = vld [vmem:[#allocation9 + $0x464] sm:$0xf]
    %v2654 = vld [vmem:[#allocation9 + $0x468] sm:$0xff]
    %v2655 = vld [vmem:[#allocation9 + $0x470] sm:$0xf]
    %v2656 = vld [vmem:[#allocation9 + $0x474] sm:$0xff]
    %v2657 = vld [vmem:[#allocation9 + $0x47c] sm:$0xf]
    %v2658 = vld [vmem:[#allocation9 + $0x480] sm:$0xff]
    %v2659 = vld [vmem:[#allocation9 + $0x488] sm:$0xf]
    %v2660 = vld [vmem:[#allocation9 + $0x48c] sm:$0xff]
    %v2661 = vld [vmem:[#allocation9 + $0x494] sm:$0xf]
    %v2662 = vld [vmem:[#allocation9 + $0x498] sm:$0xff]
    %v2663 = vld [vmem:[#allocation9 + $0x4a0] sm:$0xf]
    %v2664 = vld [vmem:[#allocation9 + $0x4a4] sm:$0xff]
    %v2665 = vld [vmem:[#allocation9 + $0x4ac] sm:$0xf]
    %v2666 = vld [vmem:[#allocation9 + $0x4b0] sm:$0xff]
    %v2667 = vld [vmem:[#allocation9 + $0x4b8] sm:$0xf]
    %v2668 = vld [vmem:[#allocation9 + $0x4bc] sm:$0xff]
    %v2669 = vld [vmem:[#allocation9 + $0x4c4] sm:$0xf]
    %v2670 = vld [vmem:[#allocation9 + $0x4c8] sm:$0xff]
    %v2671 = vld [vmem:[#allocation9 + $0x4d0] sm:$0xf]
    %v2672 = vld [vmem:[#allocation9 + $0x4d4] sm:$0xff]
    %v2673 = vld [vmem:[#allocation9 + $0x4dc] sm:$0xf]
    %v2674 = vld [vmem:[#allocation9 + $0x4e0] sm:$0xff]
    %v2675 = vld [vmem:[#allocation9 + $0x4e8] sm:$0xf]
    %v2676 = vld [vmem:[#allocation9 + $0x4ec] sm:$0xff]
    %v2677 = vld [vmem:[#allocation9 + $0x4f4] sm:$0xf]
    %v2678 = vld [vmem:[#allocation9 + $0x4f8] sm:$0xff]
    %v2679 = vld [vmem:[#allocation9 + $0x500] sm:$0xf]
    %v2680 = vld [vmem:[#allocation9 + $0x504] sm:$0xff]
    %v2681 = vld [vmem:[#allocation9 + $0x50c] sm:$0xf]
    %v2682 = vld [vmem:[#allocation9 + $0x510] sm:$0xff]
    %v2683 = vld [vmem:[#allocation9 + $0x518] sm:$0xf]
    %v2684 = vld [vmem:[#allocation9 + $0x51c] sm:$0xff]
    %v2685 = vld [vmem:[#allocation9 + $0x524] sm:$0xf]
    %v2686 = vld [vmem:[#allocation9 + $0x528] sm:$0xff]
    %v2687 = vld [vmem:[#allocation9 + $0x530] sm:$0xf]
    %v2688 = vld [vmem:[#allocation9 + $0x534] sm:$0xff]
    %v2689 = vld [vmem:[#allocation9 + $0x53c] sm:$0xf]
    %v2690 = vld [vmem:[#allocation9 + $0x540] sm:$0xff]
    %v2691 = vld [vmem:[#allocation9 + $0x548] sm:$0xf]
    %v2692 = vld [vmem:[#allocation9 + $0x54c] sm:$0xff]
    %v2693 = vld [vmem:[#allocation9 + $0x554] sm:$0xf]
    %v2694 = vld [vmem:[#allocation9 + $0x558] sm:$0xff]
    %v2695 = vld [vmem:[#allocation9 + $0x560] sm:$0xf]
    %v2696 = vld [vmem:[#allocation9 + $0x564] sm:$0xff]
    %v2697 = vld [vmem:[#allocation9 + $0x56c] sm:$0xf]
    %v2698 = vld [vmem:[#allocation9 + $0x570] sm:$0xff]
    %v2699 = vld [vmem:[#allocation9 + $0x578] sm:$0xf]
    %v2700 = vld [vmem:[#allocation9 + $0x57c] sm:$0xff]
    %v2701 = vld [vmem:[#allocation9 + $0x584] sm:$0xf]
    %v2702 = vld [vmem:[#allocation9 + $0x588] sm:$0xff]
    %v2703 = vld [vmem:[#allocation9 + $0x590] sm:$0xf]
    %v2704 = vld [vmem:[#allocation9 + $0x594] sm:$0xff]
    %v2705 = vld [vmem:[#allocation9 + $0x59c] sm:$0xf]
    %v2706 = vld [vmem:[#allocation9 + $0x5a0] sm:$0xff]
    %v2707 = vld [vmem:[#allocation9 + $0x5a8] sm:$0xf]
    %v2708 = vld [vmem:[#allocation9 + $0x5ac] sm:$0xff]
    %v2709 = vld [vmem:[#allocation9 + $0x5b4] sm:$0xf]
    %v2710 = vld [vmem:[#allocation9 + $0x5b8] sm:$0xff]
    %v2711 = vld [vmem:[#allocation9 + $0x5c0] sm:$0xf]
    %v2712 = vld [vmem:[#allocation9 + $0x5c4] sm:$0xff]
    %v2713 = vld [vmem:[#allocation9 + $0x5cc] sm:$0xf]
    %v2714 = vld [vmem:[#allocation9 + $0x5d0] sm:$0xff]
    %v2715 = vld [vmem:[#allocation9 + $0x5d8] sm:$0xf]
    %v2716 = vld [vmem:[#allocation9 + $0x5dc] sm:$0xff]
    %v2717 = vld [vmem:[#allocation9 + $0x5e4] sm:$0xf]
    %v2718 = vld [vmem:[#allocation9 + $0x5e8] sm:$0xff]
    %v2719 = vld [vmem:[#allocation9 + $0x5f0] sm:$0xf]
    %v2720 = vld [vmem:[#allocation9 + $0x5f4] sm:$0xff]
    %v2721 = vld [vmem:[#allocation9 + $0x5fc] sm:$0xf]
    %v2722 = vld [vmem:[#allocation9 + $0x600] sm:$0xff]
    %v2723 = vld [vmem:[#allocation9 + $0x608] sm:$0xf]
    %v2724 = vld [vmem:[#allocation9 + $0x60c] sm:$0xff]
    %v2725 = vld [vmem:[#allocation9 + $0x614] sm:$0xf]
    %v2726 = vld [vmem:[#allocation9 + $0x618] sm:$0xff]
    %v2727 = vld [vmem:[#allocation9 + $0x620] sm:$0xf]
    %v2728 = vld [vmem:[#allocation9 + $0x624] sm:$0xff]
    %v2729 = vld [vmem:[#allocation9 + $0x62c] sm:$0xf]
    %v2730 = vld [vmem:[#allocation9 + $0x630] sm:$0xff]
    %v2731 = vld [vmem:[#allocation9 + $0x638] sm:$0xf]
    %v2732 = vld [vmem:[#allocation9 + $0x63c] sm:$0xff]
    %v2733 = vld [vmem:[#allocation9 + $0x644] sm:$0xf]
    %v2734 = vld [vmem:[#allocation9 + $0x648] sm:$0xff]
    %v2735 = vld [vmem:[#allocation9 + $0x650] sm:$0xf]
    %v2736 = vld [vmem:[#allocation9 + $0x654] sm:$0xff]
    %v2737 = vld [vmem:[#allocation9 + $0x65c] sm:$0xf]
    %v2738 = vld [vmem:[#allocation9 + $0x660] sm:$0xff]
    %v2739 = vld [vmem:[#allocation9 + $0x668] sm:$0xf]
    %v2740 = vld [vmem:[#allocation9 + $0x66c] sm:$0xff]
    %v2741 = vld [vmem:[#allocation9 + $0x674] sm:$0xf]
    %v2742 = vld [vmem:[#allocation9 + $0x678] sm:$0xff]
    %v2743 = vld [vmem:[#allocation9 + $0x680] sm:$0xf]
    %v2744 = vld [vmem:[#allocation9 + $0x684] sm:$0xff]
    %v2745 = vld [vmem:[#allocation9 + $0x68c] sm:$0xf]
    %v2746 = vld [vmem:[#allocation9 + $0x690] sm:$0xff]
    %v2747 = vld [vmem:[#allocation9 + $0x698] sm:$0xf]
    %v2748 = vld [vmem:[#allocation9 + $0x69c] sm:$0xff]
    %v2749 = vld [vmem:[#allocation9 + $0x6a4] sm:$0xf]
    %v2750 = vld [vmem:[#allocation9 + $0x6a8] sm:$0xff]
    %v2751 = vld [vmem:[#allocation9 + $0x6b0] sm:$0xf]
    %v2752 = vld [vmem:[#allocation9 + $0x6b4] sm:$0xff]
    %v2753 = vld [vmem:[#allocation9 + $0x6bc] sm:$0xf]
    %v2754 = vld [vmem:[#allocation9 + $0x6c0] sm:$0xff]
    %v2755 = vld [vmem:[#allocation9 + $0x6c8] sm:$0xf]
    %v2756 = vld [vmem:[#allocation9 + $0x6cc] sm:$0xff]
    %v2757 = vld [vmem:[#allocation9 + $0x6d4] sm:$0xf]
    %v2758 = vld [vmem:[#allocation9 + $0x6d8] sm:$0xff]
    %v2759 = vld [vmem:[#allocation9 + $0x6e0] sm:$0xf]
    %v2760 = vld [vmem:[#allocation9 + $0x6e4] sm:$0xff]
    %v2761 = vld [vmem:[#allocation9 + $0x6ec] sm:$0xf]
    %v2762 = vld [vmem:[#allocation9 + $0x6f0] sm:$0xff]
    %v2763 = vld [vmem:[#allocation9 + $0x6f8] sm:$0xf]
    %v2764 = vld [vmem:[#allocation9 + $0x6fc] sm:$0xff]
    %v2765 = vld [vmem:[#allocation9 + $0x704] sm:$0xf]
    %v2766 = vld [vmem:[#allocation9 + $0x708] sm:$0xff]
    %v2767 = vld [vmem:[#allocation9 + $0x710] sm:$0xf]
    %v2768 = vld [vmem:[#allocation9 + $0x714] sm:$0xff]
    %v2769 = vld [vmem:[#allocation9 + $0x71c] sm:$0xf]
    %v2770 = vld [vmem:[#allocation9 + $0x720] sm:$0xff]
    %v2771 = vld [vmem:[#allocation9 + $0x728] sm:$0xf]
    %v2772 = vld [vmem:[#allocation9 + $0x72c] sm:$0xff]
    %v2773 = vld [vmem:[#allocation9 + $0x734] sm:$0xf]
    %v2774 = vld [vmem:[#allocation9 + $0x738] sm:$0xff]
    %v2775 = vld [vmem:[#allocation9 + $0x740] sm:$0xf]
    %v2776 = vld [vmem:[#allocation9 + $0x744] sm:$0xff]
    %v2777 = vld [vmem:[#allocation9 + $0x74c] sm:$0xf]
    %v2778 = vld [vmem:[#allocation9 + $0x750] sm:$0xff]
    %v2779 = vld [vmem:[#allocation9 + $0x758] sm:$0xf]
    %v2780 = vld [vmem:[#allocation9 + $0x75c] sm:$0xff]
    %v2781 = vld [vmem:[#allocation9 + $0x764] sm:$0xf]
    %v2782 = vld [vmem:[#allocation9 + $0x768] sm:$0xff]
    %v2783 = vld [vmem:[#allocation9 + $0x770] sm:$0xf]
    %v2784 = vld [vmem:[#allocation9 + $0x774] sm:$0xff]
    %v2785 = vld [vmem:[#allocation9 + $0x77c] sm:$0xf]
    %v2786 = vld [vmem:[#allocation9 + $0x780] sm:$0xff]
    %v2787 = vld [vmem:[#allocation9 + $0x788] sm:$0xf]
    %v2788 = vld [vmem:[#allocation9 + $0x78c] sm:$0xff]
    %v2789 = vld [vmem:[#allocation9 + $0x794] sm:$0xf]
    %v2790 = vld [vmem:[#allocation9 + $0x798] sm:$0xff]
    %v2791 = vld [vmem:[#allocation9 + $0x7a0] sm:$0xf]
    %v2792 = vld [vmem:[#allocation9 + $0x7a4] sm:$0xff]
    %v2793 = vld [vmem:[#allocation9 + $0x7ac] sm:$0xf]
    %v2794 = vld [vmem:[#allocation9 + $0x7b0] sm:$0xff]
    %v2795 = vld [vmem:[#allocation9 + $0x7b8] sm:$0xf]
    %v2796 = vld [vmem:[#allocation9 + $0x7bc] sm:$0xff]
    %v2797 = vld [vmem:[#allocation9 + $0x7c4] sm:$0xf]
    %v2798 = vld [vmem:[#allocation9 + $0x7c8] sm:$0xff]
    %v2799 = vld [vmem:[#allocation9 + $0x7d0] sm:$0xf]
    %v2800 = vld [vmem:[#allocation9 + $0x7d4] sm:$0xff]
    %v2801 = vld [vmem:[#allocation9 + $0x7dc] sm:$0xf]
    %v2802 = vld [vmem:[#allocation9 + $0x7e0] sm:$0xff]
    %v2803 = vld [vmem:[#allocation9 + $0x7e8] sm:$0xf]
    %v2804 = vld [vmem:[#allocation9 + $0x7ec] sm:$0xff]
    %v2805 = vld [vmem:[#allocation9 + $0x7f4] sm:$0xf]
    %v2806 = vld [vmem:[#allocation9 + $0x7f8] sm:$0xff]
    %v2807 = vld [vmem:[#allocation9 + $0x800] sm:$0xf]
    %v2808 = vld [vmem:[#allocation9 + $0x804] sm:$0xff]
    %v2809 = vld [vmem:[#allocation9 + $0x80c] sm:$0xf]
    %v2810 = vld [vmem:[#allocation9 + $0x810] sm:$0xff]
    %v2811 = vld [vmem:[#allocation9 + $0x818] sm:$0xf]
    %v2812 = vld [vmem:[#allocation9 + $0x81c] sm:$0xff]
    %v2813 = vld [vmem:[#allocation9 + $0x824] sm:$0xf]
    %v2814 = vld [vmem:[#allocation9 + $0x828] sm:$0xff]
    %v2815 = vld [vmem:[#allocation9 + $0x830] sm:$0xf]
    %v2816 = vld [vmem:[#allocation9 + $0x834] sm:$0xff]
    %v2817 = vld [vmem:[#allocation9 + $0x83c] sm:$0xf]
    %v2818 = vld [vmem:[#allocation9 + $0x840] sm:$0xff]
    %v2819 = vld [vmem:[#allocation9 + $0x848] sm:$0xf]
    %v2820 = vld [vmem:[#allocation9 + $0x84c] sm:$0xff]
    %v2821 = vld [vmem:[#allocation9 + $0x854] sm:$0xf]
    %v2822 = vld [vmem:[#allocation9 + $0x858] sm:$0xff]
    %v2823 = vld [vmem:[#allocation9 + $0x860] sm:$0xf]
    %v2824 = vld [vmem:[#allocation9 + $0x864] sm:$0xff]
    %v2825 = vld [vmem:[#allocation9 + $0x86c] sm:$0xf]
    %v2826 = vld [vmem:[#allocation9 + $0x870] sm:$0xff]
    %v2827 = vld [vmem:[#allocation9 + $0x878] sm:$0xf]
    %v2828 = vld [vmem:[#allocation9 + $0x87c] sm:$0xff]
    %v2829 = vld [vmem:[#allocation9 + $0x884] sm:$0xf]
    %v2830 = vld [vmem:[#allocation9 + $0x888] sm:$0xff]
    %v2831 = vld [vmem:[#allocation9 + $0x890] sm:$0xf]
    %v2832 = vld [vmem:[#allocation9 + $0x894] sm:$0xff]
    %v2833 = vld [vmem:[#allocation9 + $0x89c] sm:$0xf]
    %v2834 = vld [vmem:[#allocation9 + $0x8a0] sm:$0xff]
    %v2835 = vld [vmem:[#allocation9 + $0x8a8] sm:$0xf]
    %v2836 = vld [vmem:[#allocation9 + $0x8ac] sm:$0xff]
    %v2837 = vld [vmem:[#allocation9 + $0x8b4] sm:$0xf]
    %v2838 = vld [vmem:[#allocation9 + $0x8b8] sm:$0xff]
    %v2839 = vld [vmem:[#allocation9 + $0x8c0] sm:$0xf]
    %v2840 = vld [vmem:[#allocation9 + $0x8c4] sm:$0xff]
    %v2841 = vld [vmem:[#allocation9 + $0x8cc] sm:$0xf]
    %v2842 = vld [vmem:[#allocation9 + $0x8d0] sm:$0xff]
    %v2843 = vld [vmem:[#allocation9 + $0x8d8] sm:$0xf]
    %v2844 = vld [vmem:[#allocation9 + $0x8dc] sm:$0xff]
    %v2845 = vld [vmem:[#allocation9 + $0x8e4] sm:$0xf]
    %v2846 = vld [vmem:[#allocation9 + $0x8e8] sm:$0xff]
    %v2847 = vld [vmem:[#allocation9 + $0x8f0] sm:$0xf]
    %v2848 = vld [vmem:[#allocation9 + $0x8f4] sm:$0xff]
    %v2849 = vld [vmem:[#allocation9 + $0x8fc] sm:$0xf]
    %v3234 = vunpack.c.l.b16 %v2466
    %v3235 = vunpack.c.h.b16 %v2466
    %v3236 = vunpack.c.l.b16 %v2467
    %v3237 = vunpack.c.l.b16 %v2468
    %v3238 = vunpack.c.h.b16 %v2468
    %v3239 = vunpack.c.l.b16 %v2469
    %v3240 = vunpack.c.l.b16 %v2470
    %v3241 = vunpack.c.h.b16 %v2470
    %v3242 = vunpack.c.l.b16 %v2471
    %v3243 = vunpack.c.l.b16 %v2472
    %v3244 = vunpack.c.h.b16 %v2472
    %v3245 = vunpack.c.l.b16 %v2473
    %v3246 = vunpack.c.l.b16 %v2474
    %v3247 = vunpack.c.h.b16 %v2474
    %v3248 = vunpack.c.l.b16 %v2475
    %v3249 = vunpack.c.l.b16 %v2476
    %v3250 = vunpack.c.h.b16 %v2476
    %v3251 = vunpack.c.l.b16 %v2477
    %v3252 = vunpack.c.l.b16 %v2478
    %v3253 = vunpack.c.h.b16 %v2478
    %v3254 = vunpack.c.l.b16 %v2479
    %v3255 = vunpack.c.l.b16 %v2480
    %v3256 = vunpack.c.h.b16 %v2480
    %v3257 = vunpack.c.l.b16 %v2481
    %v3258 = vunpack.c.l.b16 %v2482
    %v3259 = vunpack.c.h.b16 %v2482
    %v3260 = vunpack.c.l.b16 %v2483
    %v3261 = vunpack.c.l.b16 %v2484
    %v3262 = vunpack.c.h.b16 %v2484
    %v3263 = vunpack.c.l.b16 %v2485
    %v3264 = vunpack.c.l.b16 %v2486
    %v3265 = vunpack.c.h.b16 %v2486
    %v3266 = vunpack.c.l.b16 %v2487
    %v3267 = vunpack.c.l.b16 %v2488
    %v3268 = vunpack.c.h.b16 %v2488
    %v3269 = vunpack.c.l.b16 %v2489
    %v3270 = vunpack.c.l.b16 %v2490
    %v3271 = vunpack.c.h.b16 %v2490
    %v3272 = vunpack.c.l.b16 %v2491
    %v3273 = vunpack.c.l.b16 %v2492
    %v3274 = vunpack.c.h.b16 %v2492
    %v3275 = vunpack.c.l.b16 %v2493
    %v3276 = vunpack.c.l.b16 %v2494
    %v3277 = vunpack.c.h.b16 %v2494
    %v3278 = vunpack.c.l.b16 %v2495
    %v3279 = vunpack.c.l.b16 %v2496
    %v3280 = vunpack.c.h.b16 %v2496
    %v3281 = vunpack.c.l.b16 %v2497
    %v3282 = vunpack.c.l.b16 %v2498
    %v3283 = vunpack.c.h.b16 %v2498
    %v3284 = vunpack.c.l.b16 %v2499
    %v3285 = vunpack.c.l.b16 %v2500
    %v3286 = vunpack.c.h.b16 %v2500
    %v3287 = vunpack.c.l.b16 %v2501
    %v3288 = vunpack.c.l.b16 %v2502
    %v3289 = vunpack.c.h.b16 %v2502
    %v3290 = vunpack.c.l.b16 %v2503
    %v3291 = vunpack.c.l.b16 %v2504
    %v3292 = vunpack.c.h.b16 %v2504
    %v3293 = vunpack.c.l.b16 %v2505
    %v3294 = vunpack.c.l.b16 %v2506
    %v3295 = vunpack.c.h.b16 %v2506
    %v3296 = vunpack.c.l.b16 %v2507
    %v3297 = vunpack.c.l.b16 %v2508
    %v3298 = vunpack.c.h.b16 %v2508
    %v3299 = vunpack.c.l.b16 %v2509
    %v3300 = vunpack.c.l.b16 %v2510
    %v3301 = vunpack.c.h.b16 %v2510
    %v3302 = vunpack.c.l.b16 %v2511
    %v3303 = vunpack.c.l.b16 %v2512
    %v3304 = vunpack.c.h.b16 %v2512
    %v3305 = vunpack.c.l.b16 %v2513
    %v3306 = vunpack.c.l.b16 %v2514
    %v3307 = vunpack.c.h.b16 %v2514
    %v3308 = vunpack.c.l.b16 %v2515
    %v3309 = vunpack.c.l.b16 %v2516
    %v3310 = vunpack.c.h.b16 %v2516
    %v3311 = vunpack.c.l.b16 %v2517
    %v3312 = vunpack.c.l.b16 %v2518
    %v3313 = vunpack.c.h.b16 %v2518
    %v3314 = vunpack.c.l.b16 %v2519
    %v3315 = vunpack.c.l.b16 %v2520
    %v3316 = vunpack.c.h.b16 %v2520
    %v3317 = vunpack.c.l.b16 %v2521
    %v3318 = vunpack.c.l.b16 %v2522
    %v3319 = vunpack.c.h.b16 %v2522
    %v3320 = vunpack.c.l.b16 %v2523
    %v3321 = vunpack.c.l.b16 %v2524
    %v3322 = vunpack.c.h.b16 %v2524
    %v3323 = vunpack.c.l.b16 %v2525
    %v3324 = vunpack.c.l.b16 %v2526
    %v3325 = vunpack.c.h.b16 %v2526
    %v3326 = vunpack.c.l.b16 %v2527
    %v3327 = vunpack.c.l.b16 %v2528
    %v3328 = vunpack.c.h.b16 %v2528
    %v3329 = vunpack.c.l.b16 %v2529
    %v3330 = vunpack.c.l.b16 %v2530
    %v3331 = vunpack.c.h.b16 %v2530
    %v3332 = vunpack.c.l.b16 %v2531
    %v3333 = vunpack.c.l.b16 %v2532
    %v3334 = vunpack.c.h.b16 %v2532
    %v3335 = vunpack.c.l.b16 %v2533
    %v3336 = vunpack.c.l.b16 %v2534
    %v3337 = vunpack.c.h.b16 %v2534
    %v3338 = vunpack.c.l.b16 %v2535
    %v3339 = vunpack.c.l.b16 %v2536
    %v3340 = vunpack.c.h.b16 %v2536
    %v3341 = vunpack.c.l.b16 %v2537
    %v3342 = vunpack.c.l.b16 %v2538
    %v3343 = vunpack.c.h.b16 %v2538
    %v3344 = vunpack.c.l.b16 %v2539
    %v3345 = vunpack.c.l.b16 %v2540
    %v3346 = vunpack.c.h.b16 %v2540
    %v3347 = vunpack.c.l.b16 %v2541
    %v3348 = vunpack.c.l.b16 %v2542
    %v3349 = vunpack.c.h.b16 %v2542
    %v3350 = vunpack.c.l.b16 %v2543
    %v3351 = vunpack.c.l.b16 %v2544
    %v3352 = vunpack.c.h.b16 %v2544
    %v3353 = vunpack.c.l.b16 %v2545
    %v3354 = vunpack.c.l.b16 %v2546
    %v3355 = vunpack.c.h.b16 %v2546
    %v3356 = vunpack.c.l.b16 %v2547
    %v3357 = vunpack.c.l.b16 %v2548
    %v3358 = vunpack.c.h.b16 %v2548
    %v3359 = vunpack.c.l.b16 %v2549
    %v3360 = vunpack.c.l.b16 %v2550
    %v3361 = vunpack.c.h.b16 %v2550
    %v3362 = vunpack.c.l.b16 %v2551
    %v3363 = vunpack.c.l.b16 %v2552
    %v3364 = vunpack.c.h.b16 %v2552
    %v3365 = vunpack.c.l.b16 %v2553
    %v3366 = vunpack.c.l.b16 %v2554
    %v3367 = vunpack.c.h.b16 %v2554
    %v3368 = vunpack.c.l.b16 %v2555
    %v3369 = vunpack.c.l.b16 %v2556
    %v3370 = vunpack.c.h.b16 %v2556
    %v3371 = vunpack.c.l.b16 %v2557
    %v3372 = vunpack.c.l.b16 %v2558
    %v3373 = vunpack.c.h.b16 %v2558
    %v3374 = vunpack.c.l.b16 %v2559
    %v3375 = vunpack.c.l.b16 %v2560
    %v3376 = vunpack.c.h.b16 %v2560
    %v3377 = vunpack.c.l.b16 %v2561
    %v3378 = vunpack.c.l.b16 %v2562
    %v3379 = vunpack.c.h.b16 %v2562
    %v3380 = vunpack.c.l.b16 %v2563
    %v3381 = vunpack.c.l.b16 %v2564
    %v3382 = vunpack.c.h.b16 %v2564
    %v3383 = vunpack.c.l.b16 %v2565
    %v3384 = vunpack.c.l.b16 %v2566
    %v3385 = vunpack.c.h.b16 %v2566
    %v3386 = vunpack.c.l.b16 %v2567
    %v3387 = vunpack.c.l.b16 %v2568
    %v3388 = vunpack.c.h.b16 %v2568
    %v3389 = vunpack.c.l.b16 %v2569
    %v3390 = vunpack.c.l.b16 %v2570
    %v3391 = vunpack.c.h.b16 %v2570
    %v3392 = vunpack.c.l.b16 %v2571
    %v3393 = vunpack.c.l.b16 %v2572
    %v3394 = vunpack.c.h.b16 %v2572
    %v3395 = vunpack.c.l.b16 %v2573
    %v3396 = vunpack.c.l.b16 %v2574
    %v3397 = vunpack.c.h.b16 %v2574
    %v3398 = vunpack.c.l.b16 %v2575
    %v3399 = vunpack.c.l.b16 %v2576
    %v3400 = vunpack.c.h.b16 %v2576
    %v3401 = vunpack.c.l.b16 %v2577
    %v3402 = vunpack.c.l.b16 %v2578
    %v3403 = vunpack.c.h.b16 %v2578
    %v3404 = vunpack.c.l.b16 %v2579
    %v3405 = vunpack.c.l.b16 %v2580
    %v3406 = vunpack.c.h.b16 %v2580
    %v3407 = vunpack.c.l.b16 %v2581
    %v3408 = vunpack.c.l.b16 %v2582
    %v3409 = vunpack.c.h.b16 %v2582
    %v3410 = vunpack.c.l.b16 %v2583
    %v3411 = vunpack.c.l.b16 %v2584
    %v3412 = vunpack.c.h.b16 %v2584
    %v3413 = vunpack.c.l.b16 %v2585
    %v3414 = vunpack.c.l.b16 %v2586
    %v3415 = vunpack.c.h.b16 %v2586
    %v3416 = vunpack.c.l.b16 %v2587
    %v3417 = vunpack.c.l.b16 %v2588
    %v3418 = vunpack.c.h.b16 %v2588
    %v3419 = vunpack.c.l.b16 %v2589
    %v3420 = vunpack.c.l.b16 %v2590
    %v3421 = vunpack.c.h.b16 %v2590
    %v3422 = vunpack.c.l.b16 %v2591
    %v3423 = vunpack.c.l.b16 %v2592
    %v3424 = vunpack.c.h.b16 %v2592
    %v3425 = vunpack.c.l.b16 %v2593
    %v3426 = vunpack.c.l.b16 %v2594
    %v3427 = vunpack.c.h.b16 %v2594
    %v3428 = vunpack.c.l.b16 %v2595
    %v3429 = vunpack.c.l.b16 %v2596
    %v3430 = vunpack.c.h.b16 %v2596
    %v3431 = vunpack.c.l.b16 %v2597
    %v3432 = vunpack.c.l.b16 %v2598
    %v3433 = vunpack.c.h.b16 %v2598
    %v3434 = vunpack.c.l.b16 %v2599
    %v3435 = vunpack.c.l.b16 %v2600
    %v3436 = vunpack.c.h.b16 %v2600
    %v3437 = vunpack.c.l.b16 %v2601
    %v3438 = vunpack.c.l.b16 %v2602
    %v3439 = vunpack.c.h.b16 %v2602
    %v3440 = vunpack.c.l.b16 %v2603
    %v3441 = vunpack.c.l.b16 %v2604
    %v3442 = vunpack.c.h.b16 %v2604
    %v3443 = vunpack.c.l.b16 %v2605
    %v3444 = vunpack.c.l.b16 %v2606
    %v3445 = vunpack.c.h.b16 %v2606
    %v3446 = vunpack.c.l.b16 %v2607
    %v3447 = vunpack.c.l.b16 %v2608
    %v3448 = vunpack.c.h.b16 %v2608
    %v3449 = vunpack.c.l.b16 %v2609
    %v3450 = vunpack.c.l.b16 %v2610
    %v3451 = vunpack.c.h.b16 %v2610
    %v3452 = vunpack.c.l.b16 %v2611
    %v3453 = vunpack.c.l.b16 %v2612
    %v3454 = vunpack.c.h.b16 %v2612
    %v3455 = vunpack.c.l.b16 %v2613
    %v3456 = vunpack.c.l.b16 %v2614
    %v3457 = vunpack.c.h.b16 %v2614
    %v3458 = vunpack.c.l.b16 %v2615
    %v3459 = vunpack.c.l.b16 %v2616
    %v3460 = vunpack.c.h.b16 %v2616
    %v3461 = vunpack.c.l.b16 %v2617
    %v3462 = vunpack.c.l.b16 %v2618
    %v3463 = vunpack.c.h.b16 %v2618
    %v3464 = vunpack.c.l.b16 %v2619
    %v3465 = vunpack.c.l.b16 %v2620
    %v3466 = vunpack.c.h.b16 %v2620
    %v3467 = vunpack.c.l.b16 %v2621
    %v3468 = vunpack.c.l.b16 %v2622
    %v3469 = vunpack.c.h.b16 %v2622
    %v3470 = vunpack.c.l.b16 %v2623
    %v3471 = vunpack.c.l.b16 %v2624
    %v3472 = vunpack.c.h.b16 %v2624
    %v3473 = vunpack.c.l.b16 %v2625
    %v3474 = vunpack.c.l.b16 %v2626
    %v3475 = vunpack.c.h.b16 %v2626
    %v3476 = vunpack.c.l.b16 %v2627
    %v3477 = vunpack.c.l.b16 %v2628
    %v3478 = vunpack.c.h.b16 %v2628
    %v3479 = vunpack.c.l.b16 %v2629
    %v3480 = vunpack.c.l.b16 %v2630
    %v3481 = vunpack.c.h.b16 %v2630
    %v3482 = vunpack.c.l.b16 %v2631
    %v3483 = vunpack.c.l.b16 %v2632
    %v3484 = vunpack.c.h.b16 %v2632
    %v3485 = vunpack.c.l.b16 %v2633
    %v3486 = vunpack.c.l.b16 %v2634
    %v3487 = vunpack.c.h.b16 %v2634
    %v3488 = vunpack.c.l.b16 %v2635
    %v3489 = vunpack.c.l.b16 %v2636
    %v3490 = vunpack.c.h.b16 %v2636
    %v3491 = vunpack.c.l.b16 %v2637
    %v3492 = vunpack.c.l.b16 %v2638
    %v3493 = vunpack.c.h.b16 %v2638
    %v3494 = vunpack.c.l.b16 %v2639
    %v3495 = vunpack.c.l.b16 %v2640
    %v3496 = vunpack.c.h.b16 %v2640
    %v3497 = vunpack.c.l.b16 %v2641
    %v3498 = vunpack.c.l.b16 %v2642
    %v3499 = vunpack.c.h.b16 %v2642
    %v3500 = vunpack.c.l.b16 %v2643
    %v3501 = vunpack.c.l.b16 %v2644
    %v3502 = vunpack.c.h.b16 %v2644
    %v3503 = vunpack.c.l.b16 %v2645
    %v3504 = vunpack.c.l.b16 %v2646
    %v3505 = vunpack.c.h.b16 %v2646
    %v3506 = vunpack.c.l.b16 %v2647
    %v3507 = vunpack.c.l.b16 %v2648
    %v3508 = vunpack.c.h.b16 %v2648
    %v3509 = vunpack.c.l.b16 %v2649
    %v3510 = vunpack.c.l.b16 %v2650
    %v3511 = vunpack.c.h.b16 %v2650
    %v3512 = vunpack.c.l.b16 %v2651
    %v3513 = vunpack.c.l.b16 %v2652
    %v3514 = vunpack.c.h.b16 %v2652
    %v3515 = vunpack.c.l.b16 %v2653
    %v3516 = vunpack.c.l.b16 %v2654
    %v3517 = vunpack.c.h.b16 %v2654
    %v3518 = vunpack.c.l.b16 %v2655
    %v3519 = vunpack.c.l.b16 %v2656
    %v3520 = vunpack.c.h.b16 %v2656
    %v3521 = vunpack.c.l.b16 %v2657
    %v3522 = vunpack.c.l.b16 %v2658
    %v3523 = vunpack.c.h.b16 %v2658
    %v3524 = vunpack.c.l.b16 %v2659
    %v3525 = vunpack.c.l.b16 %v2660
    %v3526 = vunpack.c.h.b16 %v2660
    %v3527 = vunpack.c.l.b16 %v2661
    %v3528 = vunpack.c.l.b16 %v2662
    %v3529 = vunpack.c.h.b16 %v2662
    %v3530 = vunpack.c.l.b16 %v2663
    %v3531 = vunpack.c.l.b16 %v2664
    %v3532 = vunpack.c.h.b16 %v2664
    %v3533 = vunpack.c.l.b16 %v2665
    %v3534 = vunpack.c.l.b16 %v2666
    %v3535 = vunpack.c.h.b16 %v2666
    %v3536 = vunpack.c.l.b16 %v2667
    %v3537 = vunpack.c.l.b16 %v2668
    %v3538 = vunpack.c.h.b16 %v2668
    %v3539 = vunpack.c.l.b16 %v2669
    %v3540 = vunpack.c.l.b16 %v2670
    %v3541 = vunpack.c.h.b16 %v2670
    %v3542 = vunpack.c.l.b16 %v2671
    %v3543 = vunpack.c.l.b16 %v2672
    %v3544 = vunpack.c.h.b16 %v2672
    %v3545 = vunpack.c.l.b16 %v2673
    %v3546 = vunpack.c.l.b16 %v2674
    %v3547 = vunpack.c.h.b16 %v2674
    %v3548 = vunpack.c.l.b16 %v2675
    %v3549 = vunpack.c.l.b16 %v2676
    %v3550 = vunpack.c.h.b16 %v2676
    %v3551 = vunpack.c.l.b16 %v2677
    %v3552 = vunpack.c.l.b16 %v2678
    %v3553 = vunpack.c.h.b16 %v2678
    %v3554 = vunpack.c.l.b16 %v2679
    %v3555 = vunpack.c.l.b16 %v2680
    %v3556 = vunpack.c.h.b16 %v2680
    %v3557 = vunpack.c.l.b16 %v2681
    %v3558 = vunpack.c.l.b16 %v2682
    %v3559 = vunpack.c.h.b16 %v2682
    %v3560 = vunpack.c.l.b16 %v2683
    %v3561 = vunpack.c.l.b16 %v2684
    %v3562 = vunpack.c.h.b16 %v2684
    %v3563 = vunpack.c.l.b16 %v2685
    %v3564 = vunpack.c.l.b16 %v2686
    %v3565 = vunpack.c.h.b16 %v2686
    %v3566 = vunpack.c.l.b16 %v2687
    %v3567 = vunpack.c.l.b16 %v2688
    %v3568 = vunpack.c.h.b16 %v2688
    %v3569 = vunpack.c.l.b16 %v2689
    %v3570 = vunpack.c.l.b16 %v2690
    %v3571 = vunpack.c.h.b16 %v2690
    %v3572 = vunpack.c.l.b16 %v2691
    %v3573 = vunpack.c.l.b16 %v2692
    %v3574 = vunpack.c.h.b16 %v2692
    %v3575 = vunpack.c.l.b16 %v2693
    %v3576 = vunpack.c.l.b16 %v2694
    %v3577 = vunpack.c.h.b16 %v2694
    %v3578 = vunpack.c.l.b16 %v2695
    %v3579 = vunpack.c.l.b16 %v2696
    %v3580 = vunpack.c.h.b16 %v2696
    %v3581 = vunpack.c.l.b16 %v2697
    %v3582 = vunpack.c.l.b16 %v2698
    %v3583 = vunpack.c.h.b16 %v2698
    %v3584 = vunpack.c.l.b16 %v2699
    %v3585 = vunpack.c.l.b16 %v2700
    %v3586 = vunpack.c.h.b16 %v2700
    %v3587 = vunpack.c.l.b16 %v2701
    %v3588 = vunpack.c.l.b16 %v2702
    %v3589 = vunpack.c.h.b16 %v2702
    %v3590 = vunpack.c.l.b16 %v2703
    %v3591 = vunpack.c.l.b16 %v2704
    %v3592 = vunpack.c.h.b16 %v2704
    %v3593 = vunpack.c.l.b16 %v2705
    %v3594 = vunpack.c.l.b16 %v2706
    %v3595 = vunpack.c.h.b16 %v2706
    %v3596 = vunpack.c.l.b16 %v2707
    %v3597 = vunpack.c.l.b16 %v2708
    %v3598 = vunpack.c.h.b16 %v2708
    %v3599 = vunpack.c.l.b16 %v2709
    %v3600 = vunpack.c.l.b16 %v2710
    %v3601 = vunpack.c.h.b16 %v2710
    %v3602 = vunpack.c.l.b16 %v2711
    %v3603 = vunpack.c.l.b16 %v2712
    %v3604 = vunpack.c.h.b16 %v2712
    %v3605 = vunpack.c.l.b16 %v2713
    %v3606 = vunpack.c.l.b16 %v2714
    %v3607 = vunpack.c.h.b16 %v2714
    %v3608 = vunpack.c.l.b16 %v2715
    %v3609 = vunpack.c.l.b16 %v2716
    %v3610 = vunpack.c.h.b16 %v2716
    %v3611 = vunpack.c.l.b16 %v2717
    %v3612 = vunpack.c.l.b16 %v2718
    %v3613 = vunpack.c.h.b16 %v2718
    %v3614 = vunpack.c.l.b16 %v2719
    %v3615 = vunpack.c.l.b16 %v2720
    %v3616 = vunpack.c.h.b16 %v2720
    %v3617 = vunpack.c.l.b16 %v2721
    %v3618 = vunpack.c.l.b16 %v2722
    %v3619 = vunpack.c.h.b16 %v2722
    %v3620 = vunpack.c.l.b16 %v2723
    %v3621 = vunpack.c.l.b16 %v2724
    %v3622 = vunpack.c.h.b16 %v2724
    %v3623 = vunpack.c.l.b16 %v2725
    %v3624 = vunpack.c.l.b16 %v2726
    %v3625 = vunpack.c.h.b16 %v2726
    %v3626 = vunpack.c.l.b16 %v2727
    %v3627 = vunpack.c.l.b16 %v2728
    %v3628 = vunpack.c.h.b16 %v2728
    %v3629 = vunpack.c.l.b16 %v2729
    %v3630 = vunpack.c.l.b16 %v2730
    %v3631 = vunpack.c.h.b16 %v2730
    %v3632 = vunpack.c.l.b16 %v2731
    %v3633 = vunpack.c.l.b16 %v2732
    %v3634 = vunpack.c.h.b16 %v2732
    %v3635 = vunpack.c.l.b16 %v2733
    %v3636 = vunpack.c.l.b16 %v2734
    %v3637 = vunpack.c.h.b16 %v2734
    %v3638 = vunpack.c.l.b16 %v2735
    %v3639 = vunpack.c.l.b16 %v2736
    %v3640 = vunpack.c.h.b16 %v2736
    %v3641 = vunpack.c.l.b16 %v2737
    %v3642 = vunpack.c.l.b16 %v2738
    %v3643 = vunpack.c.h.b16 %v2738
    %v3644 = vunpack.c.l.b16 %v2739
    %v3645 = vunpack.c.l.b16 %v2740
    %v3646 = vunpack.c.h.b16 %v2740
    %v3647 = vunpack.c.l.b16 %v2741
    %v3648 = vunpack.c.l.b16 %v2742
    %v3649 = vunpack.c.h.b16 %v2742
    %v3650 = vunpack.c.l.b16 %v2743
    %v3651 = vunpack.c.l.b16 %v2744
    %v3652 = vunpack.c.h.b16 %v2744
    %v3653 = vunpack.c.l.b16 %v2745
    %v3654 = vunpack.c.l.b16 %v2746
    %v3655 = vunpack.c.h.b16 %v2746
    %v3656 = vunpack.c.l.b16 %v2747
    %v3657 = vunpack.c.l.b16 %v2748
    %v3658 = vunpack.c.h.b16 %v2748
    %v3659 = vunpack.c.l.b16 %v2749
    %v3660 = vunpack.c.l.b16 %v2750
    %v3661 = vunpack.c.h.b16 %v2750
    %v3662 = vunpack.c.l.b16 %v2751
    %v3663 = vunpack.c.l.b16 %v2752
    %v3664 = vunpack.c.h.b16 %v2752
    %v3665 = vunpack.c.l.b16 %v2753
    %v3666 = vunpack.c.l.b16 %v2754
    %v3667 = vunpack.c.h.b16 %v2754
    %v3668 = vunpack.c.l.b16 %v2755
    %v3669 = vunpack.c.l.b16 %v2756
    %v3670 = vunpack.c.h.b16 %v2756
    %v3671 = vunpack.c.l.b16 %v2757
    %v3672 = vunpack.c.l.b16 %v2758
    %v3673 = vunpack.c.h.b16 %v2758
    %v3674 = vunpack.c.l.b16 %v2759
    %v3675 = vunpack.c.l.b16 %v2760
    %v3676 = vunpack.c.h.b16 %v2760
    %v3677 = vunpack.c.l.b16 %v2761
    %v3678 = vunpack.c.l.b16 %v2762
    %v3679 = vunpack.c.h.b16 %v2762
    %v3680 = vunpack.c.l.b16 %v2763
    %v3681 = vunpack.c.l.b16 %v2764
    %v3682 = vunpack.c.h.b16 %v2764
    %v3683 = vunpack.c.l.b16 %v2765
    %v3684 = vunpack.c.l.b16 %v2766
    %v3685 = vunpack.c.h.b16 %v2766
    %v3686 = vunpack.c.l.b16 %v2767
    %v3687 = vunpack.c.l.b16 %v2768
    %v3688 = vunpack.c.h.b16 %v2768
    %v3689 = vunpack.c.l.b16 %v2769
    %v3690 = vunpack.c.l.b16 %v2770
    %v3691 = vunpack.c.h.b16 %v2770
    %v3692 = vunpack.c.l.b16 %v2771
    %v3693 = vunpack.c.l.b16 %v2772
    %v3694 = vunpack.c.h.b16 %v2772
    %v3695 = vunpack.c.l.b16 %v2773
    %v3696 = vunpack.c.l.b16 %v2774
    %v3697 = vunpack.c.h.b16 %v2774
    %v3698 = vunpack.c.l.b16 %v2775
    %v3699 = vunpack.c.l.b16 %v2776
    %v3700 = vunpack.c.h.b16 %v2776
    %v3701 = vunpack.c.l.b16 %v2777
    %v3702 = vunpack.c.l.b16 %v2778
    %v3703 = vunpack.c.h.b16 %v2778
    %v3704 = vunpack.c.l.b16 %v2779
    %v3705 = vunpack.c.l.b16 %v2780
    %v3706 = vunpack.c.h.b16 %v2780
    %v3707 = vunpack.c.l.b16 %v2781
    %v3708 = vunpack.c.l.b16 %v2782
    %v3709 = vunpack.c.h.b16 %v2782
    %v3710 = vunpack.c.l.b16 %v2783
    %v3711 = vunpack.c.l.b16 %v2784
    %v3712 = vunpack.c.h.b16 %v2784
    %v3713 = vunpack.c.l.b16 %v2785
    %v3714 = vunpack.c.l.b16 %v2786
    %v3715 = vunpack.c.h.b16 %v2786
    %v3716 = vunpack.c.l.b16 %v2787
    %v3717 = vunpack.c.l.b16 %v2788
    %v3718 = vunpack.c.h.b16 %v2788
    %v3719 = vunpack.c.l.b16 %v2789
    %v3720 = vunpack.c.l.b16 %v2790
    %v3721 = vunpack.c.h.b16 %v2790
    %v3722 = vunpack.c.l.b16 %v2791
    %v3723 = vunpack.c.l.b16 %v2792
    %v3724 = vunpack.c.h.b16 %v2792
    %v3725 = vunpack.c.l.b16 %v2793
    %v3726 = vunpack.c.l.b16 %v2794
    %v3727 = vunpack.c.h.b16 %v2794
    %v3728 = vunpack.c.l.b16 %v2795
    %v3729 = vunpack.c.l.b16 %v2796
    %v3730 = vunpack.c.h.b16 %v2796
    %v3731 = vunpack.c.l.b16 %v2797
    %v3732 = vunpack.c.l.b16 %v2798
    %v3733 = vunpack.c.h.b16 %v2798
    %v3734 = vunpack.c.l.b16 %v2799
    %v3735 = vunpack.c.l.b16 %v2800
    %v3736 = vunpack.c.h.b16 %v2800
    %v3737 = vunpack.c.l.b16 %v2801
    %v3738 = vunpack.c.l.b16 %v2802
    %v3739 = vunpack.c.h.b16 %v2802
    %v3740 = vunpack.c.l.b16 %v2803
    %v3741 = vunpack.c.l.b16 %v2804
    %v3742 = vunpack.c.h.b16 %v2804
    %v3743 = vunpack.c.l.b16 %v2805
    %v3744 = vunpack.c.l.b16 %v2806
    %v3745 = vunpack.c.h.b16 %v2806
    %v3746 = vunpack.c.l.b16 %v2807
    %v3747 = vunpack.c.l.b16 %v2808
    %v3748 = vunpack.c.h.b16 %v2808
    %v3749 = vunpack.c.l.b16 %v2809
    %v3750 = vunpack.c.l.b16 %v2810
    %v3751 = vunpack.c.h.b16 %v2810
    %v3752 = vunpack.c.l.b16 %v2811
    %v3753 = vunpack.c.l.b16 %v2812
    %v3754 = vunpack.c.h.b16 %v2812
    %v3755 = vunpack.c.l.b16 %v2813
    %v3756 = vunpack.c.l.b16 %v2814
    %v3757 = vunpack.c.h.b16 %v2814
    %v3758 = vunpack.c.l.b16 %v2815
    %v3759 = vunpack.c.l.b16 %v2816
    %v3760 = vunpack.c.h.b16 %v2816
    %v3761 = vunpack.c.l.b16 %v2817
    %v3762 = vunpack.c.l.b16 %v2818
    %v3763 = vunpack.c.h.b16 %v2818
    %v3764 = vunpack.c.l.b16 %v2819
    %v3765 = vunpack.c.l.b16 %v2820
    %v3766 = vunpack.c.h.b16 %v2820
    %v3767 = vunpack.c.l.b16 %v2821
    %v3768 = vunpack.c.l.b16 %v2822
    %v3769 = vunpack.c.h.b16 %v2822
    %v3770 = vunpack.c.l.b16 %v2823
    %v3771 = vunpack.c.l.b16 %v2824
    %v3772 = vunpack.c.h.b16 %v2824
    %v3773 = vunpack.c.l.b16 %v2825
    %v3774 = vunpack.c.l.b16 %v2826
    %v3775 = vunpack.c.h.b16 %v2826
    %v3776 = vunpack.c.l.b16 %v2827
    %v3777 = vunpack.c.l.b16 %v2828
    %v3778 = vunpack.c.h.b16 %v2828
    %v3779 = vunpack.c.l.b16 %v2829
    %v3780 = vunpack.c.l.b16 %v2830
    %v3781 = vunpack.c.h.b16 %v2830
    %v3782 = vunpack.c.l.b16 %v2831
    %v3783 = vunpack.c.l.b16 %v2832
    %v3784 = vunpack.c.h.b16 %v2832
    %v3785 = vunpack.c.l.b16 %v2833
    %v3786 = vunpack.c.l.b16 %v2834
    %v3787 = vunpack.c.h.b16 %v2834
    %v3788 = vunpack.c.l.b16 %v2835
    %v3789 = vunpack.c.l.b16 %v2836
    %v3790 = vunpack.c.h.b16 %v2836
    %v3791 = vunpack.c.l.b16 %v2837
    %v3792 = vunpack.c.l.b16 %v2838
    %v3793 = vunpack.c.h.b16 %v2838
    %v3794 = vunpack.c.l.b16 %v2839
    %v3795 = vunpack.c.l.b16 %v2840
    %v3796 = vunpack.c.h.b16 %v2840
    %v3797 = vunpack.c.l.b16 %v2841
    %v3798 = vunpack.c.l.b16 %v2842
    %v3799 = vunpack.c.h.b16 %v2842
    %v3800 = vunpack.c.l.b16 %v2843
    %v3801 = vunpack.c.l.b16 %v2844
    %v3802 = vunpack.c.h.b16 %v2844
    %v3803 = vunpack.c.l.b16 %v2845
    %v3804 = vunpack.c.l.b16 %v2846
    %v3805 = vunpack.c.h.b16 %v2846
    %v3806 = vunpack.c.l.b16 %v2847
    %v3807 = vunpack.c.l.b16 %v2848
    %v3808 = vunpack.c.h.b16 %v2848
    %v3809 = vunpack.c.l.b16 %v2849
    %v3810 = vpack.c.b16 %v3237, %v3234
    %v3811 = vpack.c.b16 %v3238, %v3235
    %v3812 = vpack.c.b16 %v3239, %v3236
    %v3813 = vpack.c.b16 %v3243, %v3240
    %v3814 = vpack.c.b16 %v3244, %v3241
    %v3815 = vpack.c.b16 %v3245, %v3242
    %v3816 = vpack.c.b16 %v3249, %v3246
    %v3817 = vpack.c.b16 %v3250, %v3247
    %v3818 = vpack.c.b16 %v3251, %v3248
    %v3819 = vpack.c.b16 %v3255, %v3252
    %v3820 = vpack.c.b16 %v3256, %v3253
    %v3821 = vpack.c.b16 %v3257, %v3254
    %v3822 = vpack.c.b16 %v3261, %v3258
    %v3823 = vpack.c.b16 %v3262, %v3259
    %v3824 = vpack.c.b16 %v3263, %v3260
    %v3825 = vpack.c.b16 %v3267, %v3264
    %v3826 = vpack.c.b16 %v3268, %v3265
    %v3827 = vpack.c.b16 %v3269, %v3266
    %v3828 = vpack.c.b16 %v3273, %v3270
    %v3829 = vpack.c.b16 %v3274, %v3271
    %v3830 = vpack.c.b16 %v3275, %v3272
    %v3831 = vpack.c.b16 %v3279, %v3276
    %v3832 = vpack.c.b16 %v3280, %v3277
    %v3833 = vpack.c.b16 %v3281, %v3278
    %v3834 = vpack.c.b16 %v3285, %v3282
    %v3835 = vpack.c.b16 %v3286, %v3283
    %v3836 = vpack.c.b16 %v3287, %v3284
    %v3837 = vpack.c.b16 %v3291, %v3288
    %v3838 = vpack.c.b16 %v3292, %v3289
    %v3839 = vpack.c.b16 %v3293, %v3290
    %v3840 = vpack.c.b16 %v3297, %v3294
    %v3841 = vpack.c.b16 %v3298, %v3295
    %v3842 = vpack.c.b16 %v3299, %v3296
    %v3843 = vpack.c.b16 %v3303, %v3300
    %v3844 = vpack.c.b16 %v3304, %v3301
    %v3845 = vpack.c.b16 %v3305, %v3302
    %v3846 = vpack.c.b16 %v3309, %v3306
    %v3847 = vpack.c.b16 %v3310, %v3307
    %v3848 = vpack.c.b16 %v3311, %v3308
    %v3849 = vpack.c.b16 %v3315, %v3312
    %v3850 = vpack.c.b16 %v3316, %v3313
    %v3851 = vpack.c.b16 %v3317, %v3314
    %v3852 = vpack.c.b16 %v3321, %v3318
    %v3853 = vpack.c.b16 %v3322, %v3319
    %v3854 = vpack.c.b16 %v3323, %v3320
    %v3855 = vpack.c.b16 %v3327, %v3324
    %v3856 = vpack.c.b16 %v3328, %v3325
    %v3857 = vpack.c.b16 %v3329, %v3326
    %v3858 = vpack.c.b16 %v3333, %v3330
    %v3859 = vpack.c.b16 %v3334, %v3331
    %v3860 = vpack.c.b16 %v3335, %v3332
    %v3861 = vpack.c.b16 %v3339, %v3336
    %v3862 = vpack.c.b16 %v3340, %v3337
    %v3863 = vpack.c.b16 %v3341, %v3338
    %v3864 = vpack.c.b16 %v3345, %v3342
    %v3865 = vpack.c.b16 %v3346, %v3343
    %v3866 = vpack.c.b16 %v3347, %v3344
    %v3867 = vpack.c.b16 %v3351, %v3348
    %v3868 = vpack.c.b16 %v3352, %v3349
    %v3869 = vpack.c.b16 %v3353, %v3350
    %v3870 = vpack.c.b16 %v3357, %v3354
    %v3871 = vpack.c.b16 %v3358, %v3355
    %v3872 = vpack.c.b16 %v3359, %v3356
    %v3873 = vpack.c.b16 %v3363, %v3360
    %v3874 = vpack.c.b16 %v3364, %v3361
    %v3875 = vpack.c.b16 %v3365, %v3362
    %v3876 = vpack.c.b16 %v3369, %v3366
    %v3877 = vpack.c.b16 %v3370, %v3367
    %v3878 = vpack.c.b16 %v3371, %v3368
    %v3879 = vpack.c.b16 %v3375, %v3372
    %v3880 = vpack.c.b16 %v3376, %v3373
    %v3881 = vpack.c.b16 %v3377, %v3374
    %v3882 = vpack.c.b16 %v3381, %v3378
    %v3883 = vpack.c.b16 %v3382, %v3379
    %v3884 = vpack.c.b16 %v3383, %v3380
    %v3885 = vpack.c.b16 %v3387, %v3384
    %v3886 = vpack.c.b16 %v3388, %v3385
    %v3887 = vpack.c.b16 %v3389, %v3386
    %v3888 = vpack.c.b16 %v3393, %v3390
    %v3889 = vpack.c.b16 %v3394, %v3391
    %v3890 = vpack.c.b16 %v3395, %v3392
    %v3891 = vpack.c.b16 %v3399, %v3396
    %v3892 = vpack.c.b16 %v3400, %v3397
    %v3893 = vpack.c.b16 %v3401, %v3398
    %v3894 = vpack.c.b16 %v3405, %v3402
    %v3895 = vpack.c.b16 %v3406, %v3403
    %v3896 = vpack.c.b16 %v3407, %v3404
    %v3897 = vpack.c.b16 %v3411, %v3408
    %v3898 = vpack.c.b16 %v3412, %v3409
    %v3899 = vpack.c.b16 %v3413, %v3410
    %v3900 = vpack.c.b16 %v3417, %v3414
    %v3901 = vpack.c.b16 %v3418, %v3415
    %v3902 = vpack.c.b16 %v3419, %v3416
    %v3903 = vpack.c.b16 %v3423, %v3420
    %v3904 = vpack.c.b16 %v3424, %v3421
    %v3905 = vpack.c.b16 %v3425, %v3422
    %v3906 = vpack.c.b16 %v3429, %v3426
    %v3907 = vpack.c.b16 %v3430, %v3427
    %v3908 = vpack.c.b16 %v3431, %v3428
    %v3909 = vpack.c.b16 %v3435, %v3432
    %v3910 = vpack.c.b16 %v3436, %v3433
    %v3911 = vpack.c.b16 %v3437, %v3434
    %v3912 = vpack.c.b16 %v3441, %v3438
    %v3913 = vpack.c.b16 %v3442, %v3439
    %v3914 = vpack.c.b16 %v3443, %v3440
    %v3915 = vpack.c.b16 %v3447, %v3444
    %v3916 = vpack.c.b16 %v3448, %v3445
    %v3917 = vpack.c.b16 %v3449, %v3446
    %v3918 = vpack.c.b16 %v3453, %v3450
    %v3919 = vpack.c.b16 %v3454, %v3451
    %v3920 = vpack.c.b16 %v3455, %v3452
    %v3921 = vpack.c.b16 %v3459, %v3456
    %v3922 = vpack.c.b16 %v3460, %v3457
    %v3923 = vpack.c.b16 %v3461, %v3458
    %v3924 = vpack.c.b16 %v3465, %v3462
    %v3925 = vpack.c.b16 %v3466, %v3463
    %v3926 = vpack.c.b16 %v3467, %v3464
    %v3927 = vpack.c.b16 %v3471, %v3468
    %v3928 = vpack.c.b16 %v3472, %v3469
    %v3929 = vpack.c.b16 %v3473, %v3470
    %v3930 = vpack.c.b16 %v3477, %v3474
    %v3931 = vpack.c.b16 %v3478, %v3475
    %v3932 = vpack.c.b16 %v3479, %v3476
    %v3933 = vpack.c.b16 %v3483, %v3480
    %v3934 = vpack.c.b16 %v3484, %v3481
    %v3935 = vpack.c.b16 %v3485, %v3482
    %v3936 = vpack.c.b16 %v3489, %v3486
    %v3937 = vpack.c.b16 %v3490, %v3487
    %v3938 = vpack.c.b16 %v3491, %v3488
    %v3939 = vpack.c.b16 %v3495, %v3492
    %v3940 = vpack.c.b16 %v3496, %v3493
    %v3941 = vpack.c.b16 %v3497, %v3494
    %v3942 = vpack.c.b16 %v3501, %v3498
    %v3943 = vpack.c.b16 %v3502, %v3499
    %v3944 = vpack.c.b16 %v3503, %v3500
    %v3945 = vpack.c.b16 %v3507, %v3504
    %v3946 = vpack.c.b16 %v3508, %v3505
    %v3947 = vpack.c.b16 %v3509, %v3506
    %v3948 = vpack.c.b16 %v3513, %v3510
    %v3949 = vpack.c.b16 %v3514, %v3511
    %v3950 = vpack.c.b16 %v3515, %v3512
    %v3951 = vpack.c.b16 %v3519, %v3516
    %v3952 = vpack.c.b16 %v3520, %v3517
    %v3953 = vpack.c.b16 %v3521, %v3518
    %v3954 = vpack.c.b16 %v3525, %v3522
    %v3955 = vpack.c.b16 %v3526, %v3523
    %v3956 = vpack.c.b16 %v3527, %v3524
    %v3957 = vpack.c.b16 %v3531, %v3528
    %v3958 = vpack.c.b16 %v3532, %v3529
    %v3959 = vpack.c.b16 %v3533, %v3530
    %v3960 = vpack.c.b16 %v3537, %v3534
    %v3961 = vpack.c.b16 %v3538, %v3535
    %v3962 = vpack.c.b16 %v3539, %v3536
    %v3963 = vpack.c.b16 %v3543, %v3540
    %v3964 = vpack.c.b16 %v3544, %v3541
    %v3965 = vpack.c.b16 %v3545, %v3542
    %v3966 = vpack.c.b16 %v3549, %v3546
    %v3967 = vpack.c.b16 %v3550, %v3547
    %v3968 = vpack.c.b16 %v3551, %v3548
    %v3969 = vpack.c.b16 %v3555, %v3552
    %v3970 = vpack.c.b16 %v3556, %v3553
    %v3971 = vpack.c.b16 %v3557, %v3554
    %v3972 = vpack.c.b16 %v3561, %v3558
    %v3973 = vpack.c.b16 %v3562, %v3559
    %v3974 = vpack.c.b16 %v3563, %v3560
    %v3975 = vpack.c.b16 %v3567, %v3564
    %v3976 = vpack.c.b16 %v3568, %v3565
    %v3977 = vpack.c.b16 %v3569, %v3566
    %v3978 = vpack.c.b16 %v3573, %v3570
    %v3979 = vpack.c.b16 %v3574, %v3571
    %v3980 = vpack.c.b16 %v3575, %v3572
    %v3981 = vpack.c.b16 %v3579, %v3576
    %v3982 = vpack.c.b16 %v3580, %v3577
    %v3983 = vpack.c.b16 %v3581, %v3578
    %v3984 = vpack.c.b16 %v3585, %v3582
    %v3985 = vpack.c.b16 %v3586, %v3583
    %v3986 = vpack.c.b16 %v3587, %v3584
    %v3987 = vpack.c.b16 %v3591, %v3588
    %v3988 = vpack.c.b16 %v3592, %v3589
    %v3989 = vpack.c.b16 %v3593, %v3590
    %v3990 = vpack.c.b16 %v3597, %v3594
    %v3991 = vpack.c.b16 %v3598, %v3595
    %v3992 = vpack.c.b16 %v3599, %v3596
    %v3993 = vpack.c.b16 %v3603, %v3600
    %v3994 = vpack.c.b16 %v3604, %v3601
    %v3995 = vpack.c.b16 %v3605, %v3602
    %v3996 = vpack.c.b16 %v3609, %v3606
    %v3997 = vpack.c.b16 %v3610, %v3607
    %v3998 = vpack.c.b16 %v3611, %v3608
    %v3999 = vpack.c.b16 %v3615, %v3612
    %v4000 = vpack.c.b16 %v3616, %v3613
    %v4001 = vpack.c.b16 %v3617, %v3614
    %v4002 = vpack.c.b16 %v3621, %v3618
    %v4003 = vpack.c.b16 %v3622, %v3619
    %v4004 = vpack.c.b16 %v3623, %v3620
    %v4005 = vpack.c.b16 %v3627, %v3624
    %v4006 = vpack.c.b16 %v3628, %v3625
    %v4007 = vpack.c.b16 %v3629, %v3626
    %v4008 = vpack.c.b16 %v3633, %v3630
    %v4009 = vpack.c.b16 %v3634, %v3631
    %v4010 = vpack.c.b16 %v3635, %v3632
    %v4011 = vpack.c.b16 %v3639, %v3636
    %v4012 = vpack.c.b16 %v3640, %v3637
    %v4013 = vpack.c.b16 %v3641, %v3638
    %v4014 = vpack.c.b16 %v3645, %v3642
    %v4015 = vpack.c.b16 %v3646, %v3643
    %v4016 = vpack.c.b16 %v3647, %v3644
    %v4017 = vpack.c.b16 %v3651, %v3648
    %v4018 = vpack.c.b16 %v3652, %v3649
    %v4019 = vpack.c.b16 %v3653, %v3650
    %v4020 = vpack.c.b16 %v3657, %v3654
    %v4021 = vpack.c.b16 %v3658, %v3655
    %v4022 = vpack.c.b16 %v3659, %v3656
    %v4023 = vpack.c.b16 %v3663, %v3660
    %v4024 = vpack.c.b16 %v3664, %v3661
    %v4025 = vpack.c.b16 %v3665, %v3662
    %v4026 = vpack.c.b16 %v3669, %v3666
    %v4027 = vpack.c.b16 %v3670, %v3667
    %v4028 = vpack.c.b16 %v3671, %v3668
    %v4029 = vpack.c.b16 %v3675, %v3672
    %v4030 = vpack.c.b16 %v3676, %v3673
    %v4031 = vpack.c.b16 %v3677, %v3674
    %v4032 = vpack.c.b16 %v3681, %v3678
    %v4033 = vpack.c.b16 %v3682, %v3679
    %v4034 = vpack.c.b16 %v3683, %v3680
    %v4035 = vpack.c.b16 %v3687, %v3684
    %v4036 = vpack.c.b16 %v3688, %v3685
    %v4037 = vpack.c.b16 %v3689, %v3686
    %v4038 = vpack.c.b16 %v3693, %v3690
    %v4039 = vpack.c.b16 %v3694, %v3691
    %v4040 = vpack.c.b16 %v3695, %v3692
    %v4041 = vpack.c.b16 %v3699, %v3696
    %v4042 = vpack.c.b16 %v3700, %v3697
    %v4043 = vpack.c.b16 %v3701, %v3698
    %v4044 = vpack.c.b16 %v3705, %v3702
    %v4045 = vpack.c.b16 %v3706, %v3703
    %v4046 = vpack.c.b16 %v3707, %v3704
    %v4047 = vpack.c.b16 %v3711, %v3708
    %v4048 = vpack.c.b16 %v3712, %v3709
    %v4049 = vpack.c.b16 %v3713, %v3710
    %v4050 = vpack.c.b16 %v3717, %v3714
    %v4051 = vpack.c.b16 %v3718, %v3715
    %v4052 = vpack.c.b16 %v3719, %v3716
    %v4053 = vpack.c.b16 %v3723, %v3720
    %v4054 = vpack.c.b16 %v3724, %v3721
    %v4055 = vpack.c.b16 %v3725, %v3722
    %v4056 = vpack.c.b16 %v3729, %v3726
    %v4057 = vpack.c.b16 %v3730, %v3727
    %v4058 = vpack.c.b16 %v3731, %v3728
    %v4059 = vpack.c.b16 %v3735, %v3732
    %v4060 = vpack.c.b16 %v3736, %v3733
    %v4061 = vpack.c.b16 %v3737, %v3734
    %v4062 = vpack.c.b16 %v3741, %v3738
    %v4063 = vpack.c.b16 %v3742, %v3739
    %v4064 = vpack.c.b16 %v3743, %v3740
    %v4065 = vpack.c.b16 %v3747, %v3744
    %v4066 = vpack.c.b16 %v3748, %v3745
    %v4067 = vpack.c.b16 %v3749, %v3746
    %v4068 = vpack.c.b16 %v3753, %v3750
    %v4069 = vpack.c.b16 %v3754, %v3751
    %v4070 = vpack.c.b16 %v3755, %v3752
    %v4071 = vpack.c.b16 %v3759, %v3756
    %v4072 = vpack.c.b16 %v3760, %v3757
    %v4073 = vpack.c.b16 %v3761, %v3758
    %v4074 = vpack.c.b16 %v3765, %v3762
    %v4075 = vpack.c.b16 %v3766, %v3763
    %v4076 = vpack.c.b16 %v3767, %v3764
    %v4077 = vpack.c.b16 %v3771, %v3768
    %v4078 = vpack.c.b16 %v3772, %v3769
    %v4079 = vpack.c.b16 %v3773, %v3770
    %v4080 = vpack.c.b16 %v3777, %v3774
    %v4081 = vpack.c.b16 %v3778, %v3775
    %v4082 = vpack.c.b16 %v3779, %v3776
    %v4083 = vpack.c.b16 %v3783, %v3780
    %v4084 = vpack.c.b16 %v3784, %v3781
    %v4085 = vpack.c.b16 %v3785, %v3782
    %v4086 = vpack.c.b16 %v3789, %v3786
    %v4087 = vpack.c.b16 %v3790, %v3787
    %v4088 = vpack.c.b16 %v3791, %v3788
    %v4089 = vpack.c.b16 %v3795, %v3792
    %v4090 = vpack.c.b16 %v3796, %v3793
    %v4091 = vpack.c.b16 %v3797, %v3794
    %v4092 = vpack.c.b16 %v3801, %v3798
    %v4093 = vpack.c.b16 %v3802, %v3799
    %v4094 = vpack.c.b16 %v3803, %v3800
    %v4095 = vpack.c.b16 %v3807, %v3804
    %v4096 = vpack.c.b16 %v3808, %v3805
    %v4097 = vpack.c.b16 %v3809, %v3806
    %4386 = vmatprep.subr.bf16.mxu0 %v3811
    %4387 = vmatpush1.bf16.msra.mxu0 %v3810
    %4388 = vmatprep.subr.bf16.mxu0 %v3814
    %4389 = vmatpush1.bf16.msra.mxu0 %v3813
    %4390 = vmatprep.subr.bf16.mxu0 %v3817
    %4391 = vmatpush1.bf16.msra.mxu0 %v3816
    %4392 = vmatprep.subr.bf16.mxu0 %v3820
    %4393 = vmatpush1.bf16.msra.mxu0 %v3819
    %4394 = vmatprep.subr.bf16.mxu0 %v3823
    %4395 = vmatpush1.bf16.msra.mxu0 %v3822
    %4396 = vmatprep.subr.bf16.mxu0 %v3826
    %4397 = vmatpush1.bf16.msra.mxu0 %v3825
    %4398 = vmatprep.subr.bf16.mxu0 %v3829
    %4399 = vmatpush1.bf16.msra.mxu0 %v3828
    %4400 = vmatprep.subr.bf16.mxu0 %v3832
    %4401 = vmatpush1.bf16.msra.mxu0 %v3831
    %4402 = vmatprep.subr.bf16.mxu0 %v3835
    %4403 = vmatpush1.bf16.msra.mxu0 %v3834
    %4404 = vmatprep.subr.bf16.mxu0 %v3838
    %4405 = vmatpush1.bf16.msra.mxu0 %v3837
    %4406 = vmatprep.subr.bf16.mxu0 %v3841
    %4407 = vmatpush1.bf16.msra.mxu0 %v3840
    %4408 = vmatprep.subr.bf16.mxu0 %v3844
    %4409 = vmatpush1.bf16.msra.mxu0 %v3843
    %4410 = vmatprep.subr.bf16.mxu0 %v3847
    %4411 = vmatpush1.bf16.msra.mxu0 %v3846
    %4412 = vmatprep.subr.bf16.mxu0 %v3850
    %4413 = vmatpush1.bf16.msra.mxu0 %v3849
    %4414 = vmatprep.subr.bf16.mxu0 %v3853
    %4415 = vmatpush1.bf16.msra.mxu0 %v3852
    %4416 = vmatprep.subr.bf16.mxu0 %v3856
    %4417 = vmatpush1.bf16.msra.mxu0 %v3855
    %4418 = vmatprep.mubr.bf16.mxu0 %v2455
    %4419 = vmatmul.mubr.bf16.gmra.mrb[0].mxu0 %v2454
    %v4420 = vpop.f32.mrb[0].mxu0
    %v4421 = vadd.f32 0.0, %v4420
    %v4422 = vpop.f32.mrb[0].mxu0
    %v4423 = vadd.f32 0.0, %v4422
    %v4424 = vpop.f32.mrb[0].mxu0
    %v4425 = vadd.f32 0.0, %v4424
    %v4426 = vpop.f32.mrb[0].mxu0
    %v4427 = vadd.f32 0.0, %v4426
    %4428 = vdwg.mxu0
    %4429 = vmatprep.subr.bf16.mxu0 %v3859
    %4430 = vmatpush1.bf16.msra.mxu0 %v3858
    %4431 = vmatprep.subr.bf16.mxu0 %v3862
    %4432 = vmatpush1.bf16.msra.mxu0 %v3861
    %4433 = vmatprep.subr.bf16.mxu0 %v3865
    %4434 = vmatpush1.bf16.msra.mxu0 %v3864
    %4435 = vmatprep.subr.bf16.mxu0 %v3868
    %4436 = vmatpush1.bf16.msra.mxu0 %v3867
    %4437 = vmatprep.subr.bf16.mxu0 %v3871
    %4438 = vmatpush1.bf16.msra.mxu0 %v3870
    %4439 = vmatprep.subr.bf16.mxu0 %v3874
    %4440 = vmatpush1.bf16.msra.mxu0 %v3873
    %4441 = vmatprep.subr.bf16.mxu0 %v3877
    %4442 = vmatpush1.bf16.msra.mxu0 %v3876
    %4443 = vmatprep.subr.bf16.mxu0 %v3880
    %4444 = vmatpush1.bf16.msra.mxu0 %v3879
    %4445 = vmatprep.subr.bf16.mxu0 %v3883
    %4446 = vmatpush1.bf16.msra.mxu0 %v3882
    %4447 = vmatprep.subr.bf16.mxu0 %v3886
    %4448 = vmatpush1.bf16.msra.mxu0 %v3885
    %4449 = vmatprep.subr.bf16.mxu0 %v3889
    %4450 = vmatpush1.bf16.msra.mxu0 %v3888
    %4451 = vmatprep.subr.bf16.mxu0 %v3892
    %4452 = vmatpush1.bf16.msra.mxu0 %v3891
    %4453 = vmatprep.subr.bf16.mxu0 %v3895
    %4454 = vmatpush1.bf16.msra.mxu0 %v3894
    %4455 = vmatprep.subr.bf16.mxu0 %v3898
    %4456 = vmatpush1.bf16.msra.mxu0 %v3897
    %4457 = vmatprep.subr.bf16.mxu0 %v3901
    %4458 = vmatpush1.bf16.msra.mxu0 %v3900
    %4459 = vmatprep.subr.bf16.mxu0 %v3904
    %4460 = vmatpush1.bf16.msra.mxu0 %v3903
    %4461 = vmatprep.mubr.bf16.mxu0 %v2457
    %4462 = vmatmul.mubr.bf16.gmra.mrb[0].mxu0 %v2456
    %v4463 = vpop.f32.mrb[0].mxu0
    %v4464 = vadd.f32 %v4421, %v4463
    %v4465 = vpop.f32.mrb[0].mxu0
    %v4466 = vadd.f32 %v4423, %v4465
    %v4467 = vpop.f32.mrb[0].mxu0
    %v4468 = vadd.f32 %v4425, %v4467
    %v4469 = vpop.f32.mrb[0].mxu0
    %v4470 = vadd.f32 %v4427, %v4469
    %4471 = vdwg.mxu0
    %4472 = vmatprep.subr.bf16.mxu0 %v3907
    %4473 = vmatpush1.bf16.msra.mxu0 %v3906
    %4474 = vmatprep.subr.bf16.mxu0 %v3910
    %4475 = vmatpush1.bf16.msra.mxu0 %v3909
    %4476 = vmatprep.subr.bf16.mxu0 %v3913
    %4477 = vmatpush1.bf16.msra.mxu0 %v3912
    %4478 = vmatprep.subr.bf16.mxu0 %v3916
    %4479 = vmatpush1.bf16.msra.mxu0 %v3915
    %4480 = vmatprep.subr.bf16.mxu0 %v3919
    %4481 = vmatpush1.bf16.msra.mxu0 %v3918
    %4482 = vmatprep.subr.bf16.mxu0 %v3922
    %4483 = vmatpush1.bf16.msra.mxu0 %v3921
    %4484 = vmatprep.subr.bf16.mxu0 %v3925
    %4485 = vmatpush1.bf16.msra.mxu0 %v3924
    %4486 = vmatprep.subr.bf16.mxu0 %v3928
    %4487 = vmatpush1.bf16.msra.mxu0 %v3927
    %4488 = vmatprep.subr.bf16.mxu0 %v3931
    %4489 = vmatpush1.bf16.msra.mxu0 %v3930
    %4490 = vmatprep.subr.bf16.mxu0 %v3934
    %4491 = vmatpush1.bf16.msra.mxu0 %v3933
    %4492 = vmatprep.subr.bf16.mxu0 %v3937
    %4493 = vmatpush1.bf16.msra.mxu0 %v3936
    %4494 = vmatprep.subr.bf16.mxu0 %v3940
    %4495 = vmatpush1.bf16.msra.mxu0 %v3939
    %4496 = vmatprep.subr.bf16.mxu0 %v3943
    %4497 = vmatpush1.bf16.msra.mxu0 %v3942
    %4498 = vmatprep.subr.bf16.mxu0 %v3946
    %4499 = vmatpush1.bf16.msra.mxu0 %v3945
    %4500 = vmatprep.subr.bf16.mxu0 %v3949
    %4501 = vmatpush1.bf16.msra.mxu0 %v3948
    %4502 = vmatprep.subr.bf16.mxu0 %v3952
    %4503 = vmatpush1.bf16.msra.mxu0 %v3951
    %4504 = vmatprep.mubr.bf16.mxu0 %v2459
    %4505 = vmatmul.mubr.bf16.gmra.mrb[0].mxu0 %v2458
    %v4506 = vpop.f32.mrb[0].mxu0
    %v4507 = vadd.f32 %v4464, %v4506
    %v4508 = vpop.f32.mrb[0].mxu0
    %v4509 = vadd.f32 %v4466, %v4508
    %v4510 = vpop.f32.mrb[0].mxu0
    %v4511 = vadd.f32 %v4468, %v4510
    %v4512 = vpop.f32.mrb[0].mxu0
    %v4513 = vadd.f32 %v4470, %v4512
    %4514 = vdwg.mxu0
    %4515 = vmatprep.subr.bf16.mxu0 %v3955
    %4516 = vmatpush1.bf16.msra.mxu0 %v3954
    %4517 = vmatprep.subr.bf16.mxu0 %v3958
    %4518 = vmatpush1.bf16.msra.mxu0 %v3957
    %4519 = vmatprep.subr.bf16.mxu0 %v3961
    %4520 = vmatpush1.bf16.msra.mxu0 %v3960
    %4521 = vmatprep.subr.bf16.mxu0 %v3964
    %4522 = vmatpush1.bf16.msra.mxu0 %v3963
    %4523 = vmatprep.subr.bf16.mxu0 %v3967
    %4524 = vmatpush1.bf16.msra.mxu0 %v3966
    %4525 = vmatprep.subr.bf16.mxu0 %v3970
    %4526 = vmatpush1.bf16.msra.mxu0 %v3969
    %4527 = vmatprep.subr.bf16.mxu0 %v3973
    %4528 = vmatpush1.bf16.msra.mxu0 %v3972
    %4529 = vmatprep.subr.bf16.mxu0 %v3976
    %4530 = vmatpush1.bf16.msra.mxu0 %v3975
    %4531 = vmatprep.subr.bf16.mxu0 %v3979
    %4532 = vmatpush1.bf16.msra.mxu0 %v3978
    %4533 = vmatprep.subr.bf16.mxu0 %v3982
    %4534 = vmatpush1.bf16.msra.mxu0 %v3981
    %4535 = vmatprep.subr.bf16.mxu0 %v3985
    %4536 = vmatpush1.bf16.msra.mxu0 %v3984
    %4537 = vmatprep.subr.bf16.mxu0 %v3988
    %4538 = vmatpush1.bf16.msra.mxu0 %v3987
    %4539 = vmatprep.subr.bf16.mxu0 %v3991
    %4540 = vmatpush1.bf16.msra.mxu0 %v3990
    %4541 = vmatprep.subr.bf16.mxu0 %v3994
    %4542 = vmatpush1.bf16.msra.mxu0 %v3993
    %4543 = vmatprep.subr.bf16.mxu0 %v3997
    %4544 = vmatpush1.bf16.msra.mxu0 %v3996
    %4545 = vmatprep.subr.bf16.mxu0 %v4000
    %4546 = vmatpush1.bf16.msra.mxu0 %v3999
    %4547 = vmatprep.mubr.bf16.mxu0 %v2461
    %4548 = vmatmul.mubr.bf16.gmra.mrb[0].mxu0 %v2460
    %v4549 = vpop.f32.mrb[0].mxu0
    %v4550 = vadd.f32 %v4507, %v4549
    %v4551 = vpop.f32.mrb[0].mxu0
    %v4552 = vadd.f32 %v4509, %v4551
    %v4553 = vpop.f32.mrb[0].mxu0
    %v4554 = vadd.f32 %v4511, %v4553
    %v4555 = vpop.f32.mrb[0].mxu0
    %v4556 = vadd.f32 %v4513, %v4555
    %4557 = vdwg.mxu0
    %4558 = vmatprep.subr.bf16.mxu0 %v4003
    %4559 = vmatpush1.bf16.msra.mxu0 %v4002
    %4560 = vmatprep.subr.bf16.mxu0 %v4006
    %4561 = vmatpush1.bf16.msra.mxu0 %v4005
    %4562 = vmatprep.subr.bf16.mxu0 %v4009
    %4563 = vmatpush1.bf16.msra.mxu0 %v4008
    %4564 = vmatprep.subr.bf16.mxu0 %v4012
    %4565 = vmatpush1.bf16.msra.mxu0 %v4011
    %4566 = vmatprep.subr.bf16.mxu0 %v4015
    %4567 = vmatpush1.bf16.msra.mxu0 %v4014
    %4568 = vmatprep.subr.bf16.mxu0 %v4018
    %4569 = vmatpush1.bf16.msra.mxu0 %v4017
    %4570 = vmatprep.subr.bf16.mxu0 %v4021
    %4571 = vmatpush1.bf16.msra.mxu0 %v4020
    %4572 = vmatprep.subr.bf16.mxu0 %v4024
    %4573 = vmatpush1.bf16.msra.mxu0 %v4023
    %4574 = vmatprep.subr.bf16.mxu0 %v4027
    %4575 = vmatpush1.bf16.msra.mxu0 %v4026
    %4576 = vmatprep.subr.bf16.mxu0 %v4030
    %4577 = vmatpush1.bf16.msra.mxu0 %v4029
    %4578 = vmatprep.subr.bf16.mxu0 %v4033
    %4579 = vmatpush1.bf16.msra.mxu0 %v4032
    %4580 = vmatprep.subr.bf16.mxu0 %v4036
    %4581 = vmatpush1.bf16.msra.mxu0 %v4035
    %4582 = vmatprep.subr.bf16.mxu0 %v4039
    %4583 = vmatpush1.bf16.msra.mxu0 %v4038
    %4584 = vmatprep.subr.bf16.mxu0 %v4042
    %4585 = vmatpush1.bf16.msra.mxu0 %v4041
    %4586 = vmatprep.subr.bf16.mxu0 %v4045
    %4587 = vmatpush1.bf16.msra.mxu0 %v4044
    %4588 = vmatprep.subr.bf16.mxu0 %v4048
    %4589 = vmatpush1.bf16.msra.mxu0 %v4047
    %4590 = vmatprep.mubr.bf16.mxu0 %v2463
    %4591 = vmatmul.mubr.bf16.gmra.mrb[0].mxu0 %v2462
    %v4592 = vpop.f32.mrb[0].mxu0
    %v4593 = vadd.f32 %v4550, %v4592
    %v4594 = vpop.f32.mrb[0].mxu0
    %v4595 = vadd.f32 %v4552, %v4594
    %v4596 = vpop.f32.mrb[0].mxu0
    %v4597 = vadd.f32 %v4554, %v4596
    %v4598 = vpop.f32.mrb[0].mxu0
    %v4599 = vadd.f32 %v4556, %v4598
    %4600 = vdwg.mxu0
    %4601 = vmatprep.subr.bf16.mxu0 %v4051
    %4602 = vmatpush1.bf16.msra.mxu0 %v4050
    %4603 = vmatprep.subr.bf16.mxu0 %v4054
    %4604 = vmatpush1.bf16.msra.mxu0 %v4053
    %4605 = vmatprep.subr.bf16.mxu0 %v4057
    %4606 = vmatpush1.bf16.msra.mxu0 %v4056
    %4607 = vmatprep.subr.bf16.mxu0 %v4060
    %4608 = vmatpush1.bf16.msra.mxu0 %v4059
    %4609 = vmatprep.subr.bf16.mxu0 %v4063
    %4610 = vmatpush1.bf16.msra.mxu0 %v4062
    %4611 = vmatprep.subr.bf16.mxu0 %v4066
    %4612 = vmatpush1.bf16.msra.mxu0 %v4065
    %4613 = vmatprep.subr.bf16.mxu0 %v4069
    %4614 = vmatpush1.bf16.msra.mxu0 %v4068
    %4615 = vmatprep.subr.bf16.mxu0 %v4072
    %4616 = vmatpush1.bf16.msra.mxu0 %v4071
    %4617 = vmatprep.subr.bf16.mxu0 %v4075
    %4618 = vmatpush1.bf16.msra.mxu0 %v4074
    %4619 = vmatprep.subr.bf16.mxu0 %v4078
    %4620 = vmatpush1.bf16.msra.mxu0 %v4077
    %4621 = vmatprep.subr.bf16.mxu0 %v4081
    %4622 = vmatpush1.bf16.msra.mxu0 %v4080
    %4623 = vmatprep.subr.bf16.mxu0 %v4084
    %4624 = vmatpush1.bf16.msra.mxu0 %v4083
    %4625 = vmatprep.subr.bf16.mxu0 %v4087
    %4626 = vmatpush1.bf16.msra.mxu0 %v4086
    %4627 = vmatprep.subr.bf16.mxu0 %v4090
    %4628 = vmatpush1.bf16.msra.mxu0 %v4089
    %4629 = vmatprep.subr.bf16.mxu0 %v4093
    %4630 = vmatpush1.bf16.msra.mxu0 %v4092
    %4631 = vmatprep.subr.bf16.mxu0 %v4096
    %4632 = vmatpush1.bf16.msra.mxu0 %v4095
    %4633 = vmatprep.mubr.bf16.mxu0 %v2465
    %4634 = vmatmul.mubr.bf16.gmra.mrb[0].mxu0 %v2464
    %v4635 = vpop.f32.mrb[0].mxu0
    %v4636 = vadd.f32 %v4593, %v4635
    %v4637 = vpop.f32.mrb[0].mxu0
    %v4638 = vadd.f32 %v4595, %v4637
    %v4639 = vpop.f32.mrb[0].mxu0
    %v4640 = vadd.f32 %v4597, %v4639
    %v4641 = vpop.f32.mrb[0].mxu0
    %v4642 = vadd.f32 %v4599, %v4641
    %4643 = vdwg.mxu0
    %4644 = vmatprep.subr.bf16.mxu0 0
    %4645 = vmatpush1.bf16.msra.mxu0 %v3812
    %4646 = vmatprep.subr.bf16.mxu0 0
    %4647 = vmatpush1.bf16.msra.mxu0 %v3815
    %4648 = vmatprep.subr.bf16.mxu0 0
    %4649 = vmatpush1.bf16.msra.mxu0 %v3818
    %4650 = vmatprep.subr.bf16.mxu0 0
    %4651 = vmatpush1.bf16.msra.mxu0 %v3821
    %4652 = vmatprep.subr.bf16.mxu0 0
    %4653 = vmatpush1.bf16.msra.mxu0 %v3824
    %4654 = vmatprep.subr.bf16.mxu0 0
    %4655 = vmatpush1.bf16.msra.mxu0 %v3827
    %4656 = vmatprep.subr.bf16.mxu0 0
    %4657 = vmatpush1.bf16.msra.mxu0 %v3830
    %4658 = vmatprep.subr.bf16.mxu0 0
    %4659 = vmatpush1.bf16.msra.mxu0 %v3833
    %4660 = vmatprep.subr.bf16.mxu0 0
    %4661 = vmatpush1.bf16.msra.mxu0 %v3836
    %4662 = vmatprep.subr.bf16.mxu0 0
    %4663 = vmatpush1.bf16.msra.mxu0 %v3839
    %4664 = vmatprep.subr.bf16.mxu0 0
    %4665 = vmatpush1.bf16.msra.mxu0 %v3842
    %4666 = vmatprep.subr.bf16.mxu0 0
    %4667 = vmatpush1.bf16.msra.mxu0 %v3845
    %4668 = vmatprep.subr.bf16.mxu0 0
    %4669 = vmatpush1.bf16.msra.mxu0 %v3848
    %4670 = vmatprep.subr.bf16.mxu0 0
    %4671 = vmatpush1.bf16.msra.mxu0 %v3851
    %4672 = vmatprep.subr.bf16.mxu0 0
    %4673 = vmatpush1.bf16.msra.mxu0 %v3854
    %4674 = vmatprep.subr.bf16.mxu0 0
    %4675 = vmatpush1.bf16.msra.mxu0 %v3857
    %4676 = vmatprep.mubr.bf16.mxu0 %v2455
    %4677 = vmatmul.mubr.bf16.gmra.mrb[0].mxu0 %v2454
    %v4678 = vpop.f32.mrb[0].mxu0
    %v4679 = vadd.f32 0.0, %v4678
    %v4680 = vpop.f32.mrb[0].mxu0
    %v4681 = vpop.f32.mrb[0].mxu0
    %v4682 = vadd.f32 0.0, %v4681
    %v4683 = vpop.f32.mrb[0].mxu0
    %4684 = vdwg.mxu0
    %4685 = vmatprep.subr.bf16.mxu0 0
    %4686 = vmatpush1.bf16.msra.mxu0 %v3860
    %4687 = vmatprep.subr.bf16.mxu0 0
    %4688 = vmatpush1.bf16.msra.mxu0 %v3863
    %4689 = vmatprep.subr.bf16.mxu0 0
    %4690 = vmatpush1.bf16.msra.mxu0 %v3866
    %4691 = vmatprep.subr.bf16.mxu0 0
    %4692 = vmatpush1.bf16.msra.mxu0 %v3869
    %4693 = vmatprep.subr.bf16.mxu0 0
    %4694 = vmatpush1.bf16.msra.mxu0 %v3872
    %4695 = vmatprep.subr.bf16.mxu0 0
    %4696 = vmatpush1.bf16.msra.mxu0 %v3875
    %4697 = vmatprep.subr.bf16.mxu0 0
    %4698 = vmatpush1.bf16.msra.mxu0 %v3878
    %4699 = vmatprep.subr.bf16.mxu0 0
    %4700 = vmatpush1.bf16.msra.mxu0 %v3881
    %4701 = vmatprep.subr.bf16.mxu0 0
    %4702 = vmatpush1.bf16.msra.mxu0 %v3884
    %4703 = vmatprep.subr.bf16.mxu0 0
    %4704 = vmatpush1.bf16.msra.mxu0 %v3887
    %4705 = vmatprep.subr.bf16.mxu0 0
    %4706 = vmatpush1.bf16.msra.mxu0 %v3890
    %4707 = vmatprep.subr.bf16.mxu0 0
    %4708 = vmatpush1.bf16.msra.mxu0 %v3893
    %4709 = vmatprep.subr.bf16.mxu0 0
    %4710 = vmatpush1.bf16.msra.mxu0 %v3896
    %4711 = vmatprep.subr.bf16.mxu0 0
    %4712 = vmatpush1.bf16.msra.mxu0 %v3899
    %4713 = vmatprep.subr.bf16.mxu0 0
    %4714 = vmatpush1.bf16.msra.mxu0 %v3902
    %4715 = vmatprep.subr.bf16.mxu0 0
    %4716 = vmatpush1.bf16.msra.mxu0 %v3905
    %4717 = vmatprep.mubr.bf16.mxu0 %v2457
    %4718 = vmatmul.mubr.bf16.gmra.mrb[0].mxu0 %v2456
    %v4719 = vpop.f32.mrb[0].mxu0
    %v4720 = vadd.f32 %v4679, %v4719
    %v4721 = vpop.f32.mrb[0].mxu0
    %v4722 = vpop.f32.mrb[0].mxu0
    %v4723 = vadd.f32 %v4682, %v4722
    %v4724 = vpop.f32.mrb[0].mxu0
    %4725 = vdwg.mxu0
    %4726 = vmatprep.subr.bf16.mxu0 0
    %4727 = vmatpush1.bf16.msra.mxu0 %v3908
    %4728 = vmatprep.subr.bf16.mxu0 0
    %4729 = vmatpush1.bf16.msra.mxu0 %v3911
    %4730 = vmatprep.subr.bf16.mxu0 0
    %4731 = vmatpush1.bf16.msra.mxu0 %v3914
    %4732 = vmatprep.subr.bf16.mxu0 0
    %4733 = vmatpush1.bf16.msra.mxu0 %v3917
    %4734 = vmatprep.subr.bf16.mxu0 0
    %4735 = vmatpush1.bf16.msra.mxu0 %v3920
    %4736 = vmatprep.subr.bf16.mxu0 0
    %4737 = vmatpush1.bf16.msra.mxu0 %v3923
    %4738 = vmatprep.subr.bf16.mxu0 0
    %4739 = vmatpush1.bf16.msra.mxu0 %v3926
    %4740 = vmatprep.subr.bf16.mxu0 0
    %4741 = vmatpush1.bf16.msra.mxu0 %v3929
    %4742 = vmatprep.subr.bf16.mxu0 0
    %4743 = vmatpush1.bf16.msra.mxu0 %v3932
    %4744 = vmatprep.subr.bf16.mxu0 0
    %4745 = vmatpush1.bf16.msra.mxu0 %v3935
    %4746 = vmatprep.subr.bf16.mxu0 0
    %4747 = vmatpush1.bf16.msra.mxu0 %v3938
    %4748 = vmatprep.subr.bf16.mxu0 0
    %4749 = vmatpush1.bf16.msra.mxu0 %v3941
    %4750 = vmatprep.subr.bf16.mxu0 0
    %4751 = vmatpush1.bf16.msra.mxu0 %v3944
    %4752 = vmatprep.subr.bf16.mxu0 0
    %4753 = vmatpush1.bf16.msra.mxu0 %v3947
    %4754 = vmatprep.subr.bf16.mxu0 0
    %4755 = vmatpush1.bf16.msra.mxu0 %v3950
    %4756 = vmatprep.subr.bf16.mxu0 0
    %4757 = vmatpush1.bf16.msra.mxu0 %v3953
    %4758 = vmatprep.mubr.bf16.mxu0 %v2459
    %4759 = vmatmul.mubr.bf16.gmra.mrb[0].mxu0 %v2458
    %v4760 = vpop.f32.mrb[0].mxu0
    %v4761 = vadd.f32 %v4720, %v4760
    %v4762 = vpop.f32.mrb[0].mxu0
    %v4763 = vpop.f32.mrb[0].mxu0
    %v4764 = vadd.f32 %v4723, %v4763
    %v4765 = vpop.f32.mrb[0].mxu0
    %4766 = vdwg.mxu0
    %4767 = vmatprep.subr.bf16.mxu0 0
    %4768 = vmatpush1.bf16.msra.mxu0 %v3956
    %4769 = vmatprep.subr.bf16.mxu0 0
    %4770 = vmatpush1.bf16.msra.mxu0 %v3959
    %4771 = vmatprep.subr.bf16.mxu0 0
    %4772 = vmatpush1.bf16.msra.mxu0 %v3962
    %4773 = vmatprep.subr.bf16.mxu0 0
    %4774 = vmatpush1.bf16.msra.mxu0 %v3965
    %4775 = vmatprep.subr.bf16.mxu0 0
    %4776 = vmatpush1.bf16.msra.mxu0 %v3968
    %4777 = vmatprep.subr.bf16.mxu0 0
    %4778 = vmatpush1.bf16.msra.mxu0 %v3971
    %4779 = vmatprep.subr.bf16.mxu0 0
    %4780 = vmatpush1.bf16.msra.mxu0 %v3974
    %4781 = vmatprep.subr.bf16.mxu0 0
    %4782 = vmatpush1.bf16.msra.mxu0 %v3977
    %4783 = vmatprep.subr.bf16.mxu0 0
    %4784 = vmatpush1.bf16.msra.mxu0 %v3980
    %4785 = vmatprep.subr.bf16.mxu0 0
    %4786 = vmatpush1.bf16.msra.mxu0 %v3983
    %4787 = vmatprep.subr.bf16.mxu0 0
    %4788 = vmatpush1.bf16.msra.mxu0 %v3986
    %4789 = vmatprep.subr.bf16.mxu0 0
    %4790 = vmatpush1.bf16.msra.mxu0 %v3989
    %4791 = vmatprep.subr.bf16.mxu0 0
    %4792 = vmatpush1.bf16.msra.mxu0 %v3992
    %4793 = vmatprep.subr.bf16.mxu0 0
    %4794 = vmatpush1.bf16.msra.mxu0 %v3995
    %4795 = vmatprep.subr.bf16.mxu0 0
    %4796 = vmatpush1.bf16.msra.mxu0 %v3998
    %4797 = vmatprep.subr.bf16.mxu0 0
    %4798 = vmatpush1.bf16.msra.mxu0 %v4001
    %4799 = vmatprep.mubr.bf16.mxu0 %v2461
    %4800 = vmatmul.mubr.bf16.gmra.mrb[0].mxu0 %v2460
    %v4801 = vpop.f32.mrb[0].mxu0
    %v4802 = vadd.f32 %v4761, %v4801
    %v4803 = vpop.f32.mrb[0].mxu0
    %v4804 = vpop.f32.mrb[0].mxu0
    %v4805 = vadd.f32 %v4764, %v4804
    %v4806 = vpop.f32.mrb[0].mxu0
    %4807 = vdwg.mxu0
    %4808 = vmatprep.subr.bf16.mxu0 0
    %4809 = vmatpush1.bf16.msra.mxu0 %v4004
    %4810 = vmatprep.subr.bf16.mxu0 0
    %4811 = vmatpush1.bf16.msra.mxu0 %v4007
    %4812 = vmatprep.subr.bf16.mxu0 0
    %4813 = vmatpush1.bf16.msra.mxu0 %v4010
    %4814 = vmatprep.subr.bf16.mxu0 0
    %4815 = vmatpush1.bf16.msra.mxu0 %v4013
    %4816 = vmatprep.subr.bf16.mxu0 0
    %4817 = vmatpush1.bf16.msra.mxu0 %v4016
    %4818 = vmatprep.subr.bf16.mxu0 0
    %4819 = vmatpush1.bf16.msra.mxu0 %v4019
    %4820 = vmatprep.subr.bf16.mxu0 0
    %4821 = vmatpush1.bf16.msra.mxu0 %v4022
    %4822 = vmatprep.subr.bf16.mxu0 0
    %4823 = vmatpush1.bf16.msra.mxu0 %v4025
    %4824 = vmatprep.subr.bf16.mxu0 0
    %4825 = vmatpush1.bf16.msra.mxu0 %v4028
    %4826 = vmatprep.subr.bf16.mxu0 0
    %4827 = vmatpush1.bf16.msra.mxu0 %v4031
    %4828 = vmatprep.subr.bf16.mxu0 0
    %4829 = vmatpush1.bf16.msra.mxu0 %v4034
    %4830 = vmatprep.subr.bf16.mxu0 0
    %4831 = vmatpush1.bf16.msra.mxu0 %v4037
    %4832 = vmatprep.subr.bf16.mxu0 0
    %4833 = vmatpush1.bf16.msra.mxu0 %v4040
    %4834 = vmatprep.subr.bf16.mxu0 0
    %4835 = vmatpush1.bf16.msra.mxu0 %v4043
    %4836 = vmatprep.subr.bf16.mxu0 0
    %4837 = vmatpush1.bf16.msra.mxu0 %v4046
    %4838 = vmatprep.subr.bf16.mxu0 0
    %4839 = vmatpush1.bf16.msra.mxu0 %v4049
    %4840 = vmatprep.mubr.bf16.mxu0 %v2463
    %4841 = vmatmul.mubr.bf16.gmra.mrb[0].mxu0 %v2462
    %v4842 = vpop.f32.mrb[0].mxu0
    %v4843 = vadd.f32 %v4802, %v4842
    %v4844 = vpop.f32.mrb[0].mxu0
    %v4845 = vpop.f32.mrb[0].mxu0
    %v4846 = vadd.f32 %v4805, %v4845
    %v4847 = vpop.f32.mrb[0].mxu0
    %4848 = vdwg.mxu0
    %4849 = vmatprep.subr.bf16.mxu0 0
    %4850 = vmatpush1.bf16.msra.mxu0 %v4052
    %4851 = vmatprep.subr.bf16.mxu0 0
    %4852 = vmatpush1.bf16.msra.mxu0 %v4055
    %4853 = vmatprep.subr.bf16.mxu0 0
    %4854 = vmatpush1.bf16.msra.mxu0 %v4058
    %4855 = vmatprep.subr.bf16.mxu0 0
    %4856 = vmatpush1.bf16.msra.mxu0 %v4061
    %4857 = vmatprep.subr.bf16.mxu0 0
    %4858 = vmatpush1.bf16.msra.mxu0 %v4064
    %4859 = vmatprep.subr.bf16.mxu0 0
    %4860 = vmatpush1.bf16.msra.mxu0 %v4067
    %4861 = vmatprep.subr.bf16.mxu0 0
    %4862 = vmatpush1.bf16.msra.mxu0 %v4070
    %4863 = vmatprep.subr.bf16.mxu0 0
    %4864 = vmatpush1.bf16.msra.mxu0 %v4073
    %4865 = vmatprep.subr.bf16.mxu0 0
    %4866 = vmatpush1.bf16.msra.mxu0 %v4076
    %4867 = vmatprep.subr.bf16.mxu0 0
    %4868 = vmatpush1.bf16.msra.mxu0 %v4079
    %4869 = vmatprep.subr.bf16.mxu0 0
    %4870 = vmatpush1.bf16.msra.mxu0 %v4082
    %4871 = vmatprep.subr.bf16.mxu0 0
    %4872 = vmatpush1.bf16.msra.mxu0 %v4085
    %4873 = vmatprep.subr.bf16.mxu0 0
    %4874 = vmatpush1.bf16.msra.mxu0 %v4088
    %4875 = vmatprep.subr.bf16.mxu0 0
    %4876 = vmatpush1.bf16.msra.mxu0 %v4091
    %4877 = vmatprep.subr.bf16.mxu0 0
    %4878 = vmatpush1.bf16.msra.mxu0 %v4094
    %4879 = vmatprep.subr.bf16.mxu0 0
    %4880 = vmatpush1.bf16.msra.mxu0 %v4097
    %4881 = vmatprep.mubr.bf16.mxu0 %v2465
    %4882 = vmatmul.mubr.bf16.gmra.mrb[0].mxu0 %v2464
    %v4883 = vpop.f32.mrb[0].mxu0
    %v4884 = vadd.f32 %v4843, %v4883
    %v4885 = vpop.f32.mrb[0].mxu0
    %v4886 = vpop.f32.mrb[0].mxu0
    %v4887 = vadd.f32 %v4846, %v4886
    %v4888 = vpop.f32.mrb[0].mxu0
    %4889 = vdwg.mxu0
    %v4890 = vadd.f32 %v2448, %v4636
    %v4891 = vadd.f32 %v2449, %v4638
    %v4892 = vadd.f32 %v2450, %v4884
    %v4893 = vadd.f32 %v2451, %v4640
    %v4894 = vadd.f32 %v2452, %v4642
    %v4895 = vadd.f32 %v2453, %v4887
    %4896 = vst [vmem:[#allocation2] sm:$0xff] %v4890
    %4897 = vst [vmem:[#allocation2 + $0x8] sm:$0xff] %v4891
    %4898 = vst [vmem:[#allocation2 + $0x10] sm:$0xff] %v4892
    %4899 = vst [vmem:[#allocation2 + $0x18] sm:$0xff] %v4893
    %4900 = vst [vmem:[#allocation2 + $0x20] sm:$0xff] %v4894
    %4901 = vst [vmem:[#allocation2 + $0x28] sm:$0xff] %v4895
    // Predicated region
    $region46: #{tpu_custom_call.1} parent=1 // pred_check
      %p4902 = pneg %p86
    $region47: #{tpu_custom_call.1} parent=1 // pred_check_branch
      %4904 = sbr.rel (%p4902) target = $region49
    $region48: #{tpu_custom_call.1} parent=1 // pred_region
      %v4905 = vld [vmem:[#allocation2] sm:$0xff]
      %v4906 = vld [vmem:[#allocation2 + $0x8] sm:$0xff]
      %v4907 = vld [vmem:[#allocation2 + $0x10] sm:$0xff]
      %v4908 = vld [vmem:[#allocation2 + $0x18] sm:$0xff]
      %v4909 = vld [vmem:[#allocation2 + $0x20] sm:$0xff]
      %v4910 = vld [vmem:[#allocation2 + $0x28] sm:$0xff]
      %v4911 = vld [vmem:[#allocation11] sm:$0x7]
      %v4913 = vlaneseq
      %v4914 = vshrl.u32 %v4913, 7
      %v4915 = vsub.s32 0, %v4914
      %v4916 = vrot.slane %v4911, %v4915
      %v4917 = vlaneseq
      %v4918 = vshrl.u32 %v4917, 7
      %v4919 = vsub.s32 1, %v4918
      %v4920 = vrot.slane %v4911, %v4919
      %v4921 = vlaneseq
      %v4922 = vshrl.u32 %v4921, 7
      %v4923 = vsub.s32 2, %v4922
      %v4924 = vrot.slane %v4911, %v4923
      %v4928 = vadd.f32 %v4905, %v4916
      %v4929 = vadd.f32 %v4906, %v4920
      %v4930 = vadd.f32 %v4907, %v4924
      %v4931 = vadd.f32 %v4908, %v4916
      %v4932 = vadd.f32 %v4909, %v4920
      %v4933 = vadd.f32 %v4910, %v4924
      %4934 = vst [vmem:[#allocation12] sm:$0xff] %v4928
      %4935 = vst [vmem:[#allocation12 + $0x8] sm:$0xff] %v4929
      %4936 = vst [vmem:[#allocation12 + $0x10] sm:$0xff] %v4930
      %4937 = vst [vmem:[#allocation12 + $0x18] sm:$0xff] %v4931
      %4938 = vst [vmem:[#allocation12 + $0x20] sm:$0xff] %v4932
      %4939 = vst [vmem:[#allocation12 + $0x28] sm:$0xff] %v4933
    $region49: #{tpu_custom_call.1} parent=1 // pred_fallthru
      _
    // Predicated region
    $region50: #{tpu_custom_call.1} parent=1 // pred_check
      _
    $region51: #{tpu_custom_call.1} parent=1 // pred_check_branch
      %4941 = sbr.rel (0) target = $region53
    $region52: #{tpu_custom_call.1} parent=1 // pred_region
      %s4943 = ssub.s32 768, 768
      %4944 = vsyncadd [#allocation5], %s4943
      %s4945 = sshll.u32 [#allocation12], 4
      %s4946 = int_to_ptr.vmem [resolvable:$true] %s4945
      %4951 = dma.vmem_to_hbm [thread:$0]  %s4946, 768, %s5, [#allocation5], 384, 384, 24
    $region53: #{tpu_custom_call.1} parent=1 // pred_fallthru
      _
    // Predicated region
    $region54: #{tpu_custom_call.1} parent=1 // pred_check
      _
    $region55: #{tpu_custom_call.1} parent=1 // pred_check_branch
      %4953 = sbr.rel (0) target = $region57
    $region56: #{tpu_custom_call.1} parent=1 // pred_region
      %4954 = dma.done [#allocation5], 768
    $region57: #{tpu_custom_call.1} parent=1 // pred_fallthru
      _
    %4955 = vsyncpa [#allocation4], 1
    %4956 = vsyncpa [#allocation7], 1
    %4957 = vsyncpa [#allocation10], 1
    %4958 = vsyncpa [#allocation5], 1

</llo_original>
